<compile_context>
chip_gen: v6e
topology: v6e:2x2x1
jax: 0.10.0
libtpu: 0.0.40
codegen_flags: <defaults>
</compile_context>

<pallas_src>
import jax
import jax.numpy as jnp
from jax.experimental import pallas as pl
from jax.experimental.pallas import tpu as pltpu


# -----------------------------------------------------------------------------
# Kernel factory (closes over the static layer sizes)
# -----------------------------------------------------------------------------
def make_usad_kernel(input_size, latent_size):
    I = input_size
    h1, h2 = I // 2, I // 4
    L = latent_size

    def kernel(
        x_ref,                           # [tile, I] bf16
        ew1_ref, ew2_ref, ew3_ref,       # encoder weights            (bf16)
        dw1_ref, dw2_ref, dw3_ref,       # fused dec1||dec2 weights   (bf16, block-diag)
        d2w1_ref, d2w2_ref, d2w3_ref,    # decoder-2-only weights     (bf16, pass 2)
        bias_ref,                        # packed biases [9, 2*I]     (f32)
        out12_ref,                       # [tile, 2*I] bf16 = [W1' | W2']
        out2pp_ref,                      # [tile, I]   bf16 = W2''
    ):
        # ---- hoist parameter loads (encoder weights are used twice per step) ----
        ew1 = ew1_ref[...]
        ew2 = ew2_ref[...]
        ew3 = ew3_ref[...]
        dw1 = dw1_ref[...]
        dw2 = dw2_ref[...]
        dw3 = dw3_ref[...]
        d2w1 = d2w1_ref[...]
        d2w2 = d2w2_ref[...]
        d2w3 = d2w3_ref[...]
        eb1 = bias_ref[0:1, :h1]
        eb2 = bias_ref[1:2, :h2]
        eb3 = bias_ref[2:3, :L]
        db1 = bias_ref[3:4, :2 * h2]
        db2 = bias_ref[4:5, :2 * h1]
        db3 = bias_ref[5:6, :2 * I]
        d2b1 = bias_ref[6:7, :h2]
        d2b2 = bias_ref[7:8, :h1]
        d2b3 = bias_ref[8:9, :I]

        def matmul(h, w):
            # bf16 MXU inputs, f32 accumulation; elementwise math stays f32.
            return jnp.dot(h.astype(jnp.bfloat16), w,
                           preferred_element_type=jnp.float32)

        def encoder(h):
            h = jnp.maximum(matmul(h, ew1) + eb1, 0.0)
            h = jnp.maximum(matmul(h, ew2) + eb2, 0.0)
            return jnp.maximum(matmul(h, ew3) + eb3, 0.0)

        def decoders_fused(z):
            # Fused decoder1 || decoder2 (block-diagonal 2nd/3rd layers):
            # result[:, :I] = decoder1(z), result[:, I:] = decoder2(z).
            h = jnp.maximum(matmul(z, dw1) + db1, 0.0)
            h = jnp.maximum(matmul(h, dw2) + db2, 0.0)
            return jax.nn.sigmoid(matmul(h, dw3) + db3)

        def decoder2_only(z):
            h = jnp.maximum(matmul(z, d2w1) + d2b1, 0.0)
            h = jnp.maximum(matmul(h, d2w2) + d2b2, 0.0)
            return jax.nn.sigmoid(matmul(h, d2w3) + d2b3)

        # ---- pass 1: encode x, fused decoders, store immediately ----
        x = x_ref[...]                               # bf16, fed straight to MXU
        z = encoder(x)
        w12 = decoders_fused(z)                      # f32 [tile, 2*I]
        out12_ref[...] = w12.astype(out12_ref.dtype)  # early store: caps live vregs

        # ---- pass 2: encode W1' (f32 in-kernel), decoder2 only ----
        w1_prime = w12[:, :I]
        z2 = encoder(w1_prime)
        w2pp = decoder2_only(z2)                     # f32 [tile, I]
        out2pp_ref[...] = w2pp.astype(out2pp_ref.dtype)

    return kernel


# -----------------------------------------------------------------------------
# Parameter packing: fuse the two decoders for pass 1, keep decoder2 unfused
# for pass 2, cast weights to bf16, pack all biases into one f32 slab.
# -----------------------------------------------------------------------------
def pack_usad_params(p, input_size, latent_size):
    I = input_size
    h1, h2 = I // 2, I // 4

    bf = lambda w: w.astype(jnp.bfloat16)

    ew1, ew2, ew3 = bf(p["ew1"]), bf(p["ew2"]), bf(p["ew3"])

    # Layer 1 of both decoders shares the same input z -> simple concat.
    dw1 = bf(jnp.concatenate([p["d1w1"], p["d2w1"]], axis=1))           # [L, 2*h2]
    # Layers 2/3 have independent inputs -> block-diagonal packing.
    z2w = jnp.zeros((h2, h1), jnp.float32)
    dw2 = bf(jnp.block([[p["d1w2"], z2w], [z2w, p["d2w2"]]]))           # [2*h2, 2*h1]
    z3w = jnp.zeros((h1, I), jnp.float32)
    dw3 = bf(jnp.block([[p["d1w3"], z3w], [z3w, p["d2w3"]]]))           # [2*h1, 2*I]

    # Unfused decoder-2 weights for the second pass (avoids wasted dec1(z2)).
    d2w1, d2w2, d2w3 = bf(p["d2w1"]), bf(p["d2w2"]), bf(p["d2w3"])

    bw = 2 * I  # widest bias row
    padb = lambda b: jnp.pad(b, ((0, 0), (0, bw - b.shape[1])))
    biases = jnp.concatenate(
        [
            padb(p["eb1"]), padb(p["eb2"]), padb(p["eb3"]),
            padb(jnp.concatenate([p["d1b1"], p["d2b1"]], axis=1)),
            padb(jnp.concatenate([p["d1b2"], p["d2b2"]], axis=1)),
            padb(jnp.concatenate([p["d1b3"], p["d2b3"]], axis=1)),
            padb(p["d2b1"]), padb(p["d2b2"]), padb(p["d2b3"]),
        ],
        axis=0,
    ).astype(jnp.float32)                                                # [9, 2*I]

    return (ew1, ew2, ew3, dw1, dw2, dw3, d2w1, d2w2, d2w3, biases)


# -----------------------------------------------------------------------------
# Wrapper
# -----------------------------------------------------------------------------
def usad_forward(x, params, *, batch_tile=None):
    """x: [B, input_size].  Returns (W1', W2', W2'') in bf16."""
    B, I = x.shape
    assert I % 4 == 0
    h1, h2 = I // 2, I // 4
    L = params["ew3"].shape[1]

    if batch_tile is None:
        # Keep the grid even (2 tiles with B=512) so both v7x TCs get work;
        # on single-TC v5e/v6e a couple of steps still overlap writeback with
        # compute while amortizing the ~0.35us/step overhead.
        batch_tile = min(B, 256)
    assert batch_tile % 16 == 0, "batch_tile must be a multiple of 16 (bf16 sublanes)"
    assert B % batch_tile == 0, "batch must be divisible by batch_tile"

    packed = pack_usad_params(params, I, L)
    kernel = make_usad_kernel(I, L)

    x_bf16 = x.astype(jnp.bfloat16)  # halve input DMA; kernel accumulates in f32

    x_spec = pl.BlockSpec((batch_tile, I), lambda i: (i, 0))
    # Every parameter is a single full-array block (constant index map) ->
    # fetched once, not re-DMA'd per grid step.
    param_specs = [pl.BlockSpec(w.shape, lambda i: (0, 0)) for w in packed]
    out12_spec = pl.BlockSpec((batch_tile, 2 * I), lambda i: (i, 0))
    out2pp_spec = pl.BlockSpec((batch_tile, I), lambda i: (i, 0))
    out12_shape = jax.ShapeDtypeStruct((B, 2 * I), jnp.bfloat16)
    out2pp_shape = jax.ShapeDtypeStruct((B, I), jnp.bfloat16)

    # Advisory cost estimate: 2 encoder passes + fused-decoder pass + dec2-only pass.
    flops_per_sample = (
        2 * 2 * (I * h1 + h1 * h2 + h2 * L)                       # encoder x2
        + 2 * (L * 2 * h2 + 2 * h2 * 2 * h1 + 2 * h1 * 2 * I)     # fused dec1||dec2
        + 2 * (L * h2 + h2 * h1 + h1 * I)                         # dec2-only
    )
    param_bytes = sum(int(w.size) * w.dtype.itemsize for w in packed)
    cost = pl.CostEstimate(
        flops=int(B * flops_per_sample),
        transcendentals=int(B * 3 * I),               # sigmoid: 2*I (pass1) + I (pass2)
        bytes_accessed=int(B * I * 2 + B * 2 * I * 2 + B * I * 2 + param_bytes),
    )

    fn = pl.pallas_call(
        kernel,
        out_shape=(out12_shape, out2pp_shape),
        grid_spec=pltpu.PrefetchScalarGridSpec(
            num_scalar_prefetch=0,
            grid=(B // batch_tile,),
            in_specs=[x_spec] + param_specs,
            out_specs=[out12_spec, out2pp_spec],
        ),
        compiler_params=pltpu.CompilerParams(
            dimension_semantics=("parallel",),
        ),
        cost_estimate=cost,
    )
    out12, out2pp = fn(x_bf16, *packed)

    w1_prime = out12[:, :I]
    w2_prime = out12[:, I:]
    w2_double_prime = out2pp
    return w1_prime, w2_prime, w2_double_prime


# -----------------------------------------------------------------------------
# Deterministic parameter init (mimics nn.Linear shapes; synthetic values)
# -----------------------------------------------------------------------------
def init_usad_params(key, input_size, latent_size):
    h1, h2 = input_size // 2, input_size // 4

    def dense(k, fan_in, fan_out):
        kw, kb = jax.random.split(k)
        scale = 1.0 / jnp.sqrt(jnp.float32(fan_in))
        w = jax.random.uniform(kw, (fan_in, fan_out), jnp.float32, -scale, scale)
        b = jax.random.uniform(kb, (1, fan_out), jnp.float32, -scale, scale)
        return w, b

    keys = jax.random.split(key, 9)
    params = {}
    # Encoder: I -> I/2 -> I/4 -> L
    params["ew1"], params["eb1"] = dense(keys[0], input_size, h1)
    params["ew2"], params["eb2"] = dense(keys[1], h1, h2)
    params["ew3"], params["eb3"] = dense(keys[2], h2, latent_size)
    # Decoder1: L -> I/4 -> I/2 -> I
    params["d1w1"], params["d1b1"] = dense(keys[3], latent_size, h2)
    params["d1w2"], params["d1b2"] = dense(keys[4], h2, h1)
    params["d1w3"], params["d1b3"] = dense(keys[5], h1, input_size)
    # Decoder2: L -> I/4 -> I/2 -> I
    params["d2w1"], params["d2b1"] = dense(keys[6], latent_size, h2)
    params["d2w2"], params["d2b2"] = dense(keys[7], h2, h1)
    params["d2w3"], params["d2b3"] = dense(keys[8], h1, input_size)
    return params


# -----------------------------------------------------------------------------
# Plain-JAX f32 reference (sanity check)
# -----------------------------------------------------------------------------
def usad_reference(x, p):
    def enc(h):
        h = jax.nn.relu(h @ p["ew1"] + p["eb1"])
        h = jax.nn.relu(h @ p["ew2"] + p["eb2"])
        return jax.nn.relu(h @ p["ew3"] + p["eb3"])

    def dec(z, pre):
        h = jax.nn.relu(z @ p[pre + "w1"] + p[pre + "b1"])
        h = jax.nn.relu(h @ p[pre + "w2"] + p[pre + "b2"])
        return jax.nn.sigmoid(h @ p[pre + "w3"] + p[pre + "b3"])

    z = enc(x)
    w1p = dec(z, "d1")
    w2p = dec(z, "d2")
    w2pp = dec(enc(w1p), "d2")
    return w1p, w2p, w2pp


if __name__ == "__main__":
    INPUT_SIZE = 64    # flattened window (window_len * n_features)
    LATENT_SIZE = 16
    BATCH = 512        # tile 256 -> grid of 2 (keeps both v7x TensorCores busy)

    key = jax.random.PRNGKey(0)
    kx, kp = jax.random.split(key)
    x = jax.random.normal(kx, (BATCH, INPUT_SIZE), jnp.float32)
    params = init_usad_params(kp, INPUT_SIZE, LATENT_SIZE)

    w1p, w2p, w2pp = usad_forward(x, params, batch_tile=256)
    jax.block_until_ready((w1p, w2p, w2pp))

    # bf16 MXU inputs + bf16 outputs -> looser tolerance vs the f32 reference.
    r1, r2, r3 = usad_reference(x, params)
    assert jnp.allclose(w1p.astype(jnp.float32), r1, atol=4e-2), float(
        jnp.max(jnp.abs(w1p.astype(jnp.float32) - r1)))
    assert jnp.allclose(w2p.astype(jnp.float32), r2, atol=4e-2), float(
        jnp.max(jnp.abs(w2p.astype(jnp.float32) - r2)))
    assert jnp.allclose(w2pp.astype(jnp.float32), r3, atol=4e-2), float(
        jnp.max(jnp.abs(w2pp.astype(jnp.float32) - r3)))

    print("KERNEL_OK")
</pallas_src>

<mosaic_0001>
module attributes {stable_mosaic.version = 11 : i64} {
  func.func @kernel(%arg0: i32, %arg1: memref<256x64xbf16, #tpu.memory_space<vmem>>, %arg2: memref<64x32xbf16, #tpu.memory_space<vmem>>, %arg3: memref<32x16xbf16, #tpu.memory_space<vmem>>, %arg4: memref<16x16xbf16, #tpu.memory_space<vmem>>, %arg5: memref<16x32xbf16, #tpu.memory_space<vmem>>, %arg6: memref<32x64xbf16, #tpu.memory_space<vmem>>, %arg7: memref<64x128xbf16, #tpu.memory_space<vmem>>, %arg8: memref<16x16xbf16, #tpu.memory_space<vmem>>, %arg9: memref<16x32xbf16, #tpu.memory_space<vmem>>, %arg10: memref<32x64xbf16, #tpu.memory_space<vmem>>, %arg11: memref<9x128xf32, #tpu.memory_space<vmem>>, %arg12: memref<256x128xbf16, #tpu.memory_space<vmem>>, %arg13: memref<256x64xbf16, #tpu.memory_space<vmem>>) attributes {dimension_semantics = [#tpu.dimension_semantics<parallel>], iteration_bounds = array<i64: 2>, scalar_prefetch = 0 : i64, scratch_operands = 0 : i64, tpu.core_type = #tpu.core_type<tc>, window_params = [{transform_indices = @transform_0, window_bounds = array<i64: 256, 64>}, {pipeline_mode = #tpu.pipeline_mode<synchronous>, transform_indices = @transform_1, window_bounds = array<i64: 64, 32>}, {pipeline_mode = #tpu.pipeline_mode<synchronous>, transform_indices = @transform_2, window_bounds = array<i64: 32, 16>}, {pipeline_mode = #tpu.pipeline_mode<synchronous>, transform_indices = @transform_3, window_bounds = array<i64: 16, 16>}, {pipeline_mode = #tpu.pipeline_mode<synchronous>, transform_indices = @transform_4, window_bounds = array<i64: 16, 32>}, {pipeline_mode = #tpu.pipeline_mode<synchronous>, transform_indices = @transform_5, window_bounds = array<i64: 32, 64>}, {pipeline_mode = #tpu.pipeline_mode<synchronous>, transform_indices = @transform_6, window_bounds = array<i64: 64, 128>}, {pipeline_mode = #tpu.pipeline_mode<synchronous>, transform_indices = @transform_7, window_bounds = array<i64: 16, 16>}, {pipeline_mode = #tpu.pipeline_mode<synchronous>, transform_indices = @transform_8, window_bounds = array<i64: 16, 32>}, {pipeline_mode = #tpu.pipeline_mode<synchronous>, transform_indices = @transform_9, window_bounds = array<i64: 32, 64>}, {pipeline_mode = #tpu.pipeline_mode<synchronous>, transform_indices = @transform_10, window_bounds = array<i64: 9, 128>}, {transform_indices = @transform_11, window_bounds = array<i64: 256, 128>}, {transform_indices = @transform_12, window_bounds = array<i64: 256, 64>}]} {
    %c0 = arith.constant 0 : index
    %c0_0 = arith.constant 0 : index
    %0 = vector.load %arg2[%c0, %c0_0] : memref<64x32xbf16, #tpu.memory_space<vmem>>, vector<64x32xbf16>
    %c0_1 = arith.constant 0 : index
    %c0_2 = arith.constant 0 : index
    %1 = vector.load %arg3[%c0_1, %c0_2] : memref<32x16xbf16, #tpu.memory_space<vmem>>, vector<32x16xbf16>
    %c0_3 = arith.constant 0 : index
    %c0_4 = arith.constant 0 : index
    %2 = vector.load %arg4[%c0_3, %c0_4] : memref<16x16xbf16, #tpu.memory_space<vmem>>, vector<16x16xbf16>
    %c0_5 = arith.constant 0 : index
    %c0_6 = arith.constant 0 : index
    %3 = vector.load %arg5[%c0_5, %c0_6] : memref<16x32xbf16, #tpu.memory_space<vmem>>, vector<16x32xbf16>
    %c0_7 = arith.constant 0 : index
    %c0_8 = arith.constant 0 : index
    %4 = vector.load %arg6[%c0_7, %c0_8] : memref<32x64xbf16, #tpu.memory_space<vmem>>, vector<32x64xbf16>
    %c0_9 = arith.constant 0 : index
    %c0_10 = arith.constant 0 : index
    %5 = vector.load %arg7[%c0_9, %c0_10] : memref<64x128xbf16, #tpu.memory_space<vmem>>, vector<64x128xbf16>
    %c0_11 = arith.constant 0 : index
    %c0_12 = arith.constant 0 : index
    %6 = vector.load %arg8[%c0_11, %c0_12] : memref<16x16xbf16, #tpu.memory_space<vmem>>, vector<16x16xbf16>
    %c0_13 = arith.constant 0 : index
    %c0_14 = arith.constant 0 : index
    %7 = vector.load %arg9[%c0_13, %c0_14] : memref<16x32xbf16, #tpu.memory_space<vmem>>, vector<16x32xbf16>
    %c0_15 = arith.constant 0 : index
    %c0_16 = arith.constant 0 : index
    %8 = vector.load %arg10[%c0_15, %c0_16] : memref<32x64xbf16, #tpu.memory_space<vmem>>, vector<32x64xbf16>
    %c0_17 = arith.constant 0 : index
    %c0_18 = arith.constant 0 : index
    %9 = vector.load %arg11[%c0_17, %c0_18] : memref<9x128xf32, #tpu.memory_space<vmem>>, vector<1x32xf32>
    %c1 = arith.constant 1 : index
    %c0_19 = arith.constant 0 : index
    %10 = vector.load %arg11[%c1, %c0_19] : memref<9x128xf32, #tpu.memory_space<vmem>>, vector<1x16xf32>
    %c2 = arith.constant 2 : index
    %c0_20 = arith.constant 0 : index
    %11 = vector.load %arg11[%c2, %c0_20] : memref<9x128xf32, #tpu.memory_space<vmem>>, vector<1x16xf32>
    %c3 = arith.constant 3 : index
    %c0_21 = arith.constant 0 : index
    %12 = vector.load %arg11[%c3, %c0_21] : memref<9x128xf32, #tpu.memory_space<vmem>>, vector<1x32xf32>
    %c4 = arith.constant 4 : index
    %c0_22 = arith.constant 0 : index
    %13 = vector.load %arg11[%c4, %c0_22] : memref<9x128xf32, #tpu.memory_space<vmem>>, vector<1x64xf32>
    %c5 = arith.constant 5 : index
    %c0_23 = arith.constant 0 : index
    %14 = vector.load %arg11[%c5, %c0_23] : memref<9x128xf32, #tpu.memory_space<vmem>>, vector<1x128xf32>
    %c6 = arith.constant 6 : index
    %c0_24 = arith.constant 0 : index
    %15 = vector.load %arg11[%c6, %c0_24] : memref<9x128xf32, #tpu.memory_space<vmem>>, vector<1x16xf32>
    %c7 = arith.constant 7 : index
    %c0_25 = arith.constant 0 : index
    %16 = vector.load %arg11[%c7, %c0_25] : memref<9x128xf32, #tpu.memory_space<vmem>>, vector<1x32xf32>
    %c8 = arith.constant 8 : index
    %c0_26 = arith.constant 0 : index
    %17 = vector.load %arg11[%c8, %c0_26] : memref<9x128xf32, #tpu.memory_space<vmem>>, vector<1x64xf32>
    %c0_27 = arith.constant 0 : index
    %c0_28 = arith.constant 0 : index
    %18 = vector.load %arg1[%c0_27, %c0_28] : memref<256x64xbf16, #tpu.memory_space<vmem>>, vector<256x64xbf16>
    %cst = arith.constant dense<0.000000e+00> : vector<256x32xf32>
    %19 = tpu.matmul %18, %0, %cst {dimension_numbers = #tpu.dot_dimension_numbers<[1], [0], [0], [1], [0, 0, 1, 1], [], []>} : vector<256x64xbf16>, vector<64x32xbf16>, vector<256x32xf32> -> vector<256x32xf32>
    %20 = vector.broadcast %9 : vector<1x32xf32> to vector<256x32xf32>
    %21 = arith.addf %19, %20 : vector<256x32xf32>
    %cst_29 = arith.constant 0.000000e+00 : f32
    %22 = vector.broadcast %cst_29 : f32 to vector<256x32xf32>
    %23 = arith.maximumf %21, %22 : vector<256x32xf32>
    %24 = arith.truncf %23 : vector<256x32xf32> to vector<256x32xbf16>
    %cst_30 = arith.constant dense<0.000000e+00> : vector<256x16xf32>
    %25 = tpu.matmul %24, %1, %cst_30 {dimension_numbers = #tpu.dot_dimension_numbers<[1], [0], [0], [1], [0, 0, 1, 1], [], []>} : vector<256x32xbf16>, vector<32x16xbf16>, vector<256x16xf32> -> vector<256x16xf32>
    %26 = vector.broadcast %10 : vector<1x16xf32> to vector<256x16xf32>
    %27 = arith.addf %25, %26 : vector<256x16xf32>
    %cst_31 = arith.constant 0.000000e+00 : f32
    %28 = vector.broadcast %cst_31 : f32 to vector<256x16xf32>
    %29 = arith.maximumf %27, %28 : vector<256x16xf32>
    %30 = arith.truncf %29 : vector<256x16xf32> to vector<256x16xbf16>
    %cst_32 = arith.constant dense<0.000000e+00> : vector<256x16xf32>
    %31 = tpu.matmul %30, %2, %cst_32 {dimension_numbers = #tpu.dot_dimension_numbers<[1], [0], [0], [1], [0, 0, 1, 1], [], []>} : vector<256x16xbf16>, vector<16x16xbf16>, vector<256x16xf32> -> vector<256x16xf32>
    %32 = vector.broadcast %11 : vector<1x16xf32> to vector<256x16xf32>
    %33 = arith.addf %31, %32 : vector<256x16xf32>
    %cst_33 = arith.constant 0.000000e+00 : f32
    %34 = vector.broadcast %cst_33 : f32 to vector<256x16xf32>
    %35 = arith.maximumf %33, %34 : vector<256x16xf32>
    %36 = arith.truncf %35 : vector<256x16xf32> to vector<256x16xbf16>
    %cst_34 = arith.constant dense<0.000000e+00> : vector<256x32xf32>
    %37 = tpu.matmul %36, %3, %cst_34 {dimension_numbers = #tpu.dot_dimension_numbers<[1], [0], [0], [1], [0, 0, 1, 1], [], []>} : vector<256x16xbf16>, vector<16x32xbf16>, vector<256x32xf32> -> vector<256x32xf32>
    %38 = vector.broadcast %12 : vector<1x32xf32> to vector<256x32xf32>
    %39 = arith.addf %37, %38 : vector<256x32xf32>
    %cst_35 = arith.constant 0.000000e+00 : f32
    %40 = vector.broadcast %cst_35 : f32 to vector<256x32xf32>
    %41 = arith.maximumf %39, %40 : vector<256x32xf32>
    %42 = arith.truncf %41 : vector<256x32xf32> to vector<256x32xbf16>
    %cst_36 = arith.constant dense<0.000000e+00> : vector<256x64xf32>
    %43 = tpu.matmul %42, %4, %cst_36 {dimension_numbers = #tpu.dot_dimension_numbers<[1], [0], [0], [1], [0, 0, 1, 1], [], []>} : vector<256x32xbf16>, vector<32x64xbf16>, vector<256x64xf32> -> vector<256x64xf32>
    %44 = vector.broadcast %13 : vector<1x64xf32> to vector<256x64xf32>
    %45 = arith.addf %43, %44 : vector<256x64xf32>
    %cst_37 = arith.constant 0.000000e+00 : f32
    %46 = vector.broadcast %cst_37 : f32 to vector<256x64xf32>
    %47 = arith.maximumf %45, %46 : vector<256x64xf32>
    %48 = arith.truncf %47 : vector<256x64xf32> to vector<256x64xbf16>
    %cst_38 = arith.constant dense<0.000000e+00> : vector<256x128xf32>
    %49 = tpu.matmul %48, %5, %cst_38 {dimension_numbers = #tpu.dot_dimension_numbers<[1], [0], [0], [1], [0, 0, 1, 1], [], []>} : vector<256x64xbf16>, vector<64x128xbf16>, vector<256x128xf32> -> vector<256x128xf32>
    %50 = vector.broadcast %14 : vector<1x128xf32> to vector<256x128xf32>
    %51 = arith.addf %49, %50 : vector<256x128xf32>
    %52 = arith.negf %51 : vector<256x128xf32>
    %53 = math.exp %52 : vector<256x128xf32>
    %cst_39 = arith.constant 1.000000e+00 : f32
    %54 = vector.broadcast %cst_39 : f32 to vector<256x128xf32>
    %55 = arith.addf %54, %53 : vector<256x128xf32>
    %56 = arith.divf %54, %55 : vector<256x128xf32>
    %57 = arith.truncf %56 : vector<256x128xf32> to vector<256x128xbf16>
    %c0_40 = arith.constant 0 : index
    %c0_41 = arith.constant 0 : index
    %58 = vector.load %arg12[%c0_40, %c0_41] : memref<256x128xbf16, #tpu.memory_space<vmem>>, vector<256x128xbf16>
    tpu.vector_store %arg12[%c0_40, %c0_41], %57 {strides = array<i32>} : memref<256x128xbf16, #tpu.memory_space<vmem>>, vector<256x128xbf16>,
    %59 = vector.extract_strided_slice %56 {offsets = [0, 0], sizes = [256, 64], strides = [1, 1]} : vector<256x128xf32> to vector<256x64xf32>
    %60 = arith.truncf %59 : vector<256x64xf32> to vector<256x64xbf16>
    %cst_42 = arith.constant dense<0.000000e+00> : vector<256x32xf32>
    %61 = tpu.matmul %60, %0, %cst_42 {dimension_numbers = #tpu.dot_dimension_numbers<[1], [0], [0], [1], [0, 0, 1, 1], [], []>} : vector<256x64xbf16>, vector<64x32xbf16>, vector<256x32xf32> -> vector<256x32xf32>
    %62 = vector.broadcast %9 : vector<1x32xf32> to vector<256x32xf32>
    %63 = arith.addf %61, %62 : vector<256x32xf32>
    %cst_43 = arith.constant 0.000000e+00 : f32
    %64 = vector.broadcast %cst_43 : f32 to vector<256x32xf32>
    %65 = arith.maximumf %63, %64 : vector<256x32xf32>
    %66 = arith.truncf %65 : vector<256x32xf32> to vector<256x32xbf16>
    %cst_44 = arith.constant dense<0.000000e+00> : vector<256x16xf32>
    %67 = tpu.matmul %66, %1, %cst_44 {dimension_numbers = #tpu.dot_dimension_numbers<[1], [0], [0], [1], [0, 0, 1, 1], [], []>} : vector<256x32xbf16>, vector<32x16xbf16>, vector<256x16xf32> -> vector<256x16xf32>
    %68 = vector.broadcast %10 : vector<1x16xf32> to vector<256x16xf32>
    %69 = arith.addf %67, %68 : vector<256x16xf32>
    %cst_45 = arith.constant 0.000000e+00 : f32
    %70 = vector.broadcast %cst_45 : f32 to vector<256x16xf32>
    %71 = arith.maximumf %69, %70 : vector<256x16xf32>
    %72 = arith.truncf %71 : vector<256x16xf32> to vector<256x16xbf16>
    %cst_46 = arith.constant dense<0.000000e+00> : vector<256x16xf32>
    %73 = tpu.matmul %72, %2, %cst_46 {dimension_numbers = #tpu.dot_dimension_numbers<[1], [0], [0], [1], [0, 0, 1, 1], [], []>} : vector<256x16xbf16>, vector<16x16xbf16>, vector<256x16xf32> -> vector<256x16xf32>
    %74 = vector.broadcast %11 : vector<1x16xf32> to vector<256x16xf32>
    %75 = arith.addf %73, %74 : vector<256x16xf32>
    %cst_47 = arith.constant 0.000000e+00 : f32
    %76 = vector.broadcast %cst_47 : f32 to vector<256x16xf32>
    %77 = arith.maximumf %75, %76 : vector<256x16xf32>
    %78 = arith.truncf %77 : vector<256x16xf32> to vector<256x16xbf16>
    %cst_48 = arith.constant dense<0.000000e+00> : vector<256x16xf32>
    %79 = tpu.matmul %78, %6, %cst_48 {dimension_numbers = #tpu.dot_dimension_numbers<[1], [0], [0], [1], [0, 0, 1, 1], [], []>} : vector<256x16xbf16>, vector<16x16xbf16>, vector<256x16xf32> -> vector<256x16xf32>
    %80 = vector.broadcast %15 : vector<1x16xf32> to vector<256x16xf32>
    %81 = arith.addf %79, %80 : vector<256x16xf32>
    %cst_49 = arith.constant 0.000000e+00 : f32
    %82 = vector.broadcast %cst_49 : f32 to vector<256x16xf32>
    %83 = arith.maximumf %81, %82 : vector<256x16xf32>
    %84 = arith.truncf %83 : vector<256x16xf32> to vector<256x16xbf16>
    %cst_50 = arith.constant dense<0.000000e+00> : vector<256x32xf32>
    %85 = tpu.matmul %84, %7, %cst_50 {dimension_numbers = #tpu.dot_dimension_numbers<[1], [0], [0], [1], [0, 0, 1, 1], [], []>} : vector<256x16xbf16>, vector<16x32xbf16>, vector<256x32xf32> -> vector<256x32xf32>
    %86 = vector.broadcast %16 : vector<1x32xf32> to vector<256x32xf32>
    %87 = arith.addf %85, %86 : vector<256x32xf32>
    %cst_51 = arith.constant 0.000000e+00 : f32
    %88 = vector.broadcast %cst_51 : f32 to vector<256x32xf32>
    %89 = arith.maximumf %87, %88 : vector<256x32xf32>
    %90 = arith.truncf %89 : vector<256x32xf32> to vector<256x32xbf16>
    %cst_52 = arith.constant dense<0.000000e+00> : vector<256x64xf32>
    %91 = tpu.matmul %90, %8, %cst_52 {dimension_numbers = #tpu.dot_dimension_numbers<[1], [0], [0], [1], [0, 0, 1, 1], [], []>} : vector<256x32xbf16>, vector<32x64xbf16>, vector<256x64xf32> -> vector<256x64xf32>
    %92 = vector.broadcast %17 : vector<1x64xf32> to vector<256x64xf32>
    %93 = arith.addf %91, %92 : vector<256x64xf32>
    %94 = arith.negf %93 : vector<256x64xf32>
    %95 = math.exp %94 : vector<256x64xf32>
    %cst_53 = arith.constant 1.000000e+00 : f32
    %96 = vector.broadcast %cst_53 : f32 to vector<256x64xf32>
    %97 = arith.addf %96, %95 : vector<256x64xf32>
    %98 = arith.divf %96, %97 : vector<256x64xf32>
    %99 = arith.truncf %98 : vector<256x64xf32> to vector<256x64xbf16>
    %c0_54 = arith.constant 0 : index
    %c0_55 = arith.constant 0 : index
    %100 = vector.load %arg13[%c0_54, %c0_55] : memref<256x64xbf16, #tpu.memory_space<vmem>>, vector<256x64xbf16>
    tpu.vector_store %arg13[%c0_54, %c0_55], %99 {strides = array<i32>} : memref<256x64xbf16, #tpu.memory_space<vmem>>, vector<256x64xbf16>,
    return
  }
  func.func @transform_0(%arg0: i32) -> (i32, i32) {
    %c0_i32 = arith.constant 0 : i32
    %c0_i32_0 = arith.constant 0 : i32
    return %arg0, %c0_i32 : i32, i32
  }
  func.func @transform_1(%arg0: i32) -> (i32, i32) {
    %c0_i32 = arith.constant 0 : i32
    %c0_i32_0 = arith.constant 0 : i32
    %c0_i32_1 = arith.constant 0 : i32
    return %c0_i32, %c0_i32_0 : i32, i32
  }
  func.func @transform_2(%arg0: i32) -> (i32, i32) {
    %c0_i32 = arith.constant 0 : i32
    %c0_i32_0 = arith.constant 0 : i32
    %c0_i32_1 = arith.constant 0 : i32
    return %c0_i32, %c0_i32_0 : i32, i32
  }
  func.func @transform_3(%arg0: i32) -> (i32, i32) {
    %c0_i32 = arith.constant 0 : i32
    %c0_i32_0 = arith.constant 0 : i32
    %c0_i32_1 = arith.constant 0 : i32
    return %c0_i32, %c0_i32_0 : i32, i32
  }
  func.func @transform_4(%arg0: i32) -> (i32, i32) {
    %c0_i32 = arith.constant 0 : i32
    %c0_i32_0 = arith.constant 0 : i32
    %c0_i32_1 = arith.constant 0 : i32
    return %c0_i32, %c0_i32_0 : i32, i32
  }
  func.func @transform_5(%arg0: i32) -> (i32, i32) {
    %c0_i32 = arith.constant 0 : i32
    %c0_i32_0 = arith.constant 0 : i32
    %c0_i32_1 = arith.constant 0 : i32
    return %c0_i32, %c0_i32_0 : i32, i32
  }
  func.func @transform_6(%arg0: i32) -> (i32, i32) {
    %c0_i32 = arith.constant 0 : i32
    %c0_i32_0 = arith.constant 0 : i32
    %c0_i32_1 = arith.constant 0 : i32
    return %c0_i32, %c0_i32_0 : i32, i32
  }
  func.func @transform_7(%arg0: i32) -> (i32, i32) {
    %c0_i32 = arith.constant 0 : i32
    %c0_i32_0 = arith.constant 0 : i32
    %c0_i32_1 = arith.constant 0 : i32
    return %c0_i32, %c0_i32_0 : i32, i32
  }
  func.func @transform_8(%arg0: i32) -> (i32, i32) {
    %c0_i32 = arith.constant 0 : i32
    %c0_i32_0 = arith.constant 0 : i32
    %c0_i32_1 = arith.constant 0 : i32
    return %c0_i32, %c0_i32_0 : i32, i32
  }
  func.func @transform_9(%arg0: i32) -> (i32, i32) {
    %c0_i32 = arith.constant 0 : i32
    %c0_i32_0 = arith.constant 0 : i32
    %c0_i32_1 = arith.constant 0 : i32
    return %c0_i32, %c0_i32_0 : i32, i32
  }
  func.func @transform_10(%arg0: i32) -> (i32, i32) {
    %c0_i32 = arith.constant 0 : i32
    %c0_i32_0 = arith.constant 0 : i32
    %c0_i32_1 = arith.constant 0 : i32
    return %c0_i32, %c0_i32_0 : i32, i32
  }
  func.func @transform_11(%arg0: i32) -> (i32, i32) {
    %c0_i32 = arith.constant 0 : i32
    %c0_i32_0 = arith.constant 0 : i32
    return %arg0, %c0_i32 : i32, i32
  }
  func.func @transform_12(%arg0: i32) -> (i32, i32) {
    %c0_i32 = arith.constant 0 : i32
    %c0_i32_0 = arith.constant 0 : i32
    return %arg0, %c0_i32 : i32, i32
  }
}

</mosaic_0001>

<llo_original>
// kernel: tpu_custom_call.1
$region0: #{tpu_custom_call.1}
  #allocation0 [shape = 'u32[]', space=smem, size = 0x4, offset = 0x4, fixed_abs, tag = 'smem constant byte address 0x4 - core index']
  #allocation1 [shape = 'u32[144,128]{1,0:T(1,128)}', space=vmem, size = 0x12000, scoped, tag = 'internal scratch']
  %s0 = inlined_call_operand.vmem [shape: bf16[512,64], index: 0, kind: input, shape index: {}]
  %s1 = inlined_call_operand.vmem [shape: bf16[64,32], index: 1, kind: input, shape index: {}]
  %s2 = inlined_call_operand.vmem [shape: bf16[32,16], index: 2, kind: input, shape index: {}]
  %s3 = inlined_call_operand.vmem [shape: bf16[16,16], index: 3, kind: input, shape index: {}]
  %s4 = inlined_call_operand.vmem [shape: bf16[16,32], index: 4, kind: input, shape index: {}]
  %s5 = inlined_call_operand.vmem [shape: bf16[32,64], index: 5, kind: input, shape index: {}]
  %s6 = inlined_call_operand.vmem [shape: bf16[64,128], index: 6, kind: input, shape index: {}]
  %s7 = inlined_call_operand.vmem [shape: bf16[16,16], index: 7, kind: input, shape index: {}]
  %s8 = inlined_call_operand.vmem [shape: bf16[16,32], index: 8, kind: input, shape index: {}]
  %s9 = inlined_call_operand.vmem [shape: bf16[32,64], index: 9, kind: input, shape index: {}]
  %s10 = inlined_call_operand.vmem [shape: f32[9,128], index: 10, kind: input, shape index: {}]
  %s11 = inlined_call_operand.hbm [shape: bf16[512,128], index: 11, kind: output, shape index: {0}]
  %s12 = inlined_call_operand.vmem [shape: bf16[512,64], index: 12, kind: output, shape index: {1}]
  %13 = xla_tuple %s11, %s12
  %s14 = sld [smem:[#allocation0]]
  $region85: #{tpu_custom_call.1} parent=0
    _
  %s16 = ssub.s32 1, %s14
  %s17 = scalar_select 0, %s16, %s14
  $region1: #{tpu_custom_call.1} parent=0
    #allocation2 [shape = 'u8[131072]{0}', space=vmem, size = 0x20000, scoped, tag = 'output window, operand 0']
    #allocation3 [shape = 's32[2]{0}', space=sflag, size = 0x8, scoped, tag = 'scoped memory for tpu_custom_call.1']
    %18 = vsyncpa [#allocation3], 0
    %s19 = scalar_lea.sflag [#allocation3], 1
    %20 = vsyncpa %s19, 0
    loop: start=0, step=1, limit=4
    $region2: #{tpu_custom_call.1} parent=1 // loop_pre_header
      _
    $region3: #{tpu_custom_call.1} parent=1 // loop_header
      %s22 = sphi 0, %s26
      %p23 = scmp.ge.s32.totalorder %s22, 4
      %s32 = sphi 0, %s34
      %s35 = sphi 0, %s32
      %s36 = sphi 0, %s35
      %s52 = sphi 0, %s36
      %s56 = sphi 0, %s56
      %s58 = sphi 0, %s56
      %s59 = sphi 0, %s58
      %s73 = sphi 0, %s59
      %s77 = sphi 0, %s77
      %s79 = sphi 0, %s77
      %s80 = sphi 0, %s79
      %s94 = sphi 0, %s80
      %s98 = sphi 0, %s98
      %s100 = sphi 0, %s98
      %s101 = sphi 0, %s100
      %s115 = sphi 0, %s101
      %s119 = sphi 0, %s119
      %s121 = sphi 0, %s119
      %s122 = sphi 0, %s121
      %s136 = sphi 0, %s122
      %s140 = sphi 0, %s140
      %s142 = sphi 0, %s140
      %s143 = sphi 0, %s142
      %s157 = sphi 0, %s143
      %s161 = sphi 0, %s161
      %s163 = sphi 0, %s161
      %s164 = sphi 0, %s163
      %s178 = sphi 0, %s164
      %s182 = sphi 0, %s182
      %s184 = sphi 0, %s182
      %s185 = sphi 0, %s184
      %s199 = sphi 0, %s185
      %s203 = sphi 0, %s203
      %s205 = sphi 0, %s203
      %s206 = sphi 0, %s205
      %s220 = sphi 0, %s206
      %s224 = sphi 0, %s224
      %s226 = sphi 0, %s224
      %s227 = sphi 0, %s226
      %s241 = sphi 0, %s227
      %s245 = sphi 0, %s245
      %s247 = sphi 0, %s245
      %s248 = sphi 0, %s247
      %s262 = sphi 0, %s248
      %s268 = sphi 0, %s270
      %s271 = sphi 0, %s268
      %s272 = sphi 0, %s271
      %s288 = sphi 0, %s272
      %s294 = sphi 0, %s296
      %s297 = sphi 0, %s294
      %s298 = sphi 0, %s297
      %s314 = sphi 0, %s298
    $region4: #{tpu_custom_call.1} parent=1 // loop_header_branch
      %25 = sbr.rel (%p23) target = $region8
    $region5: #{tpu_custom_call.1} parent=1 // loop_body
      %s27 = ssub.s32 %s22, 1
      %s28 = ssub.s32 %s22, 2
      %s29 = sadd.s32 %s22, 1
      %s30 = ssub.s32 %s22, %s29
      %p31 = scmp.eq.s32.totalorder %s30, 0
      %s33 = sadd.s32 %s32, 1
      %s34 = scalar_select %p31, %s32, %s33
      %p37 = pneg %p31
      %p38 = scmp.eq.s32.totalorder %s22, 1
      %p39 = por %p37, %p38
      %p40 = scmp.ne.s32.totalorder %s32, %s35
      %p41 = scmp.eq.s32.totalorder %s22, 0
      %p42 = por %p40, %p41
      %p43 = scmp.ne.s32.totalorder %s32, %s35
      %p44 = scmp.eq.s32.totalorder %s27, 1
      %p45 = por %p43, %p44
      %p46 = scmp.ne.s32.totalorder %s35, %s36
      %p47 = scmp.eq.s32.totalorder %s27, 0
      %p48 = por %p46, %p47
      %p49 = scmp.ne.s32.totalorder %s35, %s36
      %p50 = scmp.eq.s32.totalorder %s28, 1
      %p51 = por %p49, %p50
      %p53 = scmp.ne.s32.totalorder %s36, %s52
      %p54 = scmp.eq.s32.totalorder %s28, 0
      %p55 = por %p53, %p54
      %s57 = sadd.s32 %s56, 1
      %p60 = scmp.eq.s32.totalorder %s22, 1
      %p61 = scmp.ne.s32.totalorder %s56, %s58
      %p62 = scmp.eq.s32.totalorder %s22, 0
      %p63 = por %p61, %p62
      %p64 = scmp.ne.s32.totalorder %s56, %s58
      %p65 = scmp.eq.s32.totalorder %s27, 1
      %p66 = por %p64, %p65
      %p67 = scmp.ne.s32.totalorder %s58, %s59
      %p68 = scmp.eq.s32.totalorder %s27, 0
      %p69 = por %p67, %p68
      %p70 = scmp.ne.s32.totalorder %s58, %s59
      %p71 = scmp.eq.s32.totalorder %s28, 1
      %p72 = por %p70, %p71
      %p74 = scmp.ne.s32.totalorder %s59, %s73
      %p75 = scmp.eq.s32.totalorder %s28, 0
      %p76 = por %p74, %p75
      %s78 = sadd.s32 %s77, 1
      %p81 = scmp.eq.s32.totalorder %s22, 1
      %p82 = scmp.ne.s32.totalorder %s77, %s79
      %p83 = scmp.eq.s32.totalorder %s22, 0
      %p84 = por %p82, %p83
      %p85 = scmp.ne.s32.totalorder %s77, %s79
      %p86 = scmp.eq.s32.totalorder %s27, 1
      %p87 = por %p85, %p86
      %p88 = scmp.ne.s32.totalorder %s79, %s80
      %p89 = scmp.eq.s32.totalorder %s27, 0
      %p90 = por %p88, %p89
      %p91 = scmp.ne.s32.totalorder %s79, %s80
      %p92 = scmp.eq.s32.totalorder %s28, 1
      %p93 = por %p91, %p92
      %p95 = scmp.ne.s32.totalorder %s80, %s94
      %p96 = scmp.eq.s32.totalorder %s28, 0
      %p97 = por %p95, %p96
      %s99 = sadd.s32 %s98, 1
      %p102 = scmp.eq.s32.totalorder %s22, 1
      %p103 = scmp.ne.s32.totalorder %s98, %s100
      %p104 = scmp.eq.s32.totalorder %s22, 0
      %p105 = por %p103, %p104
      %p106 = scmp.ne.s32.totalorder %s98, %s100
      %p107 = scmp.eq.s32.totalorder %s27, 1
      %p108 = por %p106, %p107
      %p109 = scmp.ne.s32.totalorder %s100, %s101
      %p110 = scmp.eq.s32.totalorder %s27, 0
      %p111 = por %p109, %p110
      %p112 = scmp.ne.s32.totalorder %s100, %s101
      %p113 = scmp.eq.s32.totalorder %s28, 1
      %p114 = por %p112, %p113
      %p116 = scmp.ne.s32.totalorder %s101, %s115
      %p117 = scmp.eq.s32.totalorder %s28, 0
      %p118 = por %p116, %p117
      %s120 = sadd.s32 %s119, 1
      %p123 = scmp.eq.s32.totalorder %s22, 1
      %p124 = scmp.ne.s32.totalorder %s119, %s121
      %p125 = scmp.eq.s32.totalorder %s22, 0
      %p126 = por %p124, %p125
      %p127 = scmp.ne.s32.totalorder %s119, %s121
      %p128 = scmp.eq.s32.totalorder %s27, 1
      %p129 = por %p127, %p128
      %p130 = scmp.ne.s32.totalorder %s121, %s122
      %p131 = scmp.eq.s32.totalorder %s27, 0
      %p132 = por %p130, %p131
      %p133 = scmp.ne.s32.totalorder %s121, %s122
      %p134 = scmp.eq.s32.totalorder %s28, 1
      %p135 = por %p133, %p134
      %p137 = scmp.ne.s32.totalorder %s122, %s136
      %p138 = scmp.eq.s32.totalorder %s28, 0
      %p139 = por %p137, %p138
      %s141 = sadd.s32 %s140, 1
      %p144 = scmp.eq.s32.totalorder %s22, 1
      %p145 = scmp.ne.s32.totalorder %s140, %s142
      %p146 = scmp.eq.s32.totalorder %s22, 0
      %p147 = por %p145, %p146
      %p148 = scmp.ne.s32.totalorder %s140, %s142
      %p149 = scmp.eq.s32.totalorder %s27, 1
      %p150 = por %p148, %p149
      %p151 = scmp.ne.s32.totalorder %s142, %s143
      %p152 = scmp.eq.s32.totalorder %s27, 0
      %p153 = por %p151, %p152
      %p154 = scmp.ne.s32.totalorder %s142, %s143
      %p155 = scmp.eq.s32.totalorder %s28, 1
      %p156 = por %p154, %p155
      %p158 = scmp.ne.s32.totalorder %s143, %s157
      %p159 = scmp.eq.s32.totalorder %s28, 0
      %p160 = por %p158, %p159
      %s162 = sadd.s32 %s161, 1
      %p165 = scmp.eq.s32.totalorder %s22, 1
      %p166 = scmp.ne.s32.totalorder %s161, %s163
      %p167 = scmp.eq.s32.totalorder %s22, 0
      %p168 = por %p166, %p167
      %p169 = scmp.ne.s32.totalorder %s161, %s163
      %p170 = scmp.eq.s32.totalorder %s27, 1
      %p171 = por %p169, %p170
      %p172 = scmp.ne.s32.totalorder %s163, %s164
      %p173 = scmp.eq.s32.totalorder %s27, 0
      %p174 = por %p172, %p173
      %p175 = scmp.ne.s32.totalorder %s163, %s164
      %p176 = scmp.eq.s32.totalorder %s28, 1
      %p177 = por %p175, %p176
      %p179 = scmp.ne.s32.totalorder %s164, %s178
      %p180 = scmp.eq.s32.totalorder %s28, 0
      %p181 = por %p179, %p180
      %s183 = sadd.s32 %s182, 1
      %p186 = scmp.eq.s32.totalorder %s22, 1
      %p187 = scmp.ne.s32.totalorder %s182, %s184
      %p188 = scmp.eq.s32.totalorder %s22, 0
      %p189 = por %p187, %p188
      %p190 = scmp.ne.s32.totalorder %s182, %s184
      %p191 = scmp.eq.s32.totalorder %s27, 1
      %p192 = por %p190, %p191
      %p193 = scmp.ne.s32.totalorder %s184, %s185
      %p194 = scmp.eq.s32.totalorder %s27, 0
      %p195 = por %p193, %p194
      %p196 = scmp.ne.s32.totalorder %s184, %s185
      %p197 = scmp.eq.s32.totalorder %s28, 1
      %p198 = por %p196, %p197
      %p200 = scmp.ne.s32.totalorder %s185, %s199
      %p201 = scmp.eq.s32.totalorder %s28, 0
      %p202 = por %p200, %p201
      %s204 = sadd.s32 %s203, 1
      %p207 = scmp.eq.s32.totalorder %s22, 1
      %p208 = scmp.ne.s32.totalorder %s203, %s205
      %p209 = scmp.eq.s32.totalorder %s22, 0
      %p210 = por %p208, %p209
      %p211 = scmp.ne.s32.totalorder %s203, %s205
      %p212 = scmp.eq.s32.totalorder %s27, 1
      %p213 = por %p211, %p212
      %p214 = scmp.ne.s32.totalorder %s205, %s206
      %p215 = scmp.eq.s32.totalorder %s27, 0
      %p216 = por %p214, %p215
      %p217 = scmp.ne.s32.totalorder %s205, %s206
      %p218 = scmp.eq.s32.totalorder %s28, 1
      %p219 = por %p217, %p218
      %p221 = scmp.ne.s32.totalorder %s206, %s220
      %p222 = scmp.eq.s32.totalorder %s28, 0
      %p223 = por %p221, %p222
      %s225 = sadd.s32 %s224, 1
      %p228 = scmp.eq.s32.totalorder %s22, 1
      %p229 = scmp.ne.s32.totalorder %s224, %s226
      %p230 = scmp.eq.s32.totalorder %s22, 0
      %p231 = por %p229, %p230
      %p232 = scmp.ne.s32.totalorder %s224, %s226
      %p233 = scmp.eq.s32.totalorder %s27, 1
      %p234 = por %p232, %p233
      %p235 = scmp.ne.s32.totalorder %s226, %s227
      %p236 = scmp.eq.s32.totalorder %s27, 0
      %p237 = por %p235, %p236
      %p238 = scmp.ne.s32.totalorder %s226, %s227
      %p239 = scmp.eq.s32.totalorder %s28, 1
      %p240 = por %p238, %p239
      %p242 = scmp.ne.s32.totalorder %s227, %s241
      %p243 = scmp.eq.s32.totalorder %s28, 0
      %p244 = por %p242, %p243
      %s246 = sadd.s32 %s245, 1
      %p249 = scmp.eq.s32.totalorder %s22, 1
      %p250 = scmp.ne.s32.totalorder %s245, %s247
      %p251 = scmp.eq.s32.totalorder %s22, 0
      %p252 = por %p250, %p251
      %p253 = scmp.ne.s32.totalorder %s245, %s247
      %p254 = scmp.eq.s32.totalorder %s27, 1
      %p255 = por %p253, %p254
      %p256 = scmp.ne.s32.totalorder %s247, %s248
      %p257 = scmp.eq.s32.totalorder %s27, 0
      %p258 = por %p256, %p257
      %p259 = scmp.ne.s32.totalorder %s247, %s248
      %p260 = scmp.eq.s32.totalorder %s28, 1
      %p261 = por %p259, %p260
      %p263 = scmp.ne.s32.totalorder %s248, %s262
      %p264 = scmp.eq.s32.totalorder %s28, 0
      %p265 = por %p263, %p264
      %s266 = ssub.s32 %s22, %s29
      %p267 = scmp.eq.s32.totalorder %s266, 0
      %s269 = sadd.s32 %s268, 1
      %s270 = scalar_select %p267, %s268, %s269
      %p273 = pneg %p267
      %p274 = scmp.eq.s32.totalorder %s22, 1
      %p275 = por %p273, %p274
      %p276 = scmp.ne.s32.totalorder %s268, %s271
      %p277 = scmp.eq.s32.totalorder %s22, 0
      %p278 = por %p276, %p277
      %p279 = scmp.ne.s32.totalorder %s268, %s271
      %p280 = scmp.eq.s32.totalorder %s27, 1
      %p281 = por %p279, %p280
      %p282 = scmp.ne.s32.totalorder %s271, %s272
      %p283 = scmp.eq.s32.totalorder %s27, 0
      %p284 = por %p282, %p283
      %p285 = scmp.ne.s32.totalorder %s271, %s272
      %p286 = scmp.eq.s32.totalorder %s28, 1
      %p287 = por %p285, %p286
      %p289 = scmp.ne.s32.totalorder %s272, %s288
      %p290 = scmp.eq.s32.totalorder %s28, 0
      %p291 = por %p289, %p290
      %s292 = ssub.s32 %s22, %s29
      %p293 = scmp.eq.s32.totalorder %s292, 0
      %s295 = sadd.s32 %s294, 1
      %s296 = scalar_select %p293, %s294, %s295
      %p299 = pneg %p293
      %p300 = scmp.eq.s32.totalorder %s22, 1
      %p301 = por %p299, %p300
      %p302 = scmp.ne.s32.totalorder %s294, %s297
      %p303 = scmp.eq.s32.totalorder %s22, 0
      %p304 = por %p302, %p303
      %p305 = scmp.ne.s32.totalorder %s294, %s297
      %p306 = scmp.eq.s32.totalorder %s27, 1
      %p307 = por %p305, %p306
      %p308 = scmp.ne.s32.totalorder %s297, %s298
      %p309 = scmp.eq.s32.totalorder %s27, 0
      %p310 = por %p308, %p309
      %p311 = scmp.ne.s32.totalorder %s297, %s298
      %p312 = scmp.eq.s32.totalorder %s28, 1
      %p313 = por %p311, %p312
      %p315 = scmp.ne.s32.totalorder %s298, %s314
      %p316 = scmp.eq.s32.totalorder %s28, 0
      %p317 = por %p315, %p316
      %p318 = scmp.le.s32.totalorder 1, %s22
      %p319 = scmp.lt.s32.totalorder %s22, 3
      %p320 = pnand %p318, %p319
      %p321 = pneg %p320
      // Predicated region
      $region9: #{tpu_custom_call.1} parent=5 // pred_check
        _
      $region10: #{tpu_custom_call.1} parent=5 // pred_check_branch
        %323 = sbr.rel (%p320) target = $region12
      $region11: #{tpu_custom_call.1} parent=5 // pred_region
        %s324 = ssub.s32 %s22, 1
        // Predicated region
        $region13: #{tpu_custom_call.1} parent=11 // pred_check
          %p325 = pneg %p69
        $region14: #{tpu_custom_call.1} parent=11 // pred_check_branch
          %327 = sbr.rel (%p325) target = $region16
        $region15: #{tpu_custom_call.1} parent=11 // pred_region
          _
        $region16: #{tpu_custom_call.1} parent=11 // pred_fallthru
          _
        // Predicated region
        $region17: #{tpu_custom_call.1} parent=11 // pred_check
          %p328 = pneg %p90
        $region18: #{tpu_custom_call.1} parent=11 // pred_check_branch
          %330 = sbr.rel (%p328) target = $region20
        $region19: #{tpu_custom_call.1} parent=11 // pred_region
          _
        $region20: #{tpu_custom_call.1} parent=11 // pred_fallthru
          _
        // Predicated region
        $region21: #{tpu_custom_call.1} parent=11 // pred_check
          %p331 = pneg %p111
        $region22: #{tpu_custom_call.1} parent=11 // pred_check_branch
          %333 = sbr.rel (%p331) target = $region24
        $region23: #{tpu_custom_call.1} parent=11 // pred_region
          _
        $region24: #{tpu_custom_call.1} parent=11 // pred_fallthru
          _
        // Predicated region
        $region25: #{tpu_custom_call.1} parent=11 // pred_check
          %p334 = pneg %p132
        $region26: #{tpu_custom_call.1} parent=11 // pred_check_branch
          %336 = sbr.rel (%p334) target = $region28
        $region27: #{tpu_custom_call.1} parent=11 // pred_region
          _
        $region28: #{tpu_custom_call.1} parent=11 // pred_fallthru
          _
        // Predicated region
        $region29: #{tpu_custom_call.1} parent=11 // pred_check
          %p337 = pneg %p153
        $region30: #{tpu_custom_call.1} parent=11 // pred_check_branch
          %339 = sbr.rel (%p337) target = $region32
        $region31: #{tpu_custom_call.1} parent=11 // pred_region
          _
        $region32: #{tpu_custom_call.1} parent=11 // pred_fallthru
          _
        // Predicated region
        $region33: #{tpu_custom_call.1} parent=11 // pred_check
          %p340 = pneg %p174
        $region34: #{tpu_custom_call.1} parent=11 // pred_check_branch
          %342 = sbr.rel (%p340) target = $region36
        $region35: #{tpu_custom_call.1} parent=11 // pred_region
          _
        $region36: #{tpu_custom_call.1} parent=11 // pred_fallthru
          _
        // Predicated region
        $region37: #{tpu_custom_call.1} parent=11 // pred_check
          %p343 = pneg %p195
        $region38: #{tpu_custom_call.1} parent=11 // pred_check_branch
          %345 = sbr.rel (%p343) target = $region40
        $region39: #{tpu_custom_call.1} parent=11 // pred_region
          _
        $region40: #{tpu_custom_call.1} parent=11 // pred_fallthru
          _
        // Predicated region
        $region41: #{tpu_custom_call.1} parent=11 // pred_check
          %p346 = pneg %p216
        $region42: #{tpu_custom_call.1} parent=11 // pred_check_branch
          %348 = sbr.rel (%p346) target = $region44
        $region43: #{tpu_custom_call.1} parent=11 // pred_region
          _
        $region44: #{tpu_custom_call.1} parent=11 // pred_fallthru
          _
        // Predicated region
        $region45: #{tpu_custom_call.1} parent=11 // pred_check
          %p349 = pneg %p237
        $region46: #{tpu_custom_call.1} parent=11 // pred_check_branch
          %351 = sbr.rel (%p349) target = $region48
        $region47: #{tpu_custom_call.1} parent=11 // pred_region
          _
        $region48: #{tpu_custom_call.1} parent=11 // pred_fallthru
          _
        // Predicated region
        $region49: #{tpu_custom_call.1} parent=11 // pred_check
          %p352 = pneg %p258
        $region50: #{tpu_custom_call.1} parent=11 // pred_check_branch
          %354 = sbr.rel (%p352) target = $region52
        $region51: #{tpu_custom_call.1} parent=11 // pred_region
          _
        $region52: #{tpu_custom_call.1} parent=11 // pred_fallthru
          _
      $region12: #{tpu_custom_call.1} parent=5 // pred_fallthru
        _
      %p355 = scmp.lt.s32.totalorder %s22, 2
      // Predicated region
      $region53: #{tpu_custom_call.1} parent=5 // pred_check
        %p356 = pneg %p355
      $region54: #{tpu_custom_call.1} parent=5 // pred_check_branch
        %358 = sbr.rel (%p356) target = $region56
      $region55: #{tpu_custom_call.1} parent=5 // pred_region
        // Predicated region
        $region57: #{tpu_custom_call.1} parent=55 // pred_check
          %p359 = pneg %p42
        $region58: #{tpu_custom_call.1} parent=55 // pred_check_branch
          %361 = sbr.rel (%p359) target = $region60
        $region59: #{tpu_custom_call.1} parent=55 // pred_region
          %s362 = smul.u32 32, %s22
          %p363 = scmp.lt.s32.totalorder %s362, 63
          %s364 = scalar_select %p363, %s362, 63
          %s365 = smul.addr %s364, 4
          %s366 = scalar_lea.vmem %s0, %s365
          %s367 = smul.u32 32, %s22
        $region60: #{tpu_custom_call.1} parent=55 // pred_fallthru
          _
      $region56: #{tpu_custom_call.1} parent=5 // pred_fallthru
        _
      %p368 = scmp.le.s32.totalorder 1, %s22
      %p369 = scmp.lt.s32.totalorder %s22, 3
      %p370 = pnand %p368, %p369
      %p371 = pneg %p370
      // Predicated region
      $region61: #{tpu_custom_call.1} parent=5 // pred_check
        _
      $region62: #{tpu_custom_call.1} parent=5 // pred_check_branch
        %373 = sbr.rel (%p370) target = $region64
      $region63: #{tpu_custom_call.1} parent=5 // pred_region
        %s374 = ssub.s32 %s22, 1
        %s375 = smul.u32 32, %s27
        %p376 = scmp.lt.s32.totalorder %s375, 63
        %s377 = scalar_select %p376, %s375, 63
        %s378 = smul.addr %s377, 4
        %s379 = scalar_lea.vmem %s0, %s378
        %p380 = pneg %p48
        %p381 = pneg %p45
        %p382 = pneg %p69
        %p383 = pneg %p66
        %p384 = pneg %p90
        %p385 = pneg %p87
        %p386 = pneg %p111
        %p387 = pneg %p108
        %p388 = pneg %p132
        %p389 = pneg %p129
        %p390 = pneg %p153
        %p391 = pneg %p150
        %p392 = pneg %p174
        %p393 = pneg %p171
        %p394 = pneg %p195
        %p395 = pneg %p192
        %p396 = pneg %p216
        %p397 = pneg %p213
        %p398 = pneg %p237
        %p399 = pneg %p234
        %p400 = pneg %p258
        %p401 = pneg %p255
        %p402 = pneg %p284
        %p403 = pneg %p281
        %s404 = sand.u32 %s271, 1
        %s405 = scalar_lea.sflag [#allocation3], %s404
        %s406 = sand.u32 %s271, 1
        %s407 = smul.addr %s406, 128
        %s408 = scalar_lea.vmem [#allocation2], %s407
        %p409 = pneg %p310
        %p410 = pneg %p307
        %s411 = smul.u32 32, %s27
        %p412 = scmp.lt.s32.totalorder %s411, 63
        %s413 = scalar_select %p412, %s411, 63
        %s414 = smul.addr %s413, 4
        %s415 = scalar_lea.vmem %s12, %s414
        %s416 = smul.u32 32, %s27
        %p417 = scmp.lt.s32.totalorder %s416, 63
        %s418 = scalar_select %p417, %s416, 63
        %s419 = smul.addr %s418, 4
        %s420 = scalar_lea.vmem %s0, %s419
        %s421 = smul.u32 32, %s27
        %s422 = smul.u32 32, %s27
        %s423 = smul.u32 32, %s27
        %p424 = scmp.lt.s32.totalorder %s423, 63
        %s425 = scalar_select %p424, %s423, 63
        %s426 = smul.addr %s425, 4
        %s427 = scalar_lea.vmem %s12, %s426
        %s428 = smul.u32 32, %s27
        %v430 = vld [vmem:[%s1] sm:$0xf]
        %v431 = vld [vmem:[%s1 + $0x4] sm:$0xf]
        %v432 = vld [vmem:[%s1 + $0x8] sm:$0xf]
        %v433 = vld [vmem:[%s1 + $0xc] sm:$0xf]
        %v434 = vld [vmem:[%s1 + $0x10] sm:$0xf]
        %v435 = vld [vmem:[%s1 + $0x14] sm:$0xf]
        %v436 = vld [vmem:[%s1 + $0x18] sm:$0xf]
        %v437 = vld [vmem:[%s1 + $0x1c] sm:$0xf]
        %v438 = vld [vmem:[%s2] sm:$0xf]
        %v439 = vld [vmem:[%s2 + $0x4] sm:$0xf]
        %v440 = vld [vmem:[%s2 + $0x8] sm:$0xf]
        %v441 = vld [vmem:[%s2 + $0xc] sm:$0xf]
        %v442 = vld [vmem:[%s3] sm:$0xf]
        %v443 = vld [vmem:[%s3 + $0x4] sm:$0xf]
        %v444 = vld [vmem:[%s4] sm:$0xf]
        %v445 = vld [vmem:[%s4 + $0x4] sm:$0xf]
        %v446 = vld [vmem:[%s5] sm:$0xf]
        %v447 = vld [vmem:[%s5 + $0x4] sm:$0xf]
        %v448 = vld [vmem:[%s5 + $0x8] sm:$0xf]
        %v449 = vld [vmem:[%s5 + $0xc] sm:$0xf]
        %v450 = vld [vmem:[%s6] sm:$0xf]
        %v451 = vld [vmem:[%s6 + $0x4] sm:$0xf]
        %v452 = vld [vmem:[%s6 + $0x8] sm:$0xf]
        %v453 = vld [vmem:[%s6 + $0xc] sm:$0xf]
        %v454 = vld [vmem:[%s6 + $0x10] sm:$0xf]
        %v455 = vld [vmem:[%s6 + $0x14] sm:$0xf]
        %v456 = vld [vmem:[%s6 + $0x18] sm:$0xf]
        %v457 = vld [vmem:[%s6 + $0x1c] sm:$0xf]
        %v458 = vld [vmem:[%s7] sm:$0xf]
        %v459 = vld [vmem:[%s7 + $0x4] sm:$0xf]
        %v460 = vld [vmem:[%s8] sm:$0xf]
        %v461 = vld [vmem:[%s8 + $0x4] sm:$0xf]
        %v462 = vld [vmem:[%s9] sm:$0xf]
        %v463 = vld [vmem:[%s9 + $0x4] sm:$0xf]
        %v464 = vld [vmem:[%s9 + $0x8] sm:$0xf]
        %v465 = vld [vmem:[%s9 + $0xc] sm:$0xf]
        %v466 = vld [vmem:[%s10] sm:$0x1]
        %v467 = vld [vmem:[%s10 + $0x1] sm:$0x1]
        %v468 = vld [vmem:[%s10 + $0x2] sm:$0x1]
        %v469 = vld [vmem:[%s10 + $0x3] sm:$0x1]
        %v470 = vld [vmem:[%s10 + $0x4] sm:$0x1]
        %v471 = vld [vmem:[%s10 + $0x5] sm:$0x1]
        %v472 = vld [vmem:[%s10 + $0x6] sm:$0x1]
        %v473 = vld [vmem:[%s10 + $0x7] sm:$0x1]
        %v474 = vld [vmem:[%s10 + $0x8] sm:$0x1]
        %v475 = vld [vmem:[%s420] sm:$0xf]
        %v476 = vld [vmem:[%s420 + $0x4] sm:$0xf]
        %v477 = vld [vmem:[%s420 + $0x8] sm:$0xf]
        %v478 = vld [vmem:[%s420 + $0xc] sm:$0xf]
        %v479 = vld [vmem:[%s420 + $0x10] sm:$0xf]
        %v480 = vld [vmem:[%s420 + $0x14] sm:$0xf]
        %v481 = vld [vmem:[%s420 + $0x18] sm:$0xf]
        %v482 = vld [vmem:[%s420 + $0x1c] sm:$0xf]
        %v483 = vld [vmem:[%s420 + $0x20] sm:$0xf]
        %v484 = vld [vmem:[%s420 + $0x24] sm:$0xf]
        %v485 = vld [vmem:[%s420 + $0x28] sm:$0xf]
        %v486 = vld [vmem:[%s420 + $0x2c] sm:$0xf]
        %v487 = vld [vmem:[%s420 + $0x30] sm:$0xf]
        %v488 = vld [vmem:[%s420 + $0x34] sm:$0xf]
        %v489 = vld [vmem:[%s420 + $0x38] sm:$0xf]
        %v490 = vld [vmem:[%s420 + $0x3c] sm:$0xf]
        %v491 = vld [vmem:[%s420 + $0x40] sm:$0xf]
        %v492 = vld [vmem:[%s420 + $0x44] sm:$0xf]
        %v493 = vld [vmem:[%s420 + $0x48] sm:$0xf]
        %v494 = vld [vmem:[%s420 + $0x4c] sm:$0xf]
        %v495 = vld [vmem:[%s420 + $0x50] sm:$0xf]
        %v496 = vld [vmem:[%s420 + $0x54] sm:$0xf]
        %v497 = vld [vmem:[%s420 + $0x58] sm:$0xf]
        %v498 = vld [vmem:[%s420 + $0x5c] sm:$0xf]
        %v499 = vld [vmem:[%s420 + $0x60] sm:$0xf]
        %v500 = vld [vmem:[%s420 + $0x64] sm:$0xf]
        %v501 = vld [vmem:[%s420 + $0x68] sm:$0xf]
        %v502 = vld [vmem:[%s420 + $0x6c] sm:$0xf]
        %v503 = vld [vmem:[%s420 + $0x70] sm:$0xf]
        %v504 = vld [vmem:[%s420 + $0x74] sm:$0xf]
        %v505 = vld [vmem:[%s420 + $0x78] sm:$0xf]
        %v506 = vld [vmem:[%s420 + $0x7c] sm:$0xf]
        %v507 = vlaneseq
        %v508 = vshrl.u32 %v507, 7
        %v509 = vsub.s32 0, %v508
        %v510 = vrot.slane %v466, %v509
        %v543 = vunpack.c.l.b16 %v475
        %v544 = vunpack.c.l.b16 %v476
        %v545 = vunpack.c.l.b16 %v477
        %v546 = vunpack.c.l.b16 %v478
        %v547 = vunpack.c.l.b16 %v479
        %v548 = vunpack.c.l.b16 %v480
        %v549 = vunpack.c.l.b16 %v481
        %v550 = vunpack.c.l.b16 %v482
        %v551 = vunpack.c.l.b16 %v483
        %v552 = vunpack.c.l.b16 %v484
        %v553 = vunpack.c.l.b16 %v485
        %v554 = vunpack.c.l.b16 %v486
        %v555 = vunpack.c.l.b16 %v487
        %v556 = vunpack.c.l.b16 %v488
        %v557 = vunpack.c.l.b16 %v489
        %v558 = vunpack.c.l.b16 %v490
        %v559 = vunpack.c.l.b16 %v491
        %v560 = vunpack.c.l.b16 %v492
        %v561 = vunpack.c.l.b16 %v493
        %v562 = vunpack.c.l.b16 %v494
        %v563 = vunpack.c.l.b16 %v495
        %v564 = vunpack.c.l.b16 %v496
        %v565 = vunpack.c.l.b16 %v497
        %v566 = vunpack.c.l.b16 %v498
        %v567 = vunpack.c.l.b16 %v499
        %v568 = vunpack.c.l.b16 %v500
        %v569 = vunpack.c.l.b16 %v501
        %v570 = vunpack.c.l.b16 %v502
        %v571 = vunpack.c.l.b16 %v503
        %v572 = vunpack.c.l.b16 %v504
        %v573 = vunpack.c.l.b16 %v505
        %v574 = vunpack.c.l.b16 %v506
        %v575 = vpack.c.b16 %v544, %v543
        %v576 = vpack.c.b16 %v546, %v545
        %v577 = vpack.c.b16 %v548, %v547
        %v578 = vpack.c.b16 %v550, %v549
        %v579 = vpack.c.b16 %v552, %v551
        %v580 = vpack.c.b16 %v554, %v553
        %v581 = vpack.c.b16 %v556, %v555
        %v582 = vpack.c.b16 %v558, %v557
        %v583 = vpack.c.b16 %v560, %v559
        %v584 = vpack.c.b16 %v562, %v561
        %v585 = vpack.c.b16 %v564, %v563
        %v586 = vpack.c.b16 %v566, %v565
        %v587 = vpack.c.b16 %v568, %v567
        %v588 = vpack.c.b16 %v570, %v569
        %v589 = vpack.c.b16 %v572, %v571
        %v590 = vpack.c.b16 %v574, %v573
        %v599 = vunpack.c.l.b16 %v430
        %v600 = vunpack.c.l.b16 %v431
        %v601 = vunpack.c.l.b16 %v432
        %v602 = vunpack.c.l.b16 %v433
        %v603 = vunpack.c.l.b16 %v434
        %v604 = vunpack.c.l.b16 %v435
        %v605 = vunpack.c.l.b16 %v436
        %v606 = vunpack.c.l.b16 %v437
        %v607 = vpack.c.b16 %v600, %v599
        %v608 = vpack.c.b16 %v602, %v601
        %v609 = vpack.c.b16 %v604, %v603
        %v610 = vpack.c.b16 %v606, %v605
        %vm615 = vcmask 523264
        %v617 = vsel %vm615, %v575, 0
        %v620 = vsel %vm615, %v576, 0
        %v623 = vsel %vm615, %v577, 0
        %v626 = vsel %vm615, %v578, 0
        %v629 = vsel %vm615, %v579, 0
        %v632 = vsel %vm615, %v580, 0
        %v635 = vsel %vm615, %v581, 0
        %v638 = vsel %vm615, %v582, 0
        %v641 = vsel %vm615, %v583, 0
        %v644 = vsel %vm615, %v584, 0
        %v647 = vsel %vm615, %v585, 0
        %v650 = vsel %vm615, %v586, 0
        %v653 = vsel %vm615, %v587, 0
        %v656 = vsel %vm615, %v588, 0
        %v659 = vsel %vm615, %v589, 0
        %v662 = vsel %vm615, %v590, 0
        %664 = vmatprep.subr.bf16.mxu0 0
        %665 = vmatpush1.bf16.msra.mxu0 0
        %666 = vmatprep.subr.bf16.mxu0 0
        %667 = vmatpush1.bf16.msra.mxu0 0
        %668 = vmatprep.subr.bf16.mxu0 0
        %669 = vmatpush1.bf16.msra.mxu0 0
        %670 = vmatprep.subr.bf16.mxu0 0
        %671 = vmatpush1.bf16.msra.mxu0 0
        %672 = vmatprep.subr.bf16.mxu0 0
        %673 = vmatpush1.bf16.msra.mxu0 %v610
        %674 = vmatprep.subr.bf16.mxu0 0
        %675 = vmatpush1.bf16.msra.mxu0 %v609
        %676 = vmatprep.subr.bf16.mxu0 0
        %677 = vmatpush1.bf16.msra.mxu0 %v608
        %678 = vmatprep.subr.bf16.mxu0 0
        %679 = vmatpush1.bf16.msra.mxu0 %v607
        %680 = vmatprep.subr.bf16.mxu0 0
        %681 = vmatpush2.bf16.msra.mxu0 0
        %682 = vmatprep.subr.bf16.mxu0 0
        %683 = vmatpush2.bf16.msra.mxu0 0
        %684 = vmatprep.subr.bf16.mxu0 0
        %685 = vmatpush2.bf16.msra.mxu0 0
        %686 = vmatprep.subr.bf16.mxu0 0
        %687 = vmatpush2.bf16.msra.mxu0 0
        %688 = vmatprep.subr.bf16.mxu0 0
        %689 = vmatpush2.bf16.msra.mxu0 0
        %690 = vmatprep.subr.bf16.mxu0 0
        %691 = vmatpush2.bf16.msra.mxu0 0
        %692 = vmatprep.subr.bf16.mxu0 0
        %693 = vmatpush2.bf16.msra.mxu0 0
        %694 = vmatprep.subr.bf16.mxu0 0
        %695 = vmatpush2.bf16.msra.mxu0 0
        %696 = vmatprep.mubr.bf16.mxu0 0
        %697 = vmatmul.mubr.bf16.gmra.mxu0 %v617
        %v698 = vpop.f32.mrf.mxu0
        %v699 = vadd.f32 %v510, %v698
        %v700 = vpop.f32.mrf.mxu0
        %v701 = vpop.f32.mrf.mxu0
        %v702 = vadd.f32 %v510, %v701
        %v703 = vpop.f32.mrf.mxu0
        %704 = vmatprep.mubr.bf16.mxu0 0
        %705 = vmatmul.mubr.bf16.gmra.mxu0 %v620
        %v706 = vpop.f32.mrf.mxu0
        %v707 = vadd.f32 %v510, %v706
        %v708 = vpop.f32.mrf.mxu0
        %v709 = vpop.f32.mrf.mxu0
        %v710 = vadd.f32 %v510, %v709
        %v711 = vpop.f32.mrf.mxu0
        %712 = vmatprep.mubr.bf16.mxu0 0
        %713 = vmatmul.mubr.bf16.gmra.mxu0 %v623
        %v714 = vpop.f32.mrf.mxu0
        %v715 = vadd.f32 %v510, %v714
        %v716 = vpop.f32.mrf.mxu0
        %v717 = vpop.f32.mrf.mxu0
        %v718 = vadd.f32 %v510, %v717
        %v719 = vpop.f32.mrf.mxu0
        %720 = vmatprep.mubr.bf16.mxu0 0
        %721 = vmatmul.mubr.bf16.gmra.mxu0 %v626
        %v722 = vpop.f32.mrf.mxu0
        %v723 = vadd.f32 %v510, %v722
        %v724 = vpop.f32.mrf.mxu0
        %v725 = vpop.f32.mrf.mxu0
        %v726 = vadd.f32 %v510, %v725
        %v727 = vpop.f32.mrf.mxu0
        %728 = vmatprep.mubr.bf16.mxu0 0
        %729 = vmatmul.mubr.bf16.gmra.mxu0 %v629
        %v730 = vpop.f32.mrf.mxu0
        %v731 = vadd.f32 %v510, %v730
        %v732 = vpop.f32.mrf.mxu0
        %v733 = vpop.f32.mrf.mxu0
        %v734 = vadd.f32 %v510, %v733
        %v735 = vpop.f32.mrf.mxu0
        %736 = vmatprep.mubr.bf16.mxu0 0
        %737 = vmatmul.mubr.bf16.gmra.mxu0 %v632
        %v738 = vpop.f32.mrf.mxu0
        %v739 = vadd.f32 %v510, %v738
        %v740 = vpop.f32.mrf.mxu0
        %v741 = vpop.f32.mrf.mxu0
        %v742 = vadd.f32 %v510, %v741
        %v743 = vpop.f32.mrf.mxu0
        %744 = vmatprep.mubr.bf16.mxu0 0
        %745 = vmatmul.mubr.bf16.gmra.mxu0 %v635
        %v746 = vpop.f32.mrf.mxu0
        %v747 = vadd.f32 %v510, %v746
        %v748 = vpop.f32.mrf.mxu0
        %v749 = vpop.f32.mrf.mxu0
        %v750 = vadd.f32 %v510, %v749
        %v751 = vpop.f32.mrf.mxu0
        %752 = vmatprep.mubr.bf16.mxu0 0
        %753 = vmatmul.mubr.bf16.gmra.mxu0 %v638
        %v754 = vpop.f32.mrf.mxu0
        %v755 = vadd.f32 %v510, %v754
        %v756 = vpop.f32.mrf.mxu0
        %v757 = vpop.f32.mrf.mxu0
        %v758 = vadd.f32 %v510, %v757
        %v759 = vpop.f32.mrf.mxu0
        %760 = vmatprep.mubr.bf16.mxu0 0
        %761 = vmatmul.mubr.bf16.gmra.mxu0 %v641
        %v762 = vpop.f32.mrf.mxu0
        %v763 = vadd.f32 %v510, %v762
        %v764 = vpop.f32.mrf.mxu0
        %v765 = vpop.f32.mrf.mxu0
        %v766 = vadd.f32 %v510, %v765
        %v767 = vpop.f32.mrf.mxu0
        %768 = vmatprep.mubr.bf16.mxu0 0
        %769 = vmatmul.mubr.bf16.gmra.mxu0 %v644
        %v770 = vpop.f32.mrf.mxu0
        %v771 = vadd.f32 %v510, %v770
        %v772 = vpop.f32.mrf.mxu0
        %v773 = vpop.f32.mrf.mxu0
        %v774 = vadd.f32 %v510, %v773
        %v775 = vpop.f32.mrf.mxu0
        %776 = vmatprep.mubr.bf16.mxu0 0
        %777 = vmatmul.mubr.bf16.gmra.mxu0 %v647
        %v778 = vpop.f32.mrf.mxu0
        %v779 = vadd.f32 %v510, %v778
        %v780 = vpop.f32.mrf.mxu0
        %v781 = vpop.f32.mrf.mxu0
        %v782 = vadd.f32 %v510, %v781
        %v783 = vpop.f32.mrf.mxu0
        %784 = vmatprep.mubr.bf16.mxu0 0
        %785 = vmatmul.mubr.bf16.gmra.mxu0 %v650
        %v786 = vpop.f32.mrf.mxu0
        %v787 = vadd.f32 %v510, %v786
        %v788 = vpop.f32.mrf.mxu0
        %v789 = vpop.f32.mrf.mxu0
        %v790 = vadd.f32 %v510, %v789
        %v791 = vpop.f32.mrf.mxu0
        %792 = vmatprep.mubr.bf16.mxu0 0
        %793 = vmatmul.mubr.bf16.gmra.mxu0 %v653
        %v794 = vpop.f32.mrf.mxu0
        %v795 = vadd.f32 %v510, %v794
        %v796 = vpop.f32.mrf.mxu0
        %v797 = vpop.f32.mrf.mxu0
        %v798 = vadd.f32 %v510, %v797
        %v799 = vpop.f32.mrf.mxu0
        %800 = vmatprep.mubr.bf16.mxu0 0
        %801 = vmatmul.mubr.bf16.gmra.mxu0 %v656
        %v802 = vpop.f32.mrf.mxu0
        %v803 = vadd.f32 %v510, %v802
        %v804 = vpop.f32.mrf.mxu0
        %v805 = vpop.f32.mrf.mxu0
        %v806 = vadd.f32 %v510, %v805
        %v807 = vpop.f32.mrf.mxu0
        %808 = vmatprep.mubr.bf16.mxu0 0
        %809 = vmatmul.mubr.bf16.gmra.mxu0 %v659
        %v810 = vpop.f32.mrf.mxu0
        %v811 = vadd.f32 %v510, %v810
        %v812 = vpop.f32.mrf.mxu0
        %v813 = vpop.f32.mrf.mxu0
        %v814 = vadd.f32 %v510, %v813
        %v815 = vpop.f32.mrf.mxu0
        %816 = vmatprep.mubr.bf16.mxu0 0
        %817 = vmatmul.mubr.bf16.gmra.mxu0 %v662
        %v818 = vpop.f32.mrf.mxu0
        %v819 = vadd.f32 %v510, %v818
        %v820 = vpop.f32.mrf.mxu0
        %v821 = vpop.f32.mrf.mxu0
        %v822 = vadd.f32 %v510, %v821
        %v823 = vpop.f32.mrf.mxu0
        %824 = vdwg.mxu0
        %v825 = vmax.f32 %v699, 0.0
        %v826 = vmax.f32 %v702, 0.0
        %v827 = vmax.f32 %v707, 0.0
        %v828 = vmax.f32 %v710, 0.0
        %v829 = vmax.f32 %v715, 0.0
        %v830 = vmax.f32 %v718, 0.0
        %v831 = vmax.f32 %v723, 0.0
        %v832 = vmax.f32 %v726, 0.0
        %v833 = vmax.f32 %v731, 0.0
        %v834 = vmax.f32 %v734, 0.0
        %v835 = vmax.f32 %v739, 0.0
        %v836 = vmax.f32 %v742, 0.0
        %v837 = vmax.f32 %v747, 0.0
        %v838 = vmax.f32 %v750, 0.0
        %v839 = vmax.f32 %v755, 0.0
        %v840 = vmax.f32 %v758, 0.0
        %v841 = vmax.f32 %v763, 0.0
        %v842 = vmax.f32 %v766, 0.0
        %v843 = vmax.f32 %v771, 0.0
        %v844 = vmax.f32 %v774, 0.0
        %v845 = vmax.f32 %v779, 0.0
        %v846 = vmax.f32 %v782, 0.0
        %v847 = vmax.f32 %v787, 0.0
        %v848 = vmax.f32 %v790, 0.0
        %v849 = vmax.f32 %v795, 0.0
        %v850 = vmax.f32 %v798, 0.0
        %v851 = vmax.f32 %v803, 0.0
        %v852 = vmax.f32 %v806, 0.0
        %v853 = vmax.f32 %v811, 0.0
        %v854 = vmax.f32 %v814, 0.0
        %v855 = vmax.f32 %v819, 0.0
        %v856 = vmax.f32 %v822, 0.0
        %v857 = vpack.c.bf16 %v826, %v825
        %v858 = vpack.c.bf16 %v828, %v827
        %v859 = vpack.c.bf16 %v830, %v829
        %v860 = vpack.c.bf16 %v832, %v831
        %v861 = vpack.c.bf16 %v834, %v833
        %v862 = vpack.c.bf16 %v836, %v835
        %v863 = vpack.c.bf16 %v838, %v837
        %v864 = vpack.c.bf16 %v840, %v839
        %v865 = vpack.c.bf16 %v842, %v841
        %v866 = vpack.c.bf16 %v844, %v843
        %v867 = vpack.c.bf16 %v846, %v845
        %v868 = vpack.c.bf16 %v848, %v847
        %v869 = vpack.c.bf16 %v850, %v849
        %v870 = vpack.c.bf16 %v852, %v851
        %v871 = vpack.c.bf16 %v854, %v853
        %v872 = vpack.c.bf16 %v856, %v855
        %v873 = vlaneseq
        %v874 = vshrl.u32 %v873, 7
        %v875 = vsub.s32 0, %v874
        %v876 = vrot.slane %v467, %v875
        %v881 = vunpack.c.l.b16 %v438
        %v882 = vunpack.c.l.b16 %v439
        %v883 = vunpack.c.l.b16 %v440
        %v884 = vunpack.c.l.b16 %v441
        %v885 = vpack.c.b16 %v882, %v881
        %v886 = vpack.c.b16 %v884, %v883
        %vm889 = vcmask 261120
        %v891 = vsel %vm889, %v857, 0
        %v894 = vsel %vm889, %v858, 0
        %v897 = vsel %vm889, %v859, 0
        %v900 = vsel %vm889, %v860, 0
        %v903 = vsel %vm889, %v861, 0
        %v906 = vsel %vm889, %v862, 0
        %v909 = vsel %vm889, %v863, 0
        %v912 = vsel %vm889, %v864, 0
        %v915 = vsel %vm889, %v865, 0
        %v918 = vsel %vm889, %v866, 0
        %v921 = vsel %vm889, %v867, 0
        %v924 = vsel %vm889, %v868, 0
        %v927 = vsel %vm889, %v869, 0
        %v930 = vsel %vm889, %v870, 0
        %v933 = vsel %vm889, %v871, 0
        %v936 = vsel %vm889, %v872, 0
        %938 = vmatprep.subr.bf16.mxu0 0
        %939 = vmatpush1.bf16.msra.mxu0 0
        %940 = vmatprep.subr.bf16.mxu0 0
        %941 = vmatpush1.bf16.msra.mxu0 0
        %942 = vmatprep.subr.bf16.mxu0 0
        %943 = vmatpush1.bf16.msra.mxu0 0
        %944 = vmatprep.subr.bf16.mxu0 0
        %945 = vmatpush1.bf16.msra.mxu0 0
        %946 = vmatprep.subr.bf16.mxu0 0
        %947 = vmatpush1.bf16.msra.mxu0 0
        %948 = vmatprep.subr.bf16.mxu0 0
        %949 = vmatpush1.bf16.msra.mxu0 0
        %950 = vmatprep.subr.bf16.mxu0 0
        %951 = vmatpush1.bf16.msra.mxu0 %v886
        %952 = vmatprep.subr.bf16.mxu0 0
        %953 = vmatpush1.bf16.msra.mxu0 %v885
        %954 = vmatprep.subr.bf16.mxu0 0
        %955 = vmatpush2.bf16.msra.mxu0 0
        %956 = vmatprep.subr.bf16.mxu0 0
        %957 = vmatpush2.bf16.msra.mxu0 0
        %958 = vmatprep.subr.bf16.mxu0 0
        %959 = vmatpush2.bf16.msra.mxu0 0
        %960 = vmatprep.subr.bf16.mxu0 0
        %961 = vmatpush2.bf16.msra.mxu0 0
        %962 = vmatprep.subr.bf16.mxu0 0
        %963 = vmatpush2.bf16.msra.mxu0 0
        %964 = vmatprep.subr.bf16.mxu0 0
        %965 = vmatpush2.bf16.msra.mxu0 0
        %966 = vmatprep.subr.bf16.mxu0 0
        %967 = vmatpush2.bf16.msra.mxu0 0
        %968 = vmatprep.subr.bf16.mxu0 0
        %969 = vmatpush2.bf16.msra.mxu0 0
        %970 = vmatprep.mubr.bf16.mxu0 0
        %971 = vmatmul.mubr.bf16.gmra.mxu0 %v891
        %v972 = vpop.f32.mrf.mxu0
        %v973 = vadd.f32 %v876, %v972
        %v974 = vpop.f32.mrf.mxu0
        %v975 = vpop.f32.mrf.mxu0
        %v976 = vadd.f32 %v876, %v975
        %v977 = vpop.f32.mrf.mxu0
        %978 = vmatprep.mubr.bf16.mxu0 0
        %979 = vmatmul.mubr.bf16.gmra.mxu0 %v894
        %v980 = vpop.f32.mrf.mxu0
        %v981 = vadd.f32 %v876, %v980
        %v982 = vpop.f32.mrf.mxu0
        %v983 = vpop.f32.mrf.mxu0
        %v984 = vadd.f32 %v876, %v983
        %v985 = vpop.f32.mrf.mxu0
        %986 = vmatprep.mubr.bf16.mxu0 0
        %987 = vmatmul.mubr.bf16.gmra.mxu0 %v897
        %v988 = vpop.f32.mrf.mxu0
        %v989 = vadd.f32 %v876, %v988
        %v990 = vpop.f32.mrf.mxu0
        %v991 = vpop.f32.mrf.mxu0
        %v992 = vadd.f32 %v876, %v991
        %v993 = vpop.f32.mrf.mxu0
        %994 = vmatprep.mubr.bf16.mxu0 0
        %995 = vmatmul.mubr.bf16.gmra.mxu0 %v900
        %v996 = vpop.f32.mrf.mxu0
        %v997 = vadd.f32 %v876, %v996
        %v998 = vpop.f32.mrf.mxu0
        %v999 = vpop.f32.mrf.mxu0
        %v1000 = vadd.f32 %v876, %v999
        %v1001 = vpop.f32.mrf.mxu0
        %1002 = vmatprep.mubr.bf16.mxu0 0
        %1003 = vmatmul.mubr.bf16.gmra.mxu0 %v903
        %v1004 = vpop.f32.mrf.mxu0
        %v1005 = vadd.f32 %v876, %v1004
        %v1006 = vpop.f32.mrf.mxu0
        %v1007 = vpop.f32.mrf.mxu0
        %v1008 = vadd.f32 %v876, %v1007
        %v1009 = vpop.f32.mrf.mxu0
        %1010 = vmatprep.mubr.bf16.mxu0 0
        %1011 = vmatmul.mubr.bf16.gmra.mxu0 %v906
        %v1012 = vpop.f32.mrf.mxu0
        %v1013 = vadd.f32 %v876, %v1012
        %v1014 = vpop.f32.mrf.mxu0
        %v1015 = vpop.f32.mrf.mxu0
        %v1016 = vadd.f32 %v876, %v1015
        %v1017 = vpop.f32.mrf.mxu0
        %1018 = vmatprep.mubr.bf16.mxu0 0
        %1019 = vmatmul.mubr.bf16.gmra.mxu0 %v909
        %v1020 = vpop.f32.mrf.mxu0
        %v1021 = vadd.f32 %v876, %v1020
        %v1022 = vpop.f32.mrf.mxu0
        %v1023 = vpop.f32.mrf.mxu0
        %v1024 = vadd.f32 %v876, %v1023
        %v1025 = vpop.f32.mrf.mxu0
        %1026 = vmatprep.mubr.bf16.mxu0 0
        %1027 = vmatmul.mubr.bf16.gmra.mxu0 %v912
        %v1028 = vpop.f32.mrf.mxu0
        %v1029 = vadd.f32 %v876, %v1028
        %v1030 = vpop.f32.mrf.mxu0
        %v1031 = vpop.f32.mrf.mxu0
        %v1032 = vadd.f32 %v876, %v1031
        %v1033 = vpop.f32.mrf.mxu0
        %1034 = vmatprep.mubr.bf16.mxu0 0
        %1035 = vmatmul.mubr.bf16.gmra.mxu0 %v915
        %v1036 = vpop.f32.mrf.mxu0
        %v1037 = vadd.f32 %v876, %v1036
        %v1038 = vpop.f32.mrf.mxu0
        %v1039 = vpop.f32.mrf.mxu0
        %v1040 = vadd.f32 %v876, %v1039
        %v1041 = vpop.f32.mrf.mxu0
        %1042 = vmatprep.mubr.bf16.mxu0 0
        %1043 = vmatmul.mubr.bf16.gmra.mxu0 %v918
        %v1044 = vpop.f32.mrf.mxu0
        %v1045 = vadd.f32 %v876, %v1044
        %v1046 = vpop.f32.mrf.mxu0
        %v1047 = vpop.f32.mrf.mxu0
        %v1048 = vadd.f32 %v876, %v1047
        %v1049 = vpop.f32.mrf.mxu0
        %1050 = vmatprep.mubr.bf16.mxu0 0
        %1051 = vmatmul.mubr.bf16.gmra.mxu0 %v921
        %v1052 = vpop.f32.mrf.mxu0
        %v1053 = vadd.f32 %v876, %v1052
        %v1054 = vpop.f32.mrf.mxu0
        %v1055 = vpop.f32.mrf.mxu0
        %v1056 = vadd.f32 %v876, %v1055
        %v1057 = vpop.f32.mrf.mxu0
        %1058 = vmatprep.mubr.bf16.mxu0 0
        %1059 = vmatmul.mubr.bf16.gmra.mxu0 %v924
        %v1060 = vpop.f32.mrf.mxu0
        %v1061 = vadd.f32 %v876, %v1060
        %v1062 = vpop.f32.mrf.mxu0
        %v1063 = vpop.f32.mrf.mxu0
        %v1064 = vadd.f32 %v876, %v1063
        %v1065 = vpop.f32.mrf.mxu0
        %1066 = vmatprep.mubr.bf16.mxu0 0
        %1067 = vmatmul.mubr.bf16.gmra.mxu0 %v927
        %v1068 = vpop.f32.mrf.mxu0
        %v1069 = vadd.f32 %v876, %v1068
        %v1070 = vpop.f32.mrf.mxu0
        %v1071 = vpop.f32.mrf.mxu0
        %v1072 = vadd.f32 %v876, %v1071
        %v1073 = vpop.f32.mrf.mxu0
        %1074 = vmatprep.mubr.bf16.mxu0 0
        %1075 = vmatmul.mubr.bf16.gmra.mxu0 %v930
        %v1076 = vpop.f32.mrf.mxu0
        %v1077 = vadd.f32 %v876, %v1076
        %v1078 = vpop.f32.mrf.mxu0
        %v1079 = vpop.f32.mrf.mxu0
        %v1080 = vadd.f32 %v876, %v1079
        %v1081 = vpop.f32.mrf.mxu0
        %1082 = vmatprep.mubr.bf16.mxu0 0
        %1083 = vmatmul.mubr.bf16.gmra.mxu0 %v933
        %v1084 = vpop.f32.mrf.mxu0
        %v1085 = vadd.f32 %v876, %v1084
        %v1086 = vpop.f32.mrf.mxu0
        %v1087 = vpop.f32.mrf.mxu0
        %v1088 = vadd.f32 %v876, %v1087
        %v1089 = vpop.f32.mrf.mxu0
        %1090 = vmatprep.mubr.bf16.mxu0 0
        %1091 = vmatmul.mubr.bf16.gmra.mxu0 %v936
        %v1092 = vpop.f32.mrf.mxu0
        %v1093 = vadd.f32 %v876, %v1092
        %v1094 = vpop.f32.mrf.mxu0
        %v1095 = vpop.f32.mrf.mxu0
        %v1096 = vadd.f32 %v876, %v1095
        %v1097 = vpop.f32.mrf.mxu0
        %1098 = vdwg.mxu0
        %v1099 = vmax.f32 %v973, 0.0
        %v1100 = vmax.f32 %v976, 0.0
        %v1101 = vmax.f32 %v981, 0.0
        %v1102 = vmax.f32 %v984, 0.0
        %v1103 = vmax.f32 %v989, 0.0
        %v1104 = vmax.f32 %v992, 0.0
        %v1105 = vmax.f32 %v997, 0.0
        %v1106 = vmax.f32 %v1000, 0.0
        %v1107 = vmax.f32 %v1005, 0.0
        %v1108 = vmax.f32 %v1008, 0.0
        %v1109 = vmax.f32 %v1013, 0.0
        %v1110 = vmax.f32 %v1016, 0.0
        %v1111 = vmax.f32 %v1021, 0.0
        %v1112 = vmax.f32 %v1024, 0.0
        %v1113 = vmax.f32 %v1029, 0.0
        %v1114 = vmax.f32 %v1032, 0.0
        %v1115 = vmax.f32 %v1037, 0.0
        %v1116 = vmax.f32 %v1040, 0.0
        %v1117 = vmax.f32 %v1045, 0.0
        %v1118 = vmax.f32 %v1048, 0.0
        %v1119 = vmax.f32 %v1053, 0.0
        %v1120 = vmax.f32 %v1056, 0.0
        %v1121 = vmax.f32 %v1061, 0.0
        %v1122 = vmax.f32 %v1064, 0.0
        %v1123 = vmax.f32 %v1069, 0.0
        %v1124 = vmax.f32 %v1072, 0.0
        %v1125 = vmax.f32 %v1077, 0.0
        %v1126 = vmax.f32 %v1080, 0.0
        %v1127 = vmax.f32 %v1085, 0.0
        %v1128 = vmax.f32 %v1088, 0.0
        %v1129 = vmax.f32 %v1093, 0.0
        %v1130 = vmax.f32 %v1096, 0.0
        %v1131 = vpack.c.bf16 %v1100, %v1099
        %v1132 = vpack.c.bf16 %v1102, %v1101
        %v1133 = vpack.c.bf16 %v1104, %v1103
        %v1134 = vpack.c.bf16 %v1106, %v1105
        %v1135 = vpack.c.bf16 %v1108, %v1107
        %v1136 = vpack.c.bf16 %v1110, %v1109
        %v1137 = vpack.c.bf16 %v1112, %v1111
        %v1138 = vpack.c.bf16 %v1114, %v1113
        %v1139 = vpack.c.bf16 %v1116, %v1115
        %v1140 = vpack.c.bf16 %v1118, %v1117
        %v1141 = vpack.c.bf16 %v1120, %v1119
        %v1142 = vpack.c.bf16 %v1122, %v1121
        %v1143 = vpack.c.bf16 %v1124, %v1123
        %v1144 = vpack.c.bf16 %v1126, %v1125
        %v1145 = vpack.c.bf16 %v1128, %v1127
        %v1146 = vpack.c.bf16 %v1130, %v1129
        %v1147 = vlaneseq
        %v1148 = vshrl.u32 %v1147, 7
        %v1149 = vsub.s32 0, %v1148
        %v1150 = vrot.slane %v468, %v1149
        %v1153 = vunpack.c.l.b16 %v442
        %v1154 = vunpack.c.l.b16 %v443
        %v1155 = vpack.c.b16 %v1154, %v1153
        %vm1157 = vcmask 130048
        %v1159 = vsel %vm1157, %v1131, 0
        %v1162 = vsel %vm1157, %v1132, 0
        %v1165 = vsel %vm1157, %v1133, 0
        %v1168 = vsel %vm1157, %v1134, 0
        %v1171 = vsel %vm1157, %v1135, 0
        %v1174 = vsel %vm1157, %v1136, 0
        %v1177 = vsel %vm1157, %v1137, 0
        %v1180 = vsel %vm1157, %v1138, 0
        %v1183 = vsel %vm1157, %v1139, 0
        %v1186 = vsel %vm1157, %v1140, 0
        %v1189 = vsel %vm1157, %v1141, 0
        %v1192 = vsel %vm1157, %v1142, 0
        %v1195 = vsel %vm1157, %v1143, 0
        %v1198 = vsel %vm1157, %v1144, 0
        %v1201 = vsel %vm1157, %v1145, 0
        %v1204 = vsel %vm1157, %v1146, 0
        %1206 = vmatprep.subr.bf16.mxu0 0
        %1207 = vmatpush1.bf16.msra.mxu0 0
        %1208 = vmatprep.subr.bf16.mxu0 0
        %1209 = vmatpush1.bf16.msra.mxu0 0
        %1210 = vmatprep.subr.bf16.mxu0 0
        %1211 = vmatpush1.bf16.msra.mxu0 0
        %1212 = vmatprep.subr.bf16.mxu0 0
        %1213 = vmatpush1.bf16.msra.mxu0 0
        %1214 = vmatprep.subr.bf16.mxu0 0
        %1215 = vmatpush1.bf16.msra.mxu0 0
        %1216 = vmatprep.subr.bf16.mxu0 0
        %1217 = vmatpush1.bf16.msra.mxu0 0
        %1218 = vmatprep.subr.bf16.mxu0 0
        %1219 = vmatpush1.bf16.msra.mxu0 0
        %1220 = vmatprep.subr.bf16.mxu0 0
        %1221 = vmatpush1.bf16.msra.mxu0 %v1155
        %1222 = vmatprep.subr.bf16.mxu0 0
        %1223 = vmatpush2.bf16.msra.mxu0 0
        %1224 = vmatprep.subr.bf16.mxu0 0
        %1225 = vmatpush2.bf16.msra.mxu0 0
        %1226 = vmatprep.subr.bf16.mxu0 0
        %1227 = vmatpush2.bf16.msra.mxu0 0
        %1228 = vmatprep.subr.bf16.mxu0 0
        %1229 = vmatpush2.bf16.msra.mxu0 0
        %1230 = vmatprep.subr.bf16.mxu0 0
        %1231 = vmatpush2.bf16.msra.mxu0 0
        %1232 = vmatprep.subr.bf16.mxu0 0
        %1233 = vmatpush2.bf16.msra.mxu0 0
        %1234 = vmatprep.subr.bf16.mxu0 0
        %1235 = vmatpush2.bf16.msra.mxu0 0
        %1236 = vmatprep.subr.bf16.mxu0 0
        %1237 = vmatpush2.bf16.msra.mxu0 0
        %1238 = vmatprep.mubr.bf16.mxu0 0
        %1239 = vmatmul.mubr.bf16.gmra.mxu0 %v1159
        %v1240 = vpop.f32.mrf.mxu0
        %v1241 = vadd.f32 %v1150, %v1240
        %v1242 = vpop.f32.mrf.mxu0
        %v1243 = vpop.f32.mrf.mxu0
        %v1244 = vadd.f32 %v1150, %v1243
        %v1245 = vpop.f32.mrf.mxu0
        %1246 = vmatprep.mubr.bf16.mxu0 0
        %1247 = vmatmul.mubr.bf16.gmra.mxu0 %v1162
        %v1248 = vpop.f32.mrf.mxu0
        %v1249 = vadd.f32 %v1150, %v1248
        %v1250 = vpop.f32.mrf.mxu0
        %v1251 = vpop.f32.mrf.mxu0
        %v1252 = vadd.f32 %v1150, %v1251
        %v1253 = vpop.f32.mrf.mxu0
        %1254 = vmatprep.mubr.bf16.mxu0 0
        %1255 = vmatmul.mubr.bf16.gmra.mxu0 %v1165
        %v1256 = vpop.f32.mrf.mxu0
        %v1257 = vadd.f32 %v1150, %v1256
        %v1258 = vpop.f32.mrf.mxu0
        %v1259 = vpop.f32.mrf.mxu0
        %v1260 = vadd.f32 %v1150, %v1259
        %v1261 = vpop.f32.mrf.mxu0
        %1262 = vmatprep.mubr.bf16.mxu0 0
        %1263 = vmatmul.mubr.bf16.gmra.mxu0 %v1168
        %v1264 = vpop.f32.mrf.mxu0
        %v1265 = vadd.f32 %v1150, %v1264
        %v1266 = vpop.f32.mrf.mxu0
        %v1267 = vpop.f32.mrf.mxu0
        %v1268 = vadd.f32 %v1150, %v1267
        %v1269 = vpop.f32.mrf.mxu0
        %1270 = vmatprep.mubr.bf16.mxu0 0
        %1271 = vmatmul.mubr.bf16.gmra.mxu0 %v1171
        %v1272 = vpop.f32.mrf.mxu0
        %v1273 = vadd.f32 %v1150, %v1272
        %v1274 = vpop.f32.mrf.mxu0
        %v1275 = vpop.f32.mrf.mxu0
        %v1276 = vadd.f32 %v1150, %v1275
        %v1277 = vpop.f32.mrf.mxu0
        %1278 = vmatprep.mubr.bf16.mxu0 0
        %1279 = vmatmul.mubr.bf16.gmra.mxu0 %v1174
        %v1280 = vpop.f32.mrf.mxu0
        %v1281 = vadd.f32 %v1150, %v1280
        %v1282 = vpop.f32.mrf.mxu0
        %v1283 = vpop.f32.mrf.mxu0
        %v1284 = vadd.f32 %v1150, %v1283
        %v1285 = vpop.f32.mrf.mxu0
        %1286 = vmatprep.mubr.bf16.mxu0 0
        %1287 = vmatmul.mubr.bf16.gmra.mxu0 %v1177
        %v1288 = vpop.f32.mrf.mxu0
        %v1289 = vadd.f32 %v1150, %v1288
        %v1290 = vpop.f32.mrf.mxu0
        %v1291 = vpop.f32.mrf.mxu0
        %v1292 = vadd.f32 %v1150, %v1291
        %v1293 = vpop.f32.mrf.mxu0
        %1294 = vmatprep.mubr.bf16.mxu0 0
        %1295 = vmatmul.mubr.bf16.gmra.mxu0 %v1180
        %v1296 = vpop.f32.mrf.mxu0
        %v1297 = vadd.f32 %v1150, %v1296
        %v1298 = vpop.f32.mrf.mxu0
        %v1299 = vpop.f32.mrf.mxu0
        %v1300 = vadd.f32 %v1150, %v1299
        %v1301 = vpop.f32.mrf.mxu0
        %1302 = vmatprep.mubr.bf16.mxu0 0
        %1303 = vmatmul.mubr.bf16.gmra.mxu0 %v1183
        %v1304 = vpop.f32.mrf.mxu0
        %v1305 = vadd.f32 %v1150, %v1304
        %v1306 = vpop.f32.mrf.mxu0
        %v1307 = vpop.f32.mrf.mxu0
        %v1308 = vadd.f32 %v1150, %v1307
        %v1309 = vpop.f32.mrf.mxu0
        %1310 = vmatprep.mubr.bf16.mxu0 0
        %1311 = vmatmul.mubr.bf16.gmra.mxu0 %v1186
        %v1312 = vpop.f32.mrf.mxu0
        %v1313 = vadd.f32 %v1150, %v1312
        %v1314 = vpop.f32.mrf.mxu0
        %v1315 = vpop.f32.mrf.mxu0
        %v1316 = vadd.f32 %v1150, %v1315
        %v1317 = vpop.f32.mrf.mxu0
        %1318 = vmatprep.mubr.bf16.mxu0 0
        %1319 = vmatmul.mubr.bf16.gmra.mxu0 %v1189
        %v1320 = vpop.f32.mrf.mxu0
        %v1321 = vadd.f32 %v1150, %v1320
        %v1322 = vpop.f32.mrf.mxu0
        %v1323 = vpop.f32.mrf.mxu0
        %v1324 = vadd.f32 %v1150, %v1323
        %v1325 = vpop.f32.mrf.mxu0
        %1326 = vmatprep.mubr.bf16.mxu0 0
        %1327 = vmatmul.mubr.bf16.gmra.mxu0 %v1192
        %v1328 = vpop.f32.mrf.mxu0
        %v1329 = vadd.f32 %v1150, %v1328
        %v1330 = vpop.f32.mrf.mxu0
        %v1331 = vpop.f32.mrf.mxu0
        %v1332 = vadd.f32 %v1150, %v1331
        %v1333 = vpop.f32.mrf.mxu0
        %1334 = vmatprep.mubr.bf16.mxu0 0
        %1335 = vmatmul.mubr.bf16.gmra.mxu0 %v1195
        %v1336 = vpop.f32.mrf.mxu0
        %v1337 = vadd.f32 %v1150, %v1336
        %v1338 = vpop.f32.mrf.mxu0
        %v1339 = vpop.f32.mrf.mxu0
        %v1340 = vadd.f32 %v1150, %v1339
        %v1341 = vpop.f32.mrf.mxu0
        %1342 = vmatprep.mubr.bf16.mxu0 0
        %1343 = vmatmul.mubr.bf16.gmra.mxu0 %v1198
        %v1344 = vpop.f32.mrf.mxu0
        %v1345 = vadd.f32 %v1150, %v1344
        %v1346 = vpop.f32.mrf.mxu0
        %v1347 = vpop.f32.mrf.mxu0
        %v1348 = vadd.f32 %v1150, %v1347
        %v1349 = vpop.f32.mrf.mxu0
        %1350 = vmatprep.mubr.bf16.mxu0 0
        %1351 = vmatmul.mubr.bf16.gmra.mxu0 %v1201
        %v1352 = vpop.f32.mrf.mxu0
        %v1353 = vadd.f32 %v1150, %v1352
        %v1354 = vpop.f32.mrf.mxu0
        %v1355 = vpop.f32.mrf.mxu0
        %v1356 = vadd.f32 %v1150, %v1355
        %v1357 = vpop.f32.mrf.mxu0
        %1358 = vmatprep.mubr.bf16.mxu0 0
        %1359 = vmatmul.mubr.bf16.gmra.mxu0 %v1204
        %v1360 = vpop.f32.mrf.mxu0
        %v1361 = vadd.f32 %v1150, %v1360
        %v1362 = vpop.f32.mrf.mxu0
        %v1363 = vpop.f32.mrf.mxu0
        %v1364 = vadd.f32 %v1150, %v1363
        %v1365 = vpop.f32.mrf.mxu0
        %1366 = vdwg.mxu0
        %v1367 = vmax.f32 %v1241, 0.0
        %v1368 = vmax.f32 %v1244, 0.0
        %v1369 = vmax.f32 %v1249, 0.0
        %v1370 = vmax.f32 %v1252, 0.0
        %v1371 = vmax.f32 %v1257, 0.0
        %v1372 = vmax.f32 %v1260, 0.0
        %v1373 = vmax.f32 %v1265, 0.0
        %v1374 = vmax.f32 %v1268, 0.0
        %v1375 = vmax.f32 %v1273, 0.0
        %v1376 = vmax.f32 %v1276, 0.0
        %v1377 = vmax.f32 %v1281, 0.0
        %v1378 = vmax.f32 %v1284, 0.0
        %v1379 = vmax.f32 %v1289, 0.0
        %v1380 = vmax.f32 %v1292, 0.0
        %v1381 = vmax.f32 %v1297, 0.0
        %v1382 = vmax.f32 %v1300, 0.0
        %v1383 = vmax.f32 %v1305, 0.0
        %v1384 = vmax.f32 %v1308, 0.0
        %v1385 = vmax.f32 %v1313, 0.0
        %v1386 = vmax.f32 %v1316, 0.0
        %v1387 = vmax.f32 %v1321, 0.0
        %v1388 = vmax.f32 %v1324, 0.0
        %v1389 = vmax.f32 %v1329, 0.0
        %v1390 = vmax.f32 %v1332, 0.0
        %v1391 = vmax.f32 %v1337, 0.0
        %v1392 = vmax.f32 %v1340, 0.0
        %v1393 = vmax.f32 %v1345, 0.0
        %v1394 = vmax.f32 %v1348, 0.0
        %v1395 = vmax.f32 %v1353, 0.0
        %v1396 = vmax.f32 %v1356, 0.0
        %v1397 = vmax.f32 %v1361, 0.0
        %v1398 = vmax.f32 %v1364, 0.0
        %v1399 = vpack.c.bf16 %v1368, %v1367
        %v1400 = vpack.c.bf16 %v1370, %v1369
        %v1401 = vpack.c.bf16 %v1372, %v1371
        %v1402 = vpack.c.bf16 %v1374, %v1373
        %v1403 = vpack.c.bf16 %v1376, %v1375
        %v1404 = vpack.c.bf16 %v1378, %v1377
        %v1405 = vpack.c.bf16 %v1380, %v1379
        %v1406 = vpack.c.bf16 %v1382, %v1381
        %v1407 = vpack.c.bf16 %v1384, %v1383
        %v1408 = vpack.c.bf16 %v1386, %v1385
        %v1409 = vpack.c.bf16 %v1388, %v1387
        %v1410 = vpack.c.bf16 %v1390, %v1389
        %v1411 = vpack.c.bf16 %v1392, %v1391
        %v1412 = vpack.c.bf16 %v1394, %v1393
        %v1413 = vpack.c.bf16 %v1396, %v1395
        %v1414 = vpack.c.bf16 %v1398, %v1397
        %v1415 = vlaneseq
        %v1416 = vshrl.u32 %v1415, 7
        %v1417 = vsub.s32 0, %v1416
        %v1418 = vrot.slane %v469, %v1417
        %v1421 = vunpack.c.l.b16 %v444
        %v1422 = vunpack.c.l.b16 %v445
        %v1423 = vpack.c.b16 %v1422, %v1421
        %v1426 = vsel %vm1157, %v1399, 0
        %v1429 = vsel %vm1157, %v1400, 0
        %v1432 = vsel %vm1157, %v1401, 0
        %v1435 = vsel %vm1157, %v1402, 0
        %v1438 = vsel %vm1157, %v1403, 0
        %v1441 = vsel %vm1157, %v1404, 0
        %v1444 = vsel %vm1157, %v1405, 0
        %v1447 = vsel %vm1157, %v1406, 0
        %v1450 = vsel %vm1157, %v1407, 0
        %v1453 = vsel %vm1157, %v1408, 0
        %v1456 = vsel %vm1157, %v1409, 0
        %v1459 = vsel %vm1157, %v1410, 0
        %v1462 = vsel %vm1157, %v1411, 0
        %v1465 = vsel %vm1157, %v1412, 0
        %v1468 = vsel %vm1157, %v1413, 0
        %v1471 = vsel %vm1157, %v1414, 0
        %1473 = vmatprep.subr.bf16.mxu0 0
        %1474 = vmatpush1.bf16.msra.mxu0 0
        %1475 = vmatprep.subr.bf16.mxu0 0
        %1476 = vmatpush1.bf16.msra.mxu0 0
        %1477 = vmatprep.subr.bf16.mxu0 0
        %1478 = vmatpush1.bf16.msra.mxu0 0
        %1479 = vmatprep.subr.bf16.mxu0 0
        %1480 = vmatpush1.bf16.msra.mxu0 0
        %1481 = vmatprep.subr.bf16.mxu0 0
        %1482 = vmatpush1.bf16.msra.mxu0 0
        %1483 = vmatprep.subr.bf16.mxu0 0
        %1484 = vmatpush1.bf16.msra.mxu0 0
        %1485 = vmatprep.subr.bf16.mxu0 0
        %1486 = vmatpush1.bf16.msra.mxu0 0
        %1487 = vmatprep.subr.bf16.mxu0 0
        %1488 = vmatpush1.bf16.msra.mxu0 %v1423
        %1489 = vmatprep.subr.bf16.mxu0 0
        %1490 = vmatpush2.bf16.msra.mxu0 0
        %1491 = vmatprep.subr.bf16.mxu0 0
        %1492 = vmatpush2.bf16.msra.mxu0 0
        %1493 = vmatprep.subr.bf16.mxu0 0
        %1494 = vmatpush2.bf16.msra.mxu0 0
        %1495 = vmatprep.subr.bf16.mxu0 0
        %1496 = vmatpush2.bf16.msra.mxu0 0
        %1497 = vmatprep.subr.bf16.mxu0 0
        %1498 = vmatpush2.bf16.msra.mxu0 0
        %1499 = vmatprep.subr.bf16.mxu0 0
        %1500 = vmatpush2.bf16.msra.mxu0 0
        %1501 = vmatprep.subr.bf16.mxu0 0
        %1502 = vmatpush2.bf16.msra.mxu0 0
        %1503 = vmatprep.subr.bf16.mxu0 0
        %1504 = vmatpush2.bf16.msra.mxu0 0
        %1505 = vmatprep.mubr.bf16.mxu0 0
        %1506 = vmatmul.mubr.bf16.gmra.mxu0 %v1426
        %v1507 = vpop.f32.mrf.mxu0
        %v1508 = vadd.f32 %v1418, %v1507
        %v1509 = vpop.f32.mrf.mxu0
        %v1510 = vpop.f32.mrf.mxu0
        %v1511 = vadd.f32 %v1418, %v1510
        %v1512 = vpop.f32.mrf.mxu0
        %1513 = vmatprep.mubr.bf16.mxu0 0
        %1514 = vmatmul.mubr.bf16.gmra.mxu0 %v1429
        %v1515 = vpop.f32.mrf.mxu0
        %v1516 = vadd.f32 %v1418, %v1515
        %v1517 = vpop.f32.mrf.mxu0
        %v1518 = vpop.f32.mrf.mxu0
        %v1519 = vadd.f32 %v1418, %v1518
        %v1520 = vpop.f32.mrf.mxu0
        %1521 = vmatprep.mubr.bf16.mxu0 0
        %1522 = vmatmul.mubr.bf16.gmra.mxu0 %v1432
        %v1523 = vpop.f32.mrf.mxu0
        %v1524 = vadd.f32 %v1418, %v1523
        %v1525 = vpop.f32.mrf.mxu0
        %v1526 = vpop.f32.mrf.mxu0
        %v1527 = vadd.f32 %v1418, %v1526
        %v1528 = vpop.f32.mrf.mxu0
        %1529 = vmatprep.mubr.bf16.mxu0 0
        %1530 = vmatmul.mubr.bf16.gmra.mxu0 %v1435
        %v1531 = vpop.f32.mrf.mxu0
        %v1532 = vadd.f32 %v1418, %v1531
        %v1533 = vpop.f32.mrf.mxu0
        %v1534 = vpop.f32.mrf.mxu0
        %v1535 = vadd.f32 %v1418, %v1534
        %v1536 = vpop.f32.mrf.mxu0
        %1537 = vmatprep.mubr.bf16.mxu0 0
        %1538 = vmatmul.mubr.bf16.gmra.mxu0 %v1438
        %v1539 = vpop.f32.mrf.mxu0
        %v1540 = vadd.f32 %v1418, %v1539
        %v1541 = vpop.f32.mrf.mxu0
        %v1542 = vpop.f32.mrf.mxu0
        %v1543 = vadd.f32 %v1418, %v1542
        %v1544 = vpop.f32.mrf.mxu0
        %1545 = vmatprep.mubr.bf16.mxu0 0
        %1546 = vmatmul.mubr.bf16.gmra.mxu0 %v1441
        %v1547 = vpop.f32.mrf.mxu0
        %v1548 = vadd.f32 %v1418, %v1547
        %v1549 = vpop.f32.mrf.mxu0
        %v1550 = vpop.f32.mrf.mxu0
        %v1551 = vadd.f32 %v1418, %v1550
        %v1552 = vpop.f32.mrf.mxu0
        %1553 = vmatprep.mubr.bf16.mxu0 0
        %1554 = vmatmul.mubr.bf16.gmra.mxu0 %v1444
        %v1555 = vpop.f32.mrf.mxu0
        %v1556 = vadd.f32 %v1418, %v1555
        %v1557 = vpop.f32.mrf.mxu0
        %v1558 = vpop.f32.mrf.mxu0
        %v1559 = vadd.f32 %v1418, %v1558
        %v1560 = vpop.f32.mrf.mxu0
        %1561 = vmatprep.mubr.bf16.mxu0 0
        %1562 = vmatmul.mubr.bf16.gmra.mxu0 %v1447
        %v1563 = vpop.f32.mrf.mxu0
        %v1564 = vadd.f32 %v1418, %v1563
        %v1565 = vpop.f32.mrf.mxu0
        %v1566 = vpop.f32.mrf.mxu0
        %v1567 = vadd.f32 %v1418, %v1566
        %v1568 = vpop.f32.mrf.mxu0
        %1569 = vmatprep.mubr.bf16.mxu0 0
        %1570 = vmatmul.mubr.bf16.gmra.mxu0 %v1450
        %v1571 = vpop.f32.mrf.mxu0
        %v1572 = vadd.f32 %v1418, %v1571
        %v1573 = vpop.f32.mrf.mxu0
        %v1574 = vpop.f32.mrf.mxu0
        %v1575 = vadd.f32 %v1418, %v1574
        %v1576 = vpop.f32.mrf.mxu0
        %1577 = vmatprep.mubr.bf16.mxu0 0
        %1578 = vmatmul.mubr.bf16.gmra.mxu0 %v1453
        %v1579 = vpop.f32.mrf.mxu0
        %v1580 = vadd.f32 %v1418, %v1579
        %v1581 = vpop.f32.mrf.mxu0
        %v1582 = vpop.f32.mrf.mxu0
        %v1583 = vadd.f32 %v1418, %v1582
        %v1584 = vpop.f32.mrf.mxu0
        %1585 = vmatprep.mubr.bf16.mxu0 0
        %1586 = vmatmul.mubr.bf16.gmra.mxu0 %v1456
        %v1587 = vpop.f32.mrf.mxu0
        %v1588 = vadd.f32 %v1418, %v1587
        %v1589 = vpop.f32.mrf.mxu0
        %v1590 = vpop.f32.mrf.mxu0
        %v1591 = vadd.f32 %v1418, %v1590
        %v1592 = vpop.f32.mrf.mxu0
        %1593 = vmatprep.mubr.bf16.mxu0 0
        %1594 = vmatmul.mubr.bf16.gmra.mxu0 %v1459
        %v1595 = vpop.f32.mrf.mxu0
        %v1596 = vadd.f32 %v1418, %v1595
        %v1597 = vpop.f32.mrf.mxu0
        %v1598 = vpop.f32.mrf.mxu0
        %v1599 = vadd.f32 %v1418, %v1598
        %v1600 = vpop.f32.mrf.mxu0
        %1601 = vmatprep.mubr.bf16.mxu0 0
        %1602 = vmatmul.mubr.bf16.gmra.mxu0 %v1462
        %v1603 = vpop.f32.mrf.mxu0
        %v1604 = vadd.f32 %v1418, %v1603
        %v1605 = vpop.f32.mrf.mxu0
        %v1606 = vpop.f32.mrf.mxu0
        %v1607 = vadd.f32 %v1418, %v1606
        %v1608 = vpop.f32.mrf.mxu0
        %1609 = vmatprep.mubr.bf16.mxu0 0
        %1610 = vmatmul.mubr.bf16.gmra.mxu0 %v1465
        %v1611 = vpop.f32.mrf.mxu0
        %v1612 = vadd.f32 %v1418, %v1611
        %v1613 = vpop.f32.mrf.mxu0
        %v1614 = vpop.f32.mrf.mxu0
        %v1615 = vadd.f32 %v1418, %v1614
        %v1616 = vpop.f32.mrf.mxu0
        %1617 = vmatprep.mubr.bf16.mxu0 0
        %1618 = vmatmul.mubr.bf16.gmra.mxu0 %v1468
        %v1619 = vpop.f32.mrf.mxu0
        %v1620 = vadd.f32 %v1418, %v1619
        %v1621 = vpop.f32.mrf.mxu0
        %v1622 = vpop.f32.mrf.mxu0
        %v1623 = vadd.f32 %v1418, %v1622
        %v1624 = vpop.f32.mrf.mxu0
        %1625 = vmatprep.mubr.bf16.mxu0 0
        %1626 = vmatmul.mubr.bf16.gmra.mxu0 %v1471
        %v1627 = vpop.f32.mrf.mxu0
        %v1628 = vadd.f32 %v1418, %v1627
        %v1629 = vpop.f32.mrf.mxu0
        %v1630 = vpop.f32.mrf.mxu0
        %v1631 = vadd.f32 %v1418, %v1630
        %v1632 = vpop.f32.mrf.mxu0
        %1633 = vdwg.mxu0
        %v1634 = vmax.f32 %v1508, 0.0
        %v1635 = vmax.f32 %v1511, 0.0
        %v1636 = vmax.f32 %v1516, 0.0
        %v1637 = vmax.f32 %v1519, 0.0
        %v1638 = vmax.f32 %v1524, 0.0
        %v1639 = vmax.f32 %v1527, 0.0
        %v1640 = vmax.f32 %v1532, 0.0
        %v1641 = vmax.f32 %v1535, 0.0
        %v1642 = vmax.f32 %v1540, 0.0
        %v1643 = vmax.f32 %v1543, 0.0
        %v1644 = vmax.f32 %v1548, 0.0
        %v1645 = vmax.f32 %v1551, 0.0
        %v1646 = vmax.f32 %v1556, 0.0
        %v1647 = vmax.f32 %v1559, 0.0
        %v1648 = vmax.f32 %v1564, 0.0
        %v1649 = vmax.f32 %v1567, 0.0
        %v1650 = vmax.f32 %v1572, 0.0
        %v1651 = vmax.f32 %v1575, 0.0
        %v1652 = vmax.f32 %v1580, 0.0
        %v1653 = vmax.f32 %v1583, 0.0
        %v1654 = vmax.f32 %v1588, 0.0
        %v1655 = vmax.f32 %v1591, 0.0
        %v1656 = vmax.f32 %v1596, 0.0
        %v1657 = vmax.f32 %v1599, 0.0
        %v1658 = vmax.f32 %v1604, 0.0
        %v1659 = vmax.f32 %v1607, 0.0
        %v1660 = vmax.f32 %v1612, 0.0
        %v1661 = vmax.f32 %v1615, 0.0
        %v1662 = vmax.f32 %v1620, 0.0
        %v1663 = vmax.f32 %v1623, 0.0
        %v1664 = vmax.f32 %v1628, 0.0
        %v1665 = vmax.f32 %v1631, 0.0
        %v1666 = vpack.c.bf16 %v1635, %v1634
        %v1667 = vpack.c.bf16 %v1637, %v1636
        %v1668 = vpack.c.bf16 %v1639, %v1638
        %v1669 = vpack.c.bf16 %v1641, %v1640
        %v1670 = vpack.c.bf16 %v1643, %v1642
        %v1671 = vpack.c.bf16 %v1645, %v1644
        %v1672 = vpack.c.bf16 %v1647, %v1646
        %v1673 = vpack.c.bf16 %v1649, %v1648
        %v1674 = vpack.c.bf16 %v1651, %v1650
        %v1675 = vpack.c.bf16 %v1653, %v1652
        %v1676 = vpack.c.bf16 %v1655, %v1654
        %v1677 = vpack.c.bf16 %v1657, %v1656
        %v1678 = vpack.c.bf16 %v1659, %v1658
        %v1679 = vpack.c.bf16 %v1661, %v1660
        %v1680 = vpack.c.bf16 %v1663, %v1662
        %v1681 = vpack.c.bf16 %v1665, %v1664
        %v1682 = vlaneseq
        %v1683 = vshrl.u32 %v1682, 7
        %v1684 = vsub.s32 0, %v1683
        %v1685 = vrot.slane %v470, %v1684
        %v1690 = vunpack.c.l.b16 %v446
        %v1691 = vunpack.c.l.b16 %v447
        %v1692 = vunpack.c.l.b16 %v448
        %v1693 = vunpack.c.l.b16 %v449
        %v1694 = vpack.c.b16 %v1691, %v1690
        %v1695 = vpack.c.b16 %v1693, %v1692
        %v1699 = vsel %vm889, %v1666, 0
        %v1702 = vsel %vm889, %v1667, 0
        %v1705 = vsel %vm889, %v1668, 0
        %v1708 = vsel %vm889, %v1669, 0
        %v1711 = vsel %vm889, %v1670, 0
        %v1714 = vsel %vm889, %v1671, 0
        %v1717 = vsel %vm889, %v1672, 0
        %v1720 = vsel %vm889, %v1673, 0
        %v1723 = vsel %vm889, %v1674, 0
        %v1726 = vsel %vm889, %v1675, 0
        %v1729 = vsel %vm889, %v1676, 0
        %v1732 = vsel %vm889, %v1677, 0
        %v1735 = vsel %vm889, %v1678, 0
        %v1738 = vsel %vm889, %v1679, 0
        %v1741 = vsel %vm889, %v1680, 0
        %v1744 = vsel %vm889, %v1681, 0
        %1746 = vmatprep.subr.bf16.mxu0 0
        %1747 = vmatpush1.bf16.msra.mxu0 0
        %1748 = vmatprep.subr.bf16.mxu0 0
        %1749 = vmatpush1.bf16.msra.mxu0 0
        %1750 = vmatprep.subr.bf16.mxu0 0
        %1751 = vmatpush1.bf16.msra.mxu0 0
        %1752 = vmatprep.subr.bf16.mxu0 0
        %1753 = vmatpush1.bf16.msra.mxu0 0
        %1754 = vmatprep.subr.bf16.mxu0 0
        %1755 = vmatpush1.bf16.msra.mxu0 0
        %1756 = vmatprep.subr.bf16.mxu0 0
        %1757 = vmatpush1.bf16.msra.mxu0 0
        %1758 = vmatprep.subr.bf16.mxu0 0
        %1759 = vmatpush1.bf16.msra.mxu0 %v1695
        %1760 = vmatprep.subr.bf16.mxu0 0
        %1761 = vmatpush1.bf16.msra.mxu0 %v1694
        %1762 = vmatprep.subr.bf16.mxu0 0
        %1763 = vmatpush2.bf16.msra.mxu0 0
        %1764 = vmatprep.subr.bf16.mxu0 0
        %1765 = vmatpush2.bf16.msra.mxu0 0
        %1766 = vmatprep.subr.bf16.mxu0 0
        %1767 = vmatpush2.bf16.msra.mxu0 0
        %1768 = vmatprep.subr.bf16.mxu0 0
        %1769 = vmatpush2.bf16.msra.mxu0 0
        %1770 = vmatprep.subr.bf16.mxu0 0
        %1771 = vmatpush2.bf16.msra.mxu0 0
        %1772 = vmatprep.subr.bf16.mxu0 0
        %1773 = vmatpush2.bf16.msra.mxu0 0
        %1774 = vmatprep.subr.bf16.mxu0 0
        %1775 = vmatpush2.bf16.msra.mxu0 0
        %1776 = vmatprep.subr.bf16.mxu0 0
        %1777 = vmatpush2.bf16.msra.mxu0 0
        %1778 = vmatprep.mubr.bf16.mxu0 0
        %1779 = vmatmul.mubr.bf16.gmra.mxu0 %v1699
        %v1780 = vpop.f32.mrf.mxu0
        %v1781 = vadd.f32 %v1685, %v1780
        %v1782 = vpop.f32.mrf.mxu0
        %v1783 = vpop.f32.mrf.mxu0
        %v1784 = vadd.f32 %v1685, %v1783
        %v1785 = vpop.f32.mrf.mxu0
        %1786 = vmatprep.mubr.bf16.mxu0 0
        %1787 = vmatmul.mubr.bf16.gmra.mxu0 %v1702
        %v1788 = vpop.f32.mrf.mxu0
        %v1789 = vadd.f32 %v1685, %v1788
        %v1790 = vpop.f32.mrf.mxu0
        %v1791 = vpop.f32.mrf.mxu0
        %v1792 = vadd.f32 %v1685, %v1791
        %v1793 = vpop.f32.mrf.mxu0
        %1794 = vmatprep.mubr.bf16.mxu0 0
        %1795 = vmatmul.mubr.bf16.gmra.mxu0 %v1705
        %v1796 = vpop.f32.mrf.mxu0
        %v1797 = vadd.f32 %v1685, %v1796
        %v1798 = vpop.f32.mrf.mxu0
        %v1799 = vpop.f32.mrf.mxu0
        %v1800 = vadd.f32 %v1685, %v1799
        %v1801 = vpop.f32.mrf.mxu0
        %1802 = vmatprep.mubr.bf16.mxu0 0
        %1803 = vmatmul.mubr.bf16.gmra.mxu0 %v1708
        %v1804 = vpop.f32.mrf.mxu0
        %v1805 = vadd.f32 %v1685, %v1804
        %v1806 = vpop.f32.mrf.mxu0
        %v1807 = vpop.f32.mrf.mxu0
        %v1808 = vadd.f32 %v1685, %v1807
        %v1809 = vpop.f32.mrf.mxu0
        %1810 = vmatprep.mubr.bf16.mxu0 0
        %1811 = vmatmul.mubr.bf16.gmra.mxu0 %v1711
        %v1812 = vpop.f32.mrf.mxu0
        %v1813 = vadd.f32 %v1685, %v1812
        %v1814 = vpop.f32.mrf.mxu0
        %v1815 = vpop.f32.mrf.mxu0
        %v1816 = vadd.f32 %v1685, %v1815
        %v1817 = vpop.f32.mrf.mxu0
        %1818 = vmatprep.mubr.bf16.mxu0 0
        %1819 = vmatmul.mubr.bf16.gmra.mxu0 %v1714
        %v1820 = vpop.f32.mrf.mxu0
        %v1821 = vadd.f32 %v1685, %v1820
        %v1822 = vpop.f32.mrf.mxu0
        %v1823 = vpop.f32.mrf.mxu0
        %v1824 = vadd.f32 %v1685, %v1823
        %v1825 = vpop.f32.mrf.mxu0
        %1826 = vmatprep.mubr.bf16.mxu0 0
        %1827 = vmatmul.mubr.bf16.gmra.mxu0 %v1717
        %v1828 = vpop.f32.mrf.mxu0
        %v1829 = vadd.f32 %v1685, %v1828
        %v1830 = vpop.f32.mrf.mxu0
        %v1831 = vpop.f32.mrf.mxu0
        %v1832 = vadd.f32 %v1685, %v1831
        %v1833 = vpop.f32.mrf.mxu0
        %1834 = vmatprep.mubr.bf16.mxu0 0
        %1835 = vmatmul.mubr.bf16.gmra.mxu0 %v1720
        %v1836 = vpop.f32.mrf.mxu0
        %v1837 = vadd.f32 %v1685, %v1836
        %v1838 = vpop.f32.mrf.mxu0
        %v1839 = vpop.f32.mrf.mxu0
        %v1840 = vadd.f32 %v1685, %v1839
        %v1841 = vpop.f32.mrf.mxu0
        %1842 = vmatprep.mubr.bf16.mxu0 0
        %1843 = vmatmul.mubr.bf16.gmra.mxu0 %v1723
        %v1844 = vpop.f32.mrf.mxu0
        %v1845 = vadd.f32 %v1685, %v1844
        %v1846 = vpop.f32.mrf.mxu0
        %v1847 = vpop.f32.mrf.mxu0
        %v1848 = vadd.f32 %v1685, %v1847
        %v1849 = vpop.f32.mrf.mxu0
        %1850 = vmatprep.mubr.bf16.mxu0 0
        %1851 = vmatmul.mubr.bf16.gmra.mxu0 %v1726
        %v1852 = vpop.f32.mrf.mxu0
        %v1853 = vadd.f32 %v1685, %v1852
        %v1854 = vpop.f32.mrf.mxu0
        %v1855 = vpop.f32.mrf.mxu0
        %v1856 = vadd.f32 %v1685, %v1855
        %v1857 = vpop.f32.mrf.mxu0
        %1858 = vmatprep.mubr.bf16.mxu0 0
        %1859 = vmatmul.mubr.bf16.gmra.mxu0 %v1729
        %v1860 = vpop.f32.mrf.mxu0
        %v1861 = vadd.f32 %v1685, %v1860
        %v1862 = vpop.f32.mrf.mxu0
        %v1863 = vpop.f32.mrf.mxu0
        %v1864 = vadd.f32 %v1685, %v1863
        %v1865 = vpop.f32.mrf.mxu0
        %1866 = vmatprep.mubr.bf16.mxu0 0
        %1867 = vmatmul.mubr.bf16.gmra.mxu0 %v1732
        %v1868 = vpop.f32.mrf.mxu0
        %v1869 = vadd.f32 %v1685, %v1868
        %v1870 = vpop.f32.mrf.mxu0
        %v1871 = vpop.f32.mrf.mxu0
        %v1872 = vadd.f32 %v1685, %v1871
        %v1873 = vpop.f32.mrf.mxu0
        %1874 = vmatprep.mubr.bf16.mxu0 0
        %1875 = vmatmul.mubr.bf16.gmra.mxu0 %v1735
        %v1876 = vpop.f32.mrf.mxu0
        %v1877 = vadd.f32 %v1685, %v1876
        %v1878 = vpop.f32.mrf.mxu0
        %v1879 = vpop.f32.mrf.mxu0
        %v1880 = vadd.f32 %v1685, %v1879
        %v1881 = vpop.f32.mrf.mxu0
        %1882 = vmatprep.mubr.bf16.mxu0 0
        %1883 = vmatmul.mubr.bf16.gmra.mxu0 %v1738
        %v1884 = vpop.f32.mrf.mxu0
        %v1885 = vadd.f32 %v1685, %v1884
        %v1886 = vpop.f32.mrf.mxu0
        %v1887 = vpop.f32.mrf.mxu0
        %v1888 = vadd.f32 %v1685, %v1887
        %v1889 = vpop.f32.mrf.mxu0
        %1890 = vmatprep.mubr.bf16.mxu0 0
        %1891 = vmatmul.mubr.bf16.gmra.mxu0 %v1741
        %v1892 = vpop.f32.mrf.mxu0
        %v1893 = vadd.f32 %v1685, %v1892
        %v1894 = vpop.f32.mrf.mxu0
        %v1895 = vpop.f32.mrf.mxu0
        %v1896 = vadd.f32 %v1685, %v1895
        %v1897 = vpop.f32.mrf.mxu0
        %1898 = vmatprep.mubr.bf16.mxu0 0
        %1899 = vmatmul.mubr.bf16.gmra.mxu0 %v1744
        %v1900 = vpop.f32.mrf.mxu0
        %v1901 = vadd.f32 %v1685, %v1900
        %v1902 = vpop.f32.mrf.mxu0
        %v1903 = vpop.f32.mrf.mxu0
        %v1904 = vadd.f32 %v1685, %v1903
        %v1905 = vpop.f32.mrf.mxu0
        %1906 = vdwg.mxu0
        %v1907 = vmax.f32 %v1781, 0.0
        %v1908 = vmax.f32 %v1784, 0.0
        %v1909 = vmax.f32 %v1789, 0.0
        %v1910 = vmax.f32 %v1792, 0.0
        %v1911 = vmax.f32 %v1797, 0.0
        %v1912 = vmax.f32 %v1800, 0.0
        %v1913 = vmax.f32 %v1805, 0.0
        %v1914 = vmax.f32 %v1808, 0.0
        %v1915 = vmax.f32 %v1813, 0.0
        %v1916 = vmax.f32 %v1816, 0.0
        %v1917 = vmax.f32 %v1821, 0.0
        %v1918 = vmax.f32 %v1824, 0.0
        %v1919 = vmax.f32 %v1829, 0.0
        %v1920 = vmax.f32 %v1832, 0.0
        %v1921 = vmax.f32 %v1837, 0.0
        %v1922 = vmax.f32 %v1840, 0.0
        %v1923 = vmax.f32 %v1845, 0.0
        %v1924 = vmax.f32 %v1848, 0.0
        %v1925 = vmax.f32 %v1853, 0.0
        %v1926 = vmax.f32 %v1856, 0.0
        %v1927 = vmax.f32 %v1861, 0.0
        %v1928 = vmax.f32 %v1864, 0.0
        %v1929 = vmax.f32 %v1869, 0.0
        %v1930 = vmax.f32 %v1872, 0.0
        %v1931 = vmax.f32 %v1877, 0.0
        %v1932 = vmax.f32 %v1880, 0.0
        %v1933 = vmax.f32 %v1885, 0.0
        %v1934 = vmax.f32 %v1888, 0.0
        %v1935 = vmax.f32 %v1893, 0.0
        %v1936 = vmax.f32 %v1896, 0.0
        %v1937 = vmax.f32 %v1901, 0.0
        %v1938 = vmax.f32 %v1904, 0.0
        %v1939 = vpack.c.bf16 %v1908, %v1907
        %v1940 = vpack.c.bf16 %v1910, %v1909
        %v1941 = vpack.c.bf16 %v1912, %v1911
        %v1942 = vpack.c.bf16 %v1914, %v1913
        %v1943 = vpack.c.bf16 %v1916, %v1915
        %v1944 = vpack.c.bf16 %v1918, %v1917
        %v1945 = vpack.c.bf16 %v1920, %v1919
        %v1946 = vpack.c.bf16 %v1922, %v1921
        %v1947 = vpack.c.bf16 %v1924, %v1923
        %v1948 = vpack.c.bf16 %v1926, %v1925
        %v1949 = vpack.c.bf16 %v1928, %v1927
        %v1950 = vpack.c.bf16 %v1930, %v1929
        %v1951 = vpack.c.bf16 %v1932, %v1931
        %v1952 = vpack.c.bf16 %v1934, %v1933
        %v1953 = vpack.c.bf16 %v1936, %v1935
        %v1954 = vpack.c.bf16 %v1938, %v1937
        %v1955 = vlaneseq
        %v1956 = vshrl.u32 %v1955, 7
        %v1957 = vsub.s32 0, %v1956
        %v1958 = vrot.slane %v471, %v1957
        %v1967 = vunpack.c.l.b16 %v450
        %v1968 = vunpack.c.l.b16 %v451
        %v1969 = vunpack.c.l.b16 %v452
        %v1970 = vunpack.c.l.b16 %v453
        %v1971 = vunpack.c.l.b16 %v454
        %v1972 = vunpack.c.l.b16 %v455
        %v1973 = vunpack.c.l.b16 %v456
        %v1974 = vunpack.c.l.b16 %v457
        %v1975 = vpack.c.b16 %v1968, %v1967
        %v1976 = vpack.c.b16 %v1970, %v1969
        %v1977 = vpack.c.b16 %v1972, %v1971
        %v1978 = vpack.c.b16 %v1974, %v1973
        %v1984 = vsel %vm615, %v1939, 0
        %v1987 = vsel %vm615, %v1940, 0
        %v1990 = vsel %vm615, %v1941, 0
        %v1993 = vsel %vm615, %v1942, 0
        %v1996 = vsel %vm615, %v1943, 0
        %v1999 = vsel %vm615, %v1944, 0
        %v2002 = vsel %vm615, %v1945, 0
        %v2005 = vsel %vm615, %v1946, 0
        %v2008 = vsel %vm615, %v1947, 0
        %v2011 = vsel %vm615, %v1948, 0
        %v2014 = vsel %vm615, %v1949, 0
        %v2017 = vsel %vm615, %v1950, 0
        %v2020 = vsel %vm615, %v1951, 0
        %v2023 = vsel %vm615, %v1952, 0
        %v2026 = vsel %vm615, %v1953, 0
        %v2029 = vsel %vm615, %v1954, 0
        %2031 = vmatprep.subr.bf16.mxu0 0
        %2032 = vmatpush1.bf16.msra.mxu0 0
        %2033 = vmatprep.subr.bf16.mxu0 0
        %2034 = vmatpush1.bf16.msra.mxu0 0
        %2035 = vmatprep.subr.bf16.mxu0 0
        %2036 = vmatpush1.bf16.msra.mxu0 0
        %2037 = vmatprep.subr.bf16.mxu0 0
        %2038 = vmatpush1.bf16.msra.mxu0 0
        %2039 = vmatprep.subr.bf16.mxu0 0
        %2040 = vmatpush1.bf16.msra.mxu0 %v1978
        %2041 = vmatprep.subr.bf16.mxu0 0
        %2042 = vmatpush1.bf16.msra.mxu0 %v1977
        %2043 = vmatprep.subr.bf16.mxu0 0
        %2044 = vmatpush1.bf16.msra.mxu0 %v1976
        %2045 = vmatprep.subr.bf16.mxu0 0
        %2046 = vmatpush1.bf16.msra.mxu0 %v1975
        %2047 = vmatprep.subr.bf16.mxu0 0
        %2048 = vmatpush2.bf16.msra.mxu0 0
        %2049 = vmatprep.subr.bf16.mxu0 0
        %2050 = vmatpush2.bf16.msra.mxu0 0
        %2051 = vmatprep.subr.bf16.mxu0 0
        %2052 = vmatpush2.bf16.msra.mxu0 0
        %2053 = vmatprep.subr.bf16.mxu0 0
        %2054 = vmatpush2.bf16.msra.mxu0 0
        %2055 = vmatprep.subr.bf16.mxu0 0
        %2056 = vmatpush2.bf16.msra.mxu0 0
        %2057 = vmatprep.subr.bf16.mxu0 0
        %2058 = vmatpush2.bf16.msra.mxu0 0
        %2059 = vmatprep.subr.bf16.mxu0 0
        %2060 = vmatpush2.bf16.msra.mxu0 0
        %2061 = vmatprep.subr.bf16.mxu0 0
        %2062 = vmatpush2.bf16.msra.mxu0 0
        %2063 = vmatprep.mubr.bf16.mxu0 0
        %2064 = vmatmul.mubr.bf16.gmra.mxu0 %v1984
        %v2065 = vpop.f32.mrf.mxu0
        %v2066 = vadd.f32 %v1958, %v2065
        %v2067 = vpop.f32.mrf.mxu0
        %v2068 = vpop.f32.mrf.mxu0
        %v2069 = vadd.f32 %v1958, %v2068
        %v2070 = vpop.f32.mrf.mxu0
        %2071 = vmatprep.mubr.bf16.mxu0 0
        %2072 = vmatmul.mubr.bf16.gmra.mxu0 %v1987
        %v2073 = vpop.f32.mrf.mxu0
        %v2074 = vadd.f32 %v1958, %v2073
        %v2075 = vpop.f32.mrf.mxu0
        %v2076 = vpop.f32.mrf.mxu0
        %v2077 = vadd.f32 %v1958, %v2076
        %v2078 = vpop.f32.mrf.mxu0
        %2079 = vmatprep.mubr.bf16.mxu0 0
        %2080 = vmatmul.mubr.bf16.gmra.mxu0 %v1990
        %v2081 = vpop.f32.mrf.mxu0
        %v2082 = vadd.f32 %v1958, %v2081
        %v2083 = vpop.f32.mrf.mxu0
        %v2084 = vpop.f32.mrf.mxu0
        %v2085 = vadd.f32 %v1958, %v2084
        %v2086 = vpop.f32.mrf.mxu0
        %2087 = vmatprep.mubr.bf16.mxu0 0
        %2088 = vmatmul.mubr.bf16.gmra.mxu0 %v1993
        %v2089 = vpop.f32.mrf.mxu0
        %v2090 = vadd.f32 %v1958, %v2089
        %v2091 = vpop.f32.mrf.mxu0
        %v2092 = vpop.f32.mrf.mxu0
        %v2093 = vadd.f32 %v1958, %v2092
        %v2094 = vpop.f32.mrf.mxu0
        %2095 = vmatprep.mubr.bf16.mxu0 0
        %2096 = vmatmul.mubr.bf16.gmra.mxu0 %v1996
        %v2097 = vpop.f32.mrf.mxu0
        %v2098 = vadd.f32 %v1958, %v2097
        %v2099 = vpop.f32.mrf.mxu0
        %v2100 = vpop.f32.mrf.mxu0
        %v2101 = vadd.f32 %v1958, %v2100
        %v2102 = vpop.f32.mrf.mxu0
        %2103 = vmatprep.mubr.bf16.mxu0 0
        %2104 = vmatmul.mubr.bf16.gmra.mxu0 %v1999
        %v2105 = vpop.f32.mrf.mxu0
        %v2106 = vadd.f32 %v1958, %v2105
        %v2107 = vpop.f32.mrf.mxu0
        %v2108 = vpop.f32.mrf.mxu0
        %v2109 = vadd.f32 %v1958, %v2108
        %v2110 = vpop.f32.mrf.mxu0
        %2111 = vmatprep.mubr.bf16.mxu0 0
        %2112 = vmatmul.mubr.bf16.gmra.mxu0 %v2002
        %v2113 = vpop.f32.mrf.mxu0
        %v2114 = vadd.f32 %v1958, %v2113
        %v2115 = vpop.f32.mrf.mxu0
        %v2116 = vpop.f32.mrf.mxu0
        %v2117 = vadd.f32 %v1958, %v2116
        %v2118 = vpop.f32.mrf.mxu0
        %2119 = vmatprep.mubr.bf16.mxu0 0
        %2120 = vmatmul.mubr.bf16.gmra.mxu0 %v2005
        %v2121 = vpop.f32.mrf.mxu0
        %v2122 = vadd.f32 %v1958, %v2121
        %v2123 = vpop.f32.mrf.mxu0
        %v2124 = vpop.f32.mrf.mxu0
        %v2125 = vadd.f32 %v1958, %v2124
        %v2126 = vpop.f32.mrf.mxu0
        %2127 = vmatprep.mubr.bf16.mxu0 0
        %2128 = vmatmul.mubr.bf16.gmra.mxu0 %v2008
        %v2129 = vpop.f32.mrf.mxu0
        %v2130 = vadd.f32 %v1958, %v2129
        %v2131 = vpop.f32.mrf.mxu0
        %v2132 = vpop.f32.mrf.mxu0
        %v2133 = vadd.f32 %v1958, %v2132
        %v2134 = vpop.f32.mrf.mxu0
        %2135 = vmatprep.mubr.bf16.mxu0 0
        %2136 = vmatmul.mubr.bf16.gmra.mxu0 %v2011
        %v2137 = vpop.f32.mrf.mxu0
        %v2138 = vadd.f32 %v1958, %v2137
        %v2139 = vpop.f32.mrf.mxu0
        %v2140 = vpop.f32.mrf.mxu0
        %v2141 = vadd.f32 %v1958, %v2140
        %v2142 = vpop.f32.mrf.mxu0
        %2143 = vmatprep.mubr.bf16.mxu0 0
        %2144 = vmatmul.mubr.bf16.gmra.mxu0 %v2014
        %v2145 = vpop.f32.mrf.mxu0
        %v2146 = vadd.f32 %v1958, %v2145
        %v2147 = vpop.f32.mrf.mxu0
        %v2148 = vpop.f32.mrf.mxu0
        %v2149 = vadd.f32 %v1958, %v2148
        %v2150 = vpop.f32.mrf.mxu0
        %2151 = vmatprep.mubr.bf16.mxu0 0
        %2152 = vmatmul.mubr.bf16.gmra.mxu0 %v2017
        %v2153 = vpop.f32.mrf.mxu0
        %v2154 = vadd.f32 %v1958, %v2153
        %v2155 = vpop.f32.mrf.mxu0
        %v2156 = vpop.f32.mrf.mxu0
        %v2157 = vadd.f32 %v1958, %v2156
        %v2158 = vpop.f32.mrf.mxu0
        %2159 = vmatprep.mubr.bf16.mxu0 0
        %2160 = vmatmul.mubr.bf16.gmra.mxu0 %v2020
        %v2161 = vpop.f32.mrf.mxu0
        %v2162 = vadd.f32 %v1958, %v2161
        %v2163 = vpop.f32.mrf.mxu0
        %v2164 = vpop.f32.mrf.mxu0
        %v2165 = vadd.f32 %v1958, %v2164
        %v2166 = vpop.f32.mrf.mxu0
        %2167 = vmatprep.mubr.bf16.mxu0 0
        %2168 = vmatmul.mubr.bf16.gmra.mxu0 %v2023
        %v2169 = vpop.f32.mrf.mxu0
        %v2170 = vadd.f32 %v1958, %v2169
        %v2171 = vpop.f32.mrf.mxu0
        %v2172 = vpop.f32.mrf.mxu0
        %v2173 = vadd.f32 %v1958, %v2172
        %v2174 = vpop.f32.mrf.mxu0
        %2175 = vmatprep.mubr.bf16.mxu0 0
        %2176 = vmatmul.mubr.bf16.gmra.mxu0 %v2026
        %v2177 = vpop.f32.mrf.mxu0
        %v2178 = vadd.f32 %v1958, %v2177
        %v2179 = vpop.f32.mrf.mxu0
        %v2180 = vpop.f32.mrf.mxu0
        %v2181 = vadd.f32 %v1958, %v2180
        %v2182 = vpop.f32.mrf.mxu0
        %2183 = vmatprep.mubr.bf16.mxu0 0
        %2184 = vmatmul.mubr.bf16.gmra.mxu0 %v2029
        %v2185 = vpop.f32.mrf.mxu0
        %v2186 = vadd.f32 %v1958, %v2185
        %v2187 = vpop.f32.mrf.mxu0
        %v2188 = vpop.f32.mrf.mxu0
        %v2189 = vadd.f32 %v1958, %v2188
        %v2190 = vpop.f32.mrf.mxu0
        %2191 = vdwg.mxu0
        %v2192 = vxor.u32 %v2066, 2147483648
        %v2193 = vxor.u32 %v2069, 2147483648
        %v2194 = vxor.u32 %v2074, 2147483648
        %v2195 = vxor.u32 %v2077, 2147483648
        %v2196 = vxor.u32 %v2082, 2147483648
        %v2197 = vxor.u32 %v2085, 2147483648
        %v2198 = vxor.u32 %v2090, 2147483648
        %v2199 = vxor.u32 %v2093, 2147483648
        %v2200 = vxor.u32 %v2098, 2147483648
        %v2201 = vxor.u32 %v2101, 2147483648
        %v2202 = vxor.u32 %v2106, 2147483648
        %v2203 = vxor.u32 %v2109, 2147483648
        %v2204 = vxor.u32 %v2114, 2147483648
        %v2205 = vxor.u32 %v2117, 2147483648
        %v2206 = vxor.u32 %v2122, 2147483648
        %v2207 = vxor.u32 %v2125, 2147483648
        %v2208 = vxor.u32 %v2130, 2147483648
        %v2209 = vxor.u32 %v2133, 2147483648
        %v2210 = vxor.u32 %v2138, 2147483648
        %v2211 = vxor.u32 %v2141, 2147483648
        %v2212 = vxor.u32 %v2146, 2147483648
        %v2213 = vxor.u32 %v2149, 2147483648
        %v2214 = vxor.u32 %v2154, 2147483648
        %v2215 = vxor.u32 %v2157, 2147483648
        %v2216 = vxor.u32 %v2162, 2147483648
        %v2217 = vxor.u32 %v2165, 2147483648
        %v2218 = vxor.u32 %v2170, 2147483648
        %v2219 = vxor.u32 %v2173, 2147483648
        %v2220 = vxor.u32 %v2178, 2147483648
        %v2221 = vxor.u32 %v2181, 2147483648
        %v2222 = vxor.u32 %v2186, 2147483648
        %v2223 = vxor.u32 %v2189, 2147483648
        %v2224 = vmul.f32 %v2192, 1.442695
        %v2225 = vpow.pop %v2224
        %v2226 = vmul.f32 %v2193, 1.442695
        %v2227 = vpow.pop %v2226
        %v2228 = vmul.f32 %v2194, 1.442695
        %v2229 = vpow.pop %v2228
        %v2230 = vmul.f32 %v2195, 1.442695
        %v2231 = vpow.pop %v2230
        %v2232 = vmul.f32 %v2196, 1.442695
        %v2233 = vpow.pop %v2232
        %v2234 = vmul.f32 %v2197, 1.442695
        %v2235 = vpow.pop %v2234
        %v2236 = vmul.f32 %v2198, 1.442695
        %v2237 = vpow.pop %v2236
        %v2238 = vmul.f32 %v2199, 1.442695
        %v2239 = vpow.pop %v2238
        %v2240 = vmul.f32 %v2200, 1.442695
        %v2241 = vpow.pop %v2240
        %v2242 = vmul.f32 %v2201, 1.442695
        %v2243 = vpow.pop %v2242
        %v2244 = vmul.f32 %v2202, 1.442695
        %v2245 = vpow.pop %v2244
        %v2246 = vmul.f32 %v2203, 1.442695
        %v2247 = vpow.pop %v2246
        %v2248 = vmul.f32 %v2204, 1.442695
        %v2249 = vpow.pop %v2248
        %v2250 = vmul.f32 %v2205, 1.442695
        %v2251 = vpow.pop %v2250
        %v2252 = vmul.f32 %v2206, 1.442695
        %v2253 = vpow.pop %v2252
        %v2254 = vmul.f32 %v2207, 1.442695
        %v2255 = vpow.pop %v2254
        %v2256 = vmul.f32 %v2208, 1.442695
        %v2257 = vpow.pop %v2256
        %v2258 = vmul.f32 %v2209, 1.442695
        %v2259 = vpow.pop %v2258
        %v2260 = vmul.f32 %v2210, 1.442695
        %v2261 = vpow.pop %v2260
        %v2262 = vmul.f32 %v2211, 1.442695
        %v2263 = vpow.pop %v2262
        %v2264 = vmul.f32 %v2212, 1.442695
        %v2265 = vpow.pop %v2264
        %v2266 = vmul.f32 %v2213, 1.442695
        %v2267 = vpow.pop %v2266
        %v2268 = vmul.f32 %v2214, 1.442695
        %v2269 = vpow.pop %v2268
        %v2270 = vmul.f32 %v2215, 1.442695
        %v2271 = vpow.pop %v2270
        %v2272 = vmul.f32 %v2216, 1.442695
        %v2273 = vpow.pop %v2272
        %v2274 = vmul.f32 %v2217, 1.442695
        %v2275 = vpow.pop %v2274
        %v2276 = vmul.f32 %v2218, 1.442695
        %v2277 = vpow.pop %v2276
        %v2278 = vmul.f32 %v2219, 1.442695
        %v2279 = vpow.pop %v2278
        %v2280 = vmul.f32 %v2220, 1.442695
        %v2281 = vpow.pop %v2280
        %v2282 = vmul.f32 %v2221, 1.442695
        %v2283 = vpow.pop %v2282
        %v2284 = vmul.f32 %v2222, 1.442695
        %v2285 = vpow.pop %v2284
        %v2286 = vmul.f32 %v2223, 1.442695
        %v2287 = vpow.pop %v2286
        %v2288 = vadd.f32 %v2225, 1.0
        %v2289 = vadd.f32 %v2227, 1.0
        %v2290 = vadd.f32 %v2229, 1.0
        %v2291 = vadd.f32 %v2231, 1.0
        %v2292 = vadd.f32 %v2233, 1.0
        %v2293 = vadd.f32 %v2235, 1.0
        %v2294 = vadd.f32 %v2237, 1.0
        %v2295 = vadd.f32 %v2239, 1.0
        %v2296 = vadd.f32 %v2241, 1.0
        %v2297 = vadd.f32 %v2243, 1.0
        %v2298 = vadd.f32 %v2245, 1.0
        %v2299 = vadd.f32 %v2247, 1.0
        %v2300 = vadd.f32 %v2249, 1.0
        %v2301 = vadd.f32 %v2251, 1.0
        %v2302 = vadd.f32 %v2253, 1.0
        %v2303 = vadd.f32 %v2255, 1.0
        %v2304 = vadd.f32 %v2257, 1.0
        %v2305 = vadd.f32 %v2259, 1.0
        %v2306 = vadd.f32 %v2261, 1.0
        %v2307 = vadd.f32 %v2263, 1.0
        %v2308 = vadd.f32 %v2265, 1.0
        %v2309 = vadd.f32 %v2267, 1.0
        %v2310 = vadd.f32 %v2269, 1.0
        %v2311 = vadd.f32 %v2271, 1.0
        %v2312 = vadd.f32 %v2273, 1.0
        %v2313 = vadd.f32 %v2275, 1.0
        %v2314 = vadd.f32 %v2277, 1.0
        %v2315 = vadd.f32 %v2279, 1.0
        %v2316 = vadd.f32 %v2281, 1.0
        %v2317 = vadd.f32 %v2283, 1.0
        %v2318 = vadd.f32 %v2285, 1.0
        %v2319 = vadd.f32 %v2287, 1.0
        %v2320 = vrcp.pop %v2288
        %v2321 = vmul.f32 1.0, %v2320
        %v2322 = vrcp.pop %v2289
        %v2323 = vmul.f32 1.0, %v2322
        %v2324 = vrcp.pop %v2290
        %v2325 = vmul.f32 1.0, %v2324
        %v2326 = vrcp.pop %v2291
        %v2327 = vmul.f32 1.0, %v2326
        %v2328 = vrcp.pop %v2292
        %v2329 = vmul.f32 1.0, %v2328
        %v2330 = vrcp.pop %v2293
        %v2331 = vmul.f32 1.0, %v2330
        %v2332 = vrcp.pop %v2294
        %v2333 = vmul.f32 1.0, %v2332
        %v2334 = vrcp.pop %v2295
        %v2335 = vmul.f32 1.0, %v2334
        %v2336 = vrcp.pop %v2296
        %v2337 = vmul.f32 1.0, %v2336
        %v2338 = vrcp.pop %v2297
        %v2339 = vmul.f32 1.0, %v2338
        %v2340 = vrcp.pop %v2298
        %v2341 = vmul.f32 1.0, %v2340
        %v2342 = vrcp.pop %v2299
        %v2343 = vmul.f32 1.0, %v2342
        %v2344 = vrcp.pop %v2300
        %v2345 = vmul.f32 1.0, %v2344
        %v2346 = vrcp.pop %v2301
        %v2347 = vmul.f32 1.0, %v2346
        %v2348 = vrcp.pop %v2302
        %v2349 = vmul.f32 1.0, %v2348
        %v2350 = vrcp.pop %v2303
        %v2351 = vmul.f32 1.0, %v2350
        %v2352 = vrcp.pop %v2304
        %v2353 = vmul.f32 1.0, %v2352
        %v2354 = vrcp.pop %v2305
        %v2355 = vmul.f32 1.0, %v2354
        %v2356 = vrcp.pop %v2306
        %v2357 = vmul.f32 1.0, %v2356
        %v2358 = vrcp.pop %v2307
        %v2359 = vmul.f32 1.0, %v2358
        %v2360 = vrcp.pop %v2308
        %v2361 = vmul.f32 1.0, %v2360
        %v2362 = vrcp.pop %v2309
        %v2363 = vmul.f32 1.0, %v2362
        %v2364 = vrcp.pop %v2310
        %v2365 = vmul.f32 1.0, %v2364
        %v2366 = vrcp.pop %v2311
        %v2367 = vmul.f32 1.0, %v2366
        %v2368 = vrcp.pop %v2312
        %v2369 = vmul.f32 1.0, %v2368
        %v2370 = vrcp.pop %v2313
        %v2371 = vmul.f32 1.0, %v2370
        %v2372 = vrcp.pop %v2314
        %v2373 = vmul.f32 1.0, %v2372
        %v2374 = vrcp.pop %v2315
        %v2375 = vmul.f32 1.0, %v2374
        %v2376 = vrcp.pop %v2316
        %v2377 = vmul.f32 1.0, %v2376
        %v2378 = vrcp.pop %v2317
        %v2379 = vmul.f32 1.0, %v2378
        %v2380 = vrcp.pop %v2318
        %v2381 = vmul.f32 1.0, %v2380
        %v2382 = vrcp.pop %v2319
        %v2383 = vmul.f32 1.0, %v2382
        %v2384 = vpack.c.bf16 %v2323, %v2321
        %v2385 = vpack.c.bf16 %v2327, %v2325
        %v2386 = vpack.c.bf16 %v2331, %v2329
        %v2387 = vpack.c.bf16 %v2335, %v2333
        %v2388 = vpack.c.bf16 %v2339, %v2337
        %v2389 = vpack.c.bf16 %v2343, %v2341
        %v2390 = vpack.c.bf16 %v2347, %v2345
        %v2391 = vpack.c.bf16 %v2351, %v2349
        %v2392 = vpack.c.bf16 %v2355, %v2353
        %v2393 = vpack.c.bf16 %v2359, %v2357
        %v2394 = vpack.c.bf16 %v2363, %v2361
        %v2395 = vpack.c.bf16 %v2367, %v2365
        %v2396 = vpack.c.bf16 %v2371, %v2369
        %v2397 = vpack.c.bf16 %v2375, %v2373
        %v2398 = vpack.c.bf16 %v2379, %v2377
        %v2399 = vpack.c.bf16 %v2383, %v2381
        %v2416 = vunpack.c.l.b16 %v2384
        %v2417 = vunpack.c.h.b16 %v2384
        %v2418 = vunpack.c.l.b16 %v2385
        %v2419 = vunpack.c.h.b16 %v2385
        %v2420 = vunpack.c.l.b16 %v2386
        %v2421 = vunpack.c.h.b16 %v2386
        %v2422 = vunpack.c.l.b16 %v2387
        %v2423 = vunpack.c.h.b16 %v2387
        %v2424 = vunpack.c.l.b16 %v2388
        %v2425 = vunpack.c.h.b16 %v2388
        %v2426 = vunpack.c.l.b16 %v2389
        %v2427 = vunpack.c.h.b16 %v2389
        %v2428 = vunpack.c.l.b16 %v2390
        %v2429 = vunpack.c.h.b16 %v2390
        %v2430 = vunpack.c.l.b16 %v2391
        %v2431 = vunpack.c.h.b16 %v2391
        %v2432 = vunpack.c.l.b16 %v2392
        %v2433 = vunpack.c.h.b16 %v2392
        %v2434 = vunpack.c.l.b16 %v2393
        %v2435 = vunpack.c.h.b16 %v2393
        %v2436 = vunpack.c.l.b16 %v2394
        %v2437 = vunpack.c.h.b16 %v2394
        %v2438 = vunpack.c.l.b16 %v2395
        %v2439 = vunpack.c.h.b16 %v2395
        %v2440 = vunpack.c.l.b16 %v2396
        %v2441 = vunpack.c.h.b16 %v2396
        %v2442 = vunpack.c.l.b16 %v2397
        %v2443 = vunpack.c.h.b16 %v2397
        %v2444 = vunpack.c.l.b16 %v2398
        %v2445 = vunpack.c.h.b16 %v2398
        %v2446 = vunpack.c.l.b16 %v2399
        %v2447 = vunpack.c.h.b16 %v2399
        %v2448 = vpack.c.b16 %v2416, %v2416
        %v2449 = vpack.c.b16 %v2417, %v2417
        %v2450 = vpack.c.b16 %v2418, %v2418
        %v2451 = vpack.c.b16 %v2419, %v2419
        %v2452 = vpack.c.b16 %v2420, %v2420
        %v2453 = vpack.c.b16 %v2421, %v2421
        %v2454 = vpack.c.b16 %v2422, %v2422
        %v2455 = vpack.c.b16 %v2423, %v2423
        %v2456 = vpack.c.b16 %v2424, %v2424
        %v2457 = vpack.c.b16 %v2425, %v2425
        %v2458 = vpack.c.b16 %v2426, %v2426
        %v2459 = vpack.c.b16 %v2427, %v2427
        %v2460 = vpack.c.b16 %v2428, %v2428
        %v2461 = vpack.c.b16 %v2429, %v2429
        %v2462 = vpack.c.b16 %v2430, %v2430
        %v2463 = vpack.c.b16 %v2431, %v2431
        %v2464 = vpack.c.b16 %v2432, %v2432
        %v2465 = vpack.c.b16 %v2433, %v2433
        %v2466 = vpack.c.b16 %v2434, %v2434
        %v2467 = vpack.c.b16 %v2435, %v2435
        %v2468 = vpack.c.b16 %v2436, %v2436
        %v2469 = vpack.c.b16 %v2437, %v2437
        %v2470 = vpack.c.b16 %v2438, %v2438
        %v2471 = vpack.c.b16 %v2439, %v2439
        %v2472 = vpack.c.b16 %v2440, %v2440
        %v2473 = vpack.c.b16 %v2441, %v2441
        %v2474 = vpack.c.b16 %v2442, %v2442
        %v2475 = vpack.c.b16 %v2443, %v2443
        %v2476 = vpack.c.b16 %v2444, %v2444
        %v2477 = vpack.c.b16 %v2445, %v2445
        %v2478 = vpack.c.b16 %v2446, %v2446
        %v2479 = vpack.c.b16 %v2447, %v2447
        %2512 = vst [vmem:[%s408] sm:$0xf] %v2448
        %2513 = vst [vmem:[%s408 + $0x4] sm:$0xf] %v2449
        %2514 = vst [vmem:[%s408 + $0x8] sm:$0xf] %v2450
        %2515 = vst [vmem:[%s408 + $0xc] sm:$0xf] %v2451
        %2516 = vst [vmem:[%s408 + $0x10] sm:$0xf] %v2452
        %2517 = vst [vmem:[%s408 + $0x14] sm:$0xf] %v2453
        %2518 = vst [vmem:[%s408 + $0x18] sm:$0xf] %v2454
        %2519 = vst [vmem:[%s408 + $0x1c] sm:$0xf] %v2455
        %2520 = vst [vmem:[%s408 + $0x20] sm:$0xf] %v2456
        %2521 = vst [vmem:[%s408 + $0x24] sm:$0xf] %v2457
        %2522 = vst [vmem:[%s408 + $0x28] sm:$0xf] %v2458
        %2523 = vst [vmem:[%s408 + $0x2c] sm:$0xf] %v2459
        %2524 = vst [vmem:[%s408 + $0x30] sm:$0xf] %v2460
        %2525 = vst [vmem:[%s408 + $0x34] sm:$0xf] %v2461
        %2526 = vst [vmem:[%s408 + $0x38] sm:$0xf] %v2462
        %2527 = vst [vmem:[%s408 + $0x3c] sm:$0xf] %v2463
        %2528 = vst [vmem:[%s408 + $0x40] sm:$0xf] %v2464
        %2529 = vst [vmem:[%s408 + $0x44] sm:$0xf] %v2465
        %2530 = vst [vmem:[%s408 + $0x48] sm:$0xf] %v2466
        %2531 = vst [vmem:[%s408 + $0x4c] sm:$0xf] %v2467
        %2532 = vst [vmem:[%s408 + $0x50] sm:$0xf] %v2468
        %2533 = vst [vmem:[%s408 + $0x54] sm:$0xf] %v2469
        %2534 = vst [vmem:[%s408 + $0x58] sm:$0xf] %v2470
        %2535 = vst [vmem:[%s408 + $0x5c] sm:$0xf] %v2471
        %2536 = vst [vmem:[%s408 + $0x60] sm:$0xf] %v2472
        %2537 = vst [vmem:[%s408 + $0x64] sm:$0xf] %v2473
        %2538 = vst [vmem:[%s408 + $0x68] sm:$0xf] %v2474
        %2539 = vst [vmem:[%s408 + $0x6c] sm:$0xf] %v2475
        %2540 = vst [vmem:[%s408 + $0x70] sm:$0xf] %v2476
        %2541 = vst [vmem:[%s408 + $0x74] sm:$0xf] %v2477
        %2542 = vst [vmem:[%s408 + $0x78] sm:$0xf] %v2478
        %2543 = vst [vmem:[%s408 + $0x7c] sm:$0xf] %v2479
        %v2545 = vsel %vm615, %v2384, 0
        %v2548 = vsel %vm615, %v2385, 0
        %v2551 = vsel %vm615, %v2386, 0
        %v2554 = vsel %vm615, %v2387, 0
        %v2557 = vsel %vm615, %v2388, 0
        %v2560 = vsel %vm615, %v2389, 0
        %v2563 = vsel %vm615, %v2390, 0
        %v2566 = vsel %vm615, %v2391, 0
        %v2569 = vsel %vm615, %v2392, 0
        %v2572 = vsel %vm615, %v2393, 0
        %v2575 = vsel %vm615, %v2394, 0
        %v2578 = vsel %vm615, %v2395, 0
        %v2581 = vsel %vm615, %v2396, 0
        %v2584 = vsel %vm615, %v2397, 0
        %v2587 = vsel %vm615, %v2398, 0
        %v2590 = vsel %vm615, %v2399, 0
        %2592 = vmatprep.subr.bf16.mxu0 0
        %2593 = vmatpush1.bf16.msra.mxu0 0
        %2594 = vmatprep.subr.bf16.mxu0 0
        %2595 = vmatpush1.bf16.msra.mxu0 0
        %2596 = vmatprep.subr.bf16.mxu0 0
        %2597 = vmatpush1.bf16.msra.mxu0 0
        %2598 = vmatprep.subr.bf16.mxu0 0
        %2599 = vmatpush1.bf16.msra.mxu0 0
        %2600 = vmatprep.subr.bf16.mxu0 0
        %2601 = vmatpush1.bf16.msra.mxu0 %v610
        %2602 = vmatprep.subr.bf16.mxu0 0
        %2603 = vmatpush1.bf16.msra.mxu0 %v609
        %2604 = vmatprep.subr.bf16.mxu0 0
        %2605 = vmatpush1.bf16.msra.mxu0 %v608
        %2606 = vmatprep.subr.bf16.mxu0 0
        %2607 = vmatpush1.bf16.msra.mxu0 %v607
        %2608 = vmatprep.subr.bf16.mxu0 0
        %2609 = vmatpush2.bf16.msra.mxu0 0
        %2610 = vmatprep.subr.bf16.mxu0 0
        %2611 = vmatpush2.bf16.msra.mxu0 0
        %2612 = vmatprep.subr.bf16.mxu0 0
        %2613 = vmatpush2.bf16.msra.mxu0 0
        %2614 = vmatprep.subr.bf16.mxu0 0
        %2615 = vmatpush2.bf16.msra.mxu0 0
        %2616 = vmatprep.subr.bf16.mxu0 0
        %2617 = vmatpush2.bf16.msra.mxu0 0
        %2618 = vmatprep.subr.bf16.mxu0 0
        %2619 = vmatpush2.bf16.msra.mxu0 0
        %2620 = vmatprep.subr.bf16.mxu0 0
        %2621 = vmatpush2.bf16.msra.mxu0 0
        %2622 = vmatprep.subr.bf16.mxu0 0
        %2623 = vmatpush2.bf16.msra.mxu0 0
        %2624 = vmatprep.mubr.bf16.mxu0 0
        %2625 = vmatmul.mubr.bf16.gmra.mxu0 %v2545
        %v2626 = vpop.f32.mrf.mxu0
        %v2627 = vadd.f32 %v510, %v2626
        %v2628 = vpop.f32.mrf.mxu0
        %v2629 = vpop.f32.mrf.mxu0
        %v2630 = vadd.f32 %v510, %v2629
        %v2631 = vpop.f32.mrf.mxu0
        %2632 = vmatprep.mubr.bf16.mxu0 0
        %2633 = vmatmul.mubr.bf16.gmra.mxu0 %v2548
        %v2634 = vpop.f32.mrf.mxu0
        %v2635 = vadd.f32 %v510, %v2634
        %v2636 = vpop.f32.mrf.mxu0
        %v2637 = vpop.f32.mrf.mxu0
        %v2638 = vadd.f32 %v510, %v2637
        %v2639 = vpop.f32.mrf.mxu0
        %2640 = vmatprep.mubr.bf16.mxu0 0
        %2641 = vmatmul.mubr.bf16.gmra.mxu0 %v2551
        %v2642 = vpop.f32.mrf.mxu0
        %v2643 = vadd.f32 %v510, %v2642
        %v2644 = vpop.f32.mrf.mxu0
        %v2645 = vpop.f32.mrf.mxu0
        %v2646 = vadd.f32 %v510, %v2645
        %v2647 = vpop.f32.mrf.mxu0
        %2648 = vmatprep.mubr.bf16.mxu0 0
        %2649 = vmatmul.mubr.bf16.gmra.mxu0 %v2554
        %v2650 = vpop.f32.mrf.mxu0
        %v2651 = vadd.f32 %v510, %v2650
        %v2652 = vpop.f32.mrf.mxu0
        %v2653 = vpop.f32.mrf.mxu0
        %v2654 = vadd.f32 %v510, %v2653
        %v2655 = vpop.f32.mrf.mxu0
        %2656 = vmatprep.mubr.bf16.mxu0 0
        %2657 = vmatmul.mubr.bf16.gmra.mxu0 %v2557
        %v2658 = vpop.f32.mrf.mxu0
        %v2659 = vadd.f32 %v510, %v2658
        %v2660 = vpop.f32.mrf.mxu0
        %v2661 = vpop.f32.mrf.mxu0
        %v2662 = vadd.f32 %v510, %v2661
        %v2663 = vpop.f32.mrf.mxu0
        %2664 = vmatprep.mubr.bf16.mxu0 0
        %2665 = vmatmul.mubr.bf16.gmra.mxu0 %v2560
        %v2666 = vpop.f32.mrf.mxu0
        %v2667 = vadd.f32 %v510, %v2666
        %v2668 = vpop.f32.mrf.mxu0
        %v2669 = vpop.f32.mrf.mxu0
        %v2670 = vadd.f32 %v510, %v2669
        %v2671 = vpop.f32.mrf.mxu0
        %2672 = vmatprep.mubr.bf16.mxu0 0
        %2673 = vmatmul.mubr.bf16.gmra.mxu0 %v2563
        %v2674 = vpop.f32.mrf.mxu0
        %v2675 = vadd.f32 %v510, %v2674
        %v2676 = vpop.f32.mrf.mxu0
        %v2677 = vpop.f32.mrf.mxu0
        %v2678 = vadd.f32 %v510, %v2677
        %v2679 = vpop.f32.mrf.mxu0
        %2680 = vmatprep.mubr.bf16.mxu0 0
        %2681 = vmatmul.mubr.bf16.gmra.mxu0 %v2566
        %v2682 = vpop.f32.mrf.mxu0
        %v2683 = vadd.f32 %v510, %v2682
        %v2684 = vpop.f32.mrf.mxu0
        %v2685 = vpop.f32.mrf.mxu0
        %v2686 = vadd.f32 %v510, %v2685
        %v2687 = vpop.f32.mrf.mxu0
        %2688 = vmatprep.mubr.bf16.mxu0 0
        %2689 = vmatmul.mubr.bf16.gmra.mxu0 %v2569
        %v2690 = vpop.f32.mrf.mxu0
        %v2691 = vadd.f32 %v510, %v2690
        %v2692 = vpop.f32.mrf.mxu0
        %v2693 = vpop.f32.mrf.mxu0
        %v2694 = vadd.f32 %v510, %v2693
        %v2695 = vpop.f32.mrf.mxu0
        %2696 = vmatprep.mubr.bf16.mxu0 0
        %2697 = vmatmul.mubr.bf16.gmra.mxu0 %v2572
        %v2698 = vpop.f32.mrf.mxu0
        %v2699 = vadd.f32 %v510, %v2698
        %v2700 = vpop.f32.mrf.mxu0
        %v2701 = vpop.f32.mrf.mxu0
        %v2702 = vadd.f32 %v510, %v2701
        %v2703 = vpop.f32.mrf.mxu0
        %2704 = vmatprep.mubr.bf16.mxu0 0
        %2705 = vmatmul.mubr.bf16.gmra.mxu0 %v2575
        %v2706 = vpop.f32.mrf.mxu0
        %v2707 = vadd.f32 %v510, %v2706
        %v2708 = vpop.f32.mrf.mxu0
        %v2709 = vpop.f32.mrf.mxu0
        %v2710 = vadd.f32 %v510, %v2709
        %v2711 = vpop.f32.mrf.mxu0
        %2712 = vmatprep.mubr.bf16.mxu0 0
        %2713 = vmatmul.mubr.bf16.gmra.mxu0 %v2578
        %v2714 = vpop.f32.mrf.mxu0
        %v2715 = vadd.f32 %v510, %v2714
        %v2716 = vpop.f32.mrf.mxu0
        %v2717 = vpop.f32.mrf.mxu0
        %v2718 = vadd.f32 %v510, %v2717
        %v2719 = vpop.f32.mrf.mxu0
        %2720 = vmatprep.mubr.bf16.mxu0 0
        %2721 = vmatmul.mubr.bf16.gmra.mxu0 %v2581
        %v2722 = vpop.f32.mrf.mxu0
        %v2723 = vadd.f32 %v510, %v2722
        %v2724 = vpop.f32.mrf.mxu0
        %v2725 = vpop.f32.mrf.mxu0
        %v2726 = vadd.f32 %v510, %v2725
        %v2727 = vpop.f32.mrf.mxu0
        %2728 = vmatprep.mubr.bf16.mxu0 0
        %2729 = vmatmul.mubr.bf16.gmra.mxu0 %v2584
        %v2730 = vpop.f32.mrf.mxu0
        %v2731 = vadd.f32 %v510, %v2730
        %v2732 = vpop.f32.mrf.mxu0
        %v2733 = vpop.f32.mrf.mxu0
        %v2734 = vadd.f32 %v510, %v2733
        %v2735 = vpop.f32.mrf.mxu0
        %2736 = vmatprep.mubr.bf16.mxu0 0
        %2737 = vmatmul.mubr.bf16.gmra.mxu0 %v2587
        %v2738 = vpop.f32.mrf.mxu0
        %v2739 = vadd.f32 %v510, %v2738
        %v2740 = vpop.f32.mrf.mxu0
        %v2741 = vpop.f32.mrf.mxu0
        %v2742 = vadd.f32 %v510, %v2741
        %v2743 = vpop.f32.mrf.mxu0
        %2744 = vmatprep.mubr.bf16.mxu0 0
        %2745 = vmatmul.mubr.bf16.gmra.mxu0 %v2590
        %v2746 = vpop.f32.mrf.mxu0
        %v2747 = vadd.f32 %v510, %v2746
        %v2748 = vpop.f32.mrf.mxu0
        %v2749 = vpop.f32.mrf.mxu0
        %v2750 = vadd.f32 %v510, %v2749
        %v2751 = vpop.f32.mrf.mxu0
        %2752 = vdwg.mxu0
        %v2753 = vmax.f32 %v2627, 0.0
        %v2754 = vmax.f32 %v2630, 0.0
        %v2755 = vmax.f32 %v2635, 0.0
        %v2756 = vmax.f32 %v2638, 0.0
        %v2757 = vmax.f32 %v2643, 0.0
        %v2758 = vmax.f32 %v2646, 0.0
        %v2759 = vmax.f32 %v2651, 0.0
        %v2760 = vmax.f32 %v2654, 0.0
        %v2761 = vmax.f32 %v2659, 0.0
        %v2762 = vmax.f32 %v2662, 0.0
        %v2763 = vmax.f32 %v2667, 0.0
        %v2764 = vmax.f32 %v2670, 0.0
        %v2765 = vmax.f32 %v2675, 0.0
        %v2766 = vmax.f32 %v2678, 0.0
        %v2767 = vmax.f32 %v2683, 0.0
        %v2768 = vmax.f32 %v2686, 0.0
        %v2769 = vmax.f32 %v2691, 0.0
        %v2770 = vmax.f32 %v2694, 0.0
        %v2771 = vmax.f32 %v2699, 0.0
        %v2772 = vmax.f32 %v2702, 0.0
        %v2773 = vmax.f32 %v2707, 0.0
        %v2774 = vmax.f32 %v2710, 0.0
        %v2775 = vmax.f32 %v2715, 0.0
        %v2776 = vmax.f32 %v2718, 0.0
        %v2777 = vmax.f32 %v2723, 0.0
        %v2778 = vmax.f32 %v2726, 0.0
        %v2779 = vmax.f32 %v2731, 0.0
        %v2780 = vmax.f32 %v2734, 0.0
        %v2781 = vmax.f32 %v2739, 0.0
        %v2782 = vmax.f32 %v2742, 0.0
        %v2783 = vmax.f32 %v2747, 0.0
        %v2784 = vmax.f32 %v2750, 0.0
        %v2785 = vpack.c.bf16 %v2754, %v2753
        %v2786 = vpack.c.bf16 %v2756, %v2755
        %v2787 = vpack.c.bf16 %v2758, %v2757
        %v2788 = vpack.c.bf16 %v2760, %v2759
        %v2789 = vpack.c.bf16 %v2762, %v2761
        %v2790 = vpack.c.bf16 %v2764, %v2763
        %v2791 = vpack.c.bf16 %v2766, %v2765
        %v2792 = vpack.c.bf16 %v2768, %v2767
        %v2793 = vpack.c.bf16 %v2770, %v2769
        %v2794 = vpack.c.bf16 %v2772, %v2771
        %v2795 = vpack.c.bf16 %v2774, %v2773
        %v2796 = vpack.c.bf16 %v2776, %v2775
        %v2797 = vpack.c.bf16 %v2778, %v2777
        %v2798 = vpack.c.bf16 %v2780, %v2779
        %v2799 = vpack.c.bf16 %v2782, %v2781
        %v2800 = vpack.c.bf16 %v2784, %v2783
        %v2802 = vsel %vm889, %v2785, 0
        %v2805 = vsel %vm889, %v2786, 0
        %v2808 = vsel %vm889, %v2787, 0
        %v2811 = vsel %vm889, %v2788, 0
        %v2814 = vsel %vm889, %v2789, 0
        %v2817 = vsel %vm889, %v2790, 0
        %v2820 = vsel %vm889, %v2791, 0
        %v2823 = vsel %vm889, %v2792, 0
        %v2826 = vsel %vm889, %v2793, 0
        %v2829 = vsel %vm889, %v2794, 0
        %v2832 = vsel %vm889, %v2795, 0
        %v2835 = vsel %vm889, %v2796, 0
        %v2838 = vsel %vm889, %v2797, 0
        %v2841 = vsel %vm889, %v2798, 0
        %v2844 = vsel %vm889, %v2799, 0
        %v2847 = vsel %vm889, %v2800, 0
        %2849 = vmatprep.subr.bf16.mxu0 0
        %2850 = vmatpush1.bf16.msra.mxu0 0
        %2851 = vmatprep.subr.bf16.mxu0 0
        %2852 = vmatpush1.bf16.msra.mxu0 0
        %2853 = vmatprep.subr.bf16.mxu0 0
        %2854 = vmatpush1.bf16.msra.mxu0 0
        %2855 = vmatprep.subr.bf16.mxu0 0
        %2856 = vmatpush1.bf16.msra.mxu0 0
        %2857 = vmatprep.subr.bf16.mxu0 0
        %2858 = vmatpush1.bf16.msra.mxu0 0
        %2859 = vmatprep.subr.bf16.mxu0 0
        %2860 = vmatpush1.bf16.msra.mxu0 0
        %2861 = vmatprep.subr.bf16.mxu0 0
        %2862 = vmatpush1.bf16.msra.mxu0 %v886
        %2863 = vmatprep.subr.bf16.mxu0 0
        %2864 = vmatpush1.bf16.msra.mxu0 %v885
        %2865 = vmatprep.subr.bf16.mxu0 0
        %2866 = vmatpush2.bf16.msra.mxu0 0
        %2867 = vmatprep.subr.bf16.mxu0 0
        %2868 = vmatpush2.bf16.msra.mxu0 0
        %2869 = vmatprep.subr.bf16.mxu0 0
        %2870 = vmatpush2.bf16.msra.mxu0 0
        %2871 = vmatprep.subr.bf16.mxu0 0
        %2872 = vmatpush2.bf16.msra.mxu0 0
        %2873 = vmatprep.subr.bf16.mxu0 0
        %2874 = vmatpush2.bf16.msra.mxu0 0
        %2875 = vmatprep.subr.bf16.mxu0 0
        %2876 = vmatpush2.bf16.msra.mxu0 0
        %2877 = vmatprep.subr.bf16.mxu0 0
        %2878 = vmatpush2.bf16.msra.mxu0 0
        %2879 = vmatprep.subr.bf16.mxu0 0
        %2880 = vmatpush2.bf16.msra.mxu0 0
        %2881 = vmatprep.mubr.bf16.mxu0 0
        %2882 = vmatmul.mubr.bf16.gmra.mxu0 %v2802
        %v2883 = vpop.f32.mrf.mxu0
        %v2884 = vadd.f32 %v876, %v2883
        %v2885 = vpop.f32.mrf.mxu0
        %v2886 = vpop.f32.mrf.mxu0
        %v2887 = vadd.f32 %v876, %v2886
        %v2888 = vpop.f32.mrf.mxu0
        %2889 = vmatprep.mubr.bf16.mxu0 0
        %2890 = vmatmul.mubr.bf16.gmra.mxu0 %v2805
        %v2891 = vpop.f32.mrf.mxu0
        %v2892 = vadd.f32 %v876, %v2891
        %v2893 = vpop.f32.mrf.mxu0
        %v2894 = vpop.f32.mrf.mxu0
        %v2895 = vadd.f32 %v876, %v2894
        %v2896 = vpop.f32.mrf.mxu0
        %2897 = vmatprep.mubr.bf16.mxu0 0
        %2898 = vmatmul.mubr.bf16.gmra.mxu0 %v2808
        %v2899 = vpop.f32.mrf.mxu0
        %v2900 = vadd.f32 %v876, %v2899
        %v2901 = vpop.f32.mrf.mxu0
        %v2902 = vpop.f32.mrf.mxu0
        %v2903 = vadd.f32 %v876, %v2902
        %v2904 = vpop.f32.mrf.mxu0
        %2905 = vmatprep.mubr.bf16.mxu0 0
        %2906 = vmatmul.mubr.bf16.gmra.mxu0 %v2811
        %v2907 = vpop.f32.mrf.mxu0
        %v2908 = vadd.f32 %v876, %v2907
        %v2909 = vpop.f32.mrf.mxu0
        %v2910 = vpop.f32.mrf.mxu0
        %v2911 = vadd.f32 %v876, %v2910
        %v2912 = vpop.f32.mrf.mxu0
        %2913 = vmatprep.mubr.bf16.mxu0 0
        %2914 = vmatmul.mubr.bf16.gmra.mxu0 %v2814
        %v2915 = vpop.f32.mrf.mxu0
        %v2916 = vadd.f32 %v876, %v2915
        %v2917 = vpop.f32.mrf.mxu0
        %v2918 = vpop.f32.mrf.mxu0
        %v2919 = vadd.f32 %v876, %v2918
        %v2920 = vpop.f32.mrf.mxu0
        %2921 = vmatprep.mubr.bf16.mxu0 0
        %2922 = vmatmul.mubr.bf16.gmra.mxu0 %v2817
        %v2923 = vpop.f32.mrf.mxu0
        %v2924 = vadd.f32 %v876, %v2923
        %v2925 = vpop.f32.mrf.mxu0
        %v2926 = vpop.f32.mrf.mxu0
        %v2927 = vadd.f32 %v876, %v2926
        %v2928 = vpop.f32.mrf.mxu0
        %2929 = vmatprep.mubr.bf16.mxu0 0
        %2930 = vmatmul.mubr.bf16.gmra.mxu0 %v2820
        %v2931 = vpop.f32.mrf.mxu0
        %v2932 = vadd.f32 %v876, %v2931
        %v2933 = vpop.f32.mrf.mxu0
        %v2934 = vpop.f32.mrf.mxu0
        %v2935 = vadd.f32 %v876, %v2934
        %v2936 = vpop.f32.mrf.mxu0
        %2937 = vmatprep.mubr.bf16.mxu0 0
        %2938 = vmatmul.mubr.bf16.gmra.mxu0 %v2823
        %v2939 = vpop.f32.mrf.mxu0
        %v2940 = vadd.f32 %v876, %v2939
        %v2941 = vpop.f32.mrf.mxu0
        %v2942 = vpop.f32.mrf.mxu0
        %v2943 = vadd.f32 %v876, %v2942
        %v2944 = vpop.f32.mrf.mxu0
        %2945 = vmatprep.mubr.bf16.mxu0 0
        %2946 = vmatmul.mubr.bf16.gmra.mxu0 %v2826
        %v2947 = vpop.f32.mrf.mxu0
        %v2948 = vadd.f32 %v876, %v2947
        %v2949 = vpop.f32.mrf.mxu0
        %v2950 = vpop.f32.mrf.mxu0
        %v2951 = vadd.f32 %v876, %v2950
        %v2952 = vpop.f32.mrf.mxu0
        %2953 = vmatprep.mubr.bf16.mxu0 0
        %2954 = vmatmul.mubr.bf16.gmra.mxu0 %v2829
        %v2955 = vpop.f32.mrf.mxu0
        %v2956 = vadd.f32 %v876, %v2955
        %v2957 = vpop.f32.mrf.mxu0
        %v2958 = vpop.f32.mrf.mxu0
        %v2959 = vadd.f32 %v876, %v2958
        %v2960 = vpop.f32.mrf.mxu0
        %2961 = vmatprep.mubr.bf16.mxu0 0
        %2962 = vmatmul.mubr.bf16.gmra.mxu0 %v2832
        %v2963 = vpop.f32.mrf.mxu0
        %v2964 = vadd.f32 %v876, %v2963
        %v2965 = vpop.f32.mrf.mxu0
        %v2966 = vpop.f32.mrf.mxu0
        %v2967 = vadd.f32 %v876, %v2966
        %v2968 = vpop.f32.mrf.mxu0
        %2969 = vmatprep.mubr.bf16.mxu0 0
        %2970 = vmatmul.mubr.bf16.gmra.mxu0 %v2835
        %v2971 = vpop.f32.mrf.mxu0
        %v2972 = vadd.f32 %v876, %v2971
        %v2973 = vpop.f32.mrf.mxu0
        %v2974 = vpop.f32.mrf.mxu0
        %v2975 = vadd.f32 %v876, %v2974
        %v2976 = vpop.f32.mrf.mxu0
        %2977 = vmatprep.mubr.bf16.mxu0 0
        %2978 = vmatmul.mubr.bf16.gmra.mxu0 %v2838
        %v2979 = vpop.f32.mrf.mxu0
        %v2980 = vadd.f32 %v876, %v2979
        %v2981 = vpop.f32.mrf.mxu0
        %v2982 = vpop.f32.mrf.mxu0
        %v2983 = vadd.f32 %v876, %v2982
        %v2984 = vpop.f32.mrf.mxu0
        %2985 = vmatprep.mubr.bf16.mxu0 0
        %2986 = vmatmul.mubr.bf16.gmra.mxu0 %v2841
        %v2987 = vpop.f32.mrf.mxu0
        %v2988 = vadd.f32 %v876, %v2987
        %v2989 = vpop.f32.mrf.mxu0
        %v2990 = vpop.f32.mrf.mxu0
        %v2991 = vadd.f32 %v876, %v2990
        %v2992 = vpop.f32.mrf.mxu0
        %2993 = vmatprep.mubr.bf16.mxu0 0
        %2994 = vmatmul.mubr.bf16.gmra.mxu0 %v2844
        %v2995 = vpop.f32.mrf.mxu0
        %v2996 = vadd.f32 %v876, %v2995
        %v2997 = vpop.f32.mrf.mxu0
        %v2998 = vpop.f32.mrf.mxu0
        %v2999 = vadd.f32 %v876, %v2998
        %v3000 = vpop.f32.mrf.mxu0
        %3001 = vmatprep.mubr.bf16.mxu0 0
        %3002 = vmatmul.mubr.bf16.gmra.mxu0 %v2847
        %v3003 = vpop.f32.mrf.mxu0
        %v3004 = vadd.f32 %v876, %v3003
        %v3005 = vpop.f32.mrf.mxu0
        %v3006 = vpop.f32.mrf.mxu0
        %v3007 = vadd.f32 %v876, %v3006
        %v3008 = vpop.f32.mrf.mxu0
        %3009 = vdwg.mxu0
        %v3010 = vmax.f32 %v2884, 0.0
        %v3011 = vmax.f32 %v2887, 0.0
        %v3012 = vmax.f32 %v2892, 0.0
        %v3013 = vmax.f32 %v2895, 0.0
        %v3014 = vmax.f32 %v2900, 0.0
        %v3015 = vmax.f32 %v2903, 0.0
        %v3016 = vmax.f32 %v2908, 0.0
        %v3017 = vmax.f32 %v2911, 0.0
        %v3018 = vmax.f32 %v2916, 0.0
        %v3019 = vmax.f32 %v2919, 0.0
        %v3020 = vmax.f32 %v2924, 0.0
        %v3021 = vmax.f32 %v2927, 0.0
        %v3022 = vmax.f32 %v2932, 0.0
        %v3023 = vmax.f32 %v2935, 0.0
        %v3024 = vmax.f32 %v2940, 0.0
        %v3025 = vmax.f32 %v2943, 0.0
        %v3026 = vmax.f32 %v2948, 0.0
        %v3027 = vmax.f32 %v2951, 0.0
        %v3028 = vmax.f32 %v2956, 0.0
        %v3029 = vmax.f32 %v2959, 0.0
        %v3030 = vmax.f32 %v2964, 0.0
        %v3031 = vmax.f32 %v2967, 0.0
        %v3032 = vmax.f32 %v2972, 0.0
        %v3033 = vmax.f32 %v2975, 0.0
        %v3034 = vmax.f32 %v2980, 0.0
        %v3035 = vmax.f32 %v2983, 0.0
        %v3036 = vmax.f32 %v2988, 0.0
        %v3037 = vmax.f32 %v2991, 0.0
        %v3038 = vmax.f32 %v2996, 0.0
        %v3039 = vmax.f32 %v2999, 0.0
        %v3040 = vmax.f32 %v3004, 0.0
        %v3041 = vmax.f32 %v3007, 0.0
        %v3042 = vpack.c.bf16 %v3011, %v3010
        %v3043 = vpack.c.bf16 %v3013, %v3012
        %v3044 = vpack.c.bf16 %v3015, %v3014
        %v3045 = vpack.c.bf16 %v3017, %v3016
        %v3046 = vpack.c.bf16 %v3019, %v3018
        %v3047 = vpack.c.bf16 %v3021, %v3020
        %v3048 = vpack.c.bf16 %v3023, %v3022
        %v3049 = vpack.c.bf16 %v3025, %v3024
        %v3050 = vpack.c.bf16 %v3027, %v3026
        %v3051 = vpack.c.bf16 %v3029, %v3028
        %v3052 = vpack.c.bf16 %v3031, %v3030
        %v3053 = vpack.c.bf16 %v3033, %v3032
        %v3054 = vpack.c.bf16 %v3035, %v3034
        %v3055 = vpack.c.bf16 %v3037, %v3036
        %v3056 = vpack.c.bf16 %v3039, %v3038
        %v3057 = vpack.c.bf16 %v3041, %v3040
        %v3059 = vsel %vm1157, %v3042, 0
        %v3062 = vsel %vm1157, %v3043, 0
        %v3065 = vsel %vm1157, %v3044, 0
        %v3068 = vsel %vm1157, %v3045, 0
        %v3071 = vsel %vm1157, %v3046, 0
        %v3074 = vsel %vm1157, %v3047, 0
        %v3077 = vsel %vm1157, %v3048, 0
        %v3080 = vsel %vm1157, %v3049, 0
        %v3083 = vsel %vm1157, %v3050, 0
        %v3086 = vsel %vm1157, %v3051, 0
        %v3089 = vsel %vm1157, %v3052, 0
        %v3092 = vsel %vm1157, %v3053, 0
        %v3095 = vsel %vm1157, %v3054, 0
        %v3098 = vsel %vm1157, %v3055, 0
        %v3101 = vsel %vm1157, %v3056, 0
        %v3104 = vsel %vm1157, %v3057, 0
        %3106 = vmatprep.subr.bf16.mxu0 0
        %3107 = vmatpush1.bf16.msra.mxu0 0
        %3108 = vmatprep.subr.bf16.mxu0 0
        %3109 = vmatpush1.bf16.msra.mxu0 0
        %3110 = vmatprep.subr.bf16.mxu0 0
        %3111 = vmatpush1.bf16.msra.mxu0 0
        %3112 = vmatprep.subr.bf16.mxu0 0
        %3113 = vmatpush1.bf16.msra.mxu0 0
        %3114 = vmatprep.subr.bf16.mxu0 0
        %3115 = vmatpush1.bf16.msra.mxu0 0
        %3116 = vmatprep.subr.bf16.mxu0 0
        %3117 = vmatpush1.bf16.msra.mxu0 0
        %3118 = vmatprep.subr.bf16.mxu0 0
        %3119 = vmatpush1.bf16.msra.mxu0 0
        %3120 = vmatprep.subr.bf16.mxu0 0
        %3121 = vmatpush1.bf16.msra.mxu0 %v1155
        %3122 = vmatprep.subr.bf16.mxu0 0
        %3123 = vmatpush2.bf16.msra.mxu0 0
        %3124 = vmatprep.subr.bf16.mxu0 0
        %3125 = vmatpush2.bf16.msra.mxu0 0
        %3126 = vmatprep.subr.bf16.mxu0 0
        %3127 = vmatpush2.bf16.msra.mxu0 0
        %3128 = vmatprep.subr.bf16.mxu0 0
        %3129 = vmatpush2.bf16.msra.mxu0 0
        %3130 = vmatprep.subr.bf16.mxu0 0
        %3131 = vmatpush2.bf16.msra.mxu0 0
        %3132 = vmatprep.subr.bf16.mxu0 0
        %3133 = vmatpush2.bf16.msra.mxu0 0
        %3134 = vmatprep.subr.bf16.mxu0 0
        %3135 = vmatpush2.bf16.msra.mxu0 0
        %3136 = vmatprep.subr.bf16.mxu0 0
        %3137 = vmatpush2.bf16.msra.mxu0 0
        %3138 = vmatprep.mubr.bf16.mxu0 0
        %3139 = vmatmul.mubr.bf16.gmra.mxu0 %v3059
        %v3140 = vpop.f32.mrf.mxu0
        %v3141 = vadd.f32 %v1150, %v3140
        %v3142 = vpop.f32.mrf.mxu0
        %v3143 = vpop.f32.mrf.mxu0
        %v3144 = vadd.f32 %v1150, %v3143
        %v3145 = vpop.f32.mrf.mxu0
        %3146 = vmatprep.mubr.bf16.mxu0 0
        %3147 = vmatmul.mubr.bf16.gmra.mxu0 %v3062
        %v3148 = vpop.f32.mrf.mxu0
        %v3149 = vadd.f32 %v1150, %v3148
        %v3150 = vpop.f32.mrf.mxu0
        %v3151 = vpop.f32.mrf.mxu0
        %v3152 = vadd.f32 %v1150, %v3151
        %v3153 = vpop.f32.mrf.mxu0
        %3154 = vmatprep.mubr.bf16.mxu0 0
        %3155 = vmatmul.mubr.bf16.gmra.mxu0 %v3065
        %v3156 = vpop.f32.mrf.mxu0
        %v3157 = vadd.f32 %v1150, %v3156
        %v3158 = vpop.f32.mrf.mxu0
        %v3159 = vpop.f32.mrf.mxu0
        %v3160 = vadd.f32 %v1150, %v3159
        %v3161 = vpop.f32.mrf.mxu0
        %3162 = vmatprep.mubr.bf16.mxu0 0
        %3163 = vmatmul.mubr.bf16.gmra.mxu0 %v3068
        %v3164 = vpop.f32.mrf.mxu0
        %v3165 = vadd.f32 %v1150, %v3164
        %v3166 = vpop.f32.mrf.mxu0
        %v3167 = vpop.f32.mrf.mxu0
        %v3168 = vadd.f32 %v1150, %v3167
        %v3169 = vpop.f32.mrf.mxu0
        %3170 = vmatprep.mubr.bf16.mxu0 0
        %3171 = vmatmul.mubr.bf16.gmra.mxu0 %v3071
        %v3172 = vpop.f32.mrf.mxu0
        %v3173 = vadd.f32 %v1150, %v3172
        %v3174 = vpop.f32.mrf.mxu0
        %v3175 = vpop.f32.mrf.mxu0
        %v3176 = vadd.f32 %v1150, %v3175
        %v3177 = vpop.f32.mrf.mxu0
        %3178 = vmatprep.mubr.bf16.mxu0 0
        %3179 = vmatmul.mubr.bf16.gmra.mxu0 %v3074
        %v3180 = vpop.f32.mrf.mxu0
        %v3181 = vadd.f32 %v1150, %v3180
        %v3182 = vpop.f32.mrf.mxu0
        %v3183 = vpop.f32.mrf.mxu0
        %v3184 = vadd.f32 %v1150, %v3183
        %v3185 = vpop.f32.mrf.mxu0
        %3186 = vmatprep.mubr.bf16.mxu0 0
        %3187 = vmatmul.mubr.bf16.gmra.mxu0 %v3077
        %v3188 = vpop.f32.mrf.mxu0
        %v3189 = vadd.f32 %v1150, %v3188
        %v3190 = vpop.f32.mrf.mxu0
        %v3191 = vpop.f32.mrf.mxu0
        %v3192 = vadd.f32 %v1150, %v3191
        %v3193 = vpop.f32.mrf.mxu0
        %3194 = vmatprep.mubr.bf16.mxu0 0
        %3195 = vmatmul.mubr.bf16.gmra.mxu0 %v3080
        %v3196 = vpop.f32.mrf.mxu0
        %v3197 = vadd.f32 %v1150, %v3196
        %v3198 = vpop.f32.mrf.mxu0
        %v3199 = vpop.f32.mrf.mxu0
        %v3200 = vadd.f32 %v1150, %v3199
        %v3201 = vpop.f32.mrf.mxu0
        %3202 = vmatprep.mubr.bf16.mxu0 0
        %3203 = vmatmul.mubr.bf16.gmra.mxu0 %v3083
        %v3204 = vpop.f32.mrf.mxu0
        %v3205 = vadd.f32 %v1150, %v3204
        %v3206 = vpop.f32.mrf.mxu0
        %v3207 = vpop.f32.mrf.mxu0
        %v3208 = vadd.f32 %v1150, %v3207
        %v3209 = vpop.f32.mrf.mxu0
        %3210 = vmatprep.mubr.bf16.mxu0 0
        %3211 = vmatmul.mubr.bf16.gmra.mxu0 %v3086
        %v3212 = vpop.f32.mrf.mxu0
        %v3213 = vadd.f32 %v1150, %v3212
        %v3214 = vpop.f32.mrf.mxu0
        %v3215 = vpop.f32.mrf.mxu0
        %v3216 = vadd.f32 %v1150, %v3215
        %v3217 = vpop.f32.mrf.mxu0
        %3218 = vmatprep.mubr.bf16.mxu0 0
        %3219 = vmatmul.mubr.bf16.gmra.mxu0 %v3089
        %v3220 = vpop.f32.mrf.mxu0
        %v3221 = vadd.f32 %v1150, %v3220
        %v3222 = vpop.f32.mrf.mxu0
        %v3223 = vpop.f32.mrf.mxu0
        %v3224 = vadd.f32 %v1150, %v3223
        %v3225 = vpop.f32.mrf.mxu0
        %3226 = vmatprep.mubr.bf16.mxu0 0
        %3227 = vmatmul.mubr.bf16.gmra.mxu0 %v3092
        %v3228 = vpop.f32.mrf.mxu0
        %v3229 = vadd.f32 %v1150, %v3228
        %v3230 = vpop.f32.mrf.mxu0
        %v3231 = vpop.f32.mrf.mxu0
        %v3232 = vadd.f32 %v1150, %v3231
        %v3233 = vpop.f32.mrf.mxu0
        %3234 = vmatprep.mubr.bf16.mxu0 0
        %3235 = vmatmul.mubr.bf16.gmra.mxu0 %v3095
        %v3236 = vpop.f32.mrf.mxu0
        %v3237 = vadd.f32 %v1150, %v3236
        %v3238 = vpop.f32.mrf.mxu0
        %v3239 = vpop.f32.mrf.mxu0
        %v3240 = vadd.f32 %v1150, %v3239
        %v3241 = vpop.f32.mrf.mxu0
        %3242 = vmatprep.mubr.bf16.mxu0 0
        %3243 = vmatmul.mubr.bf16.gmra.mxu0 %v3098
        %v3244 = vpop.f32.mrf.mxu0
        %v3245 = vadd.f32 %v1150, %v3244
        %v3246 = vpop.f32.mrf.mxu0
        %v3247 = vpop.f32.mrf.mxu0
        %v3248 = vadd.f32 %v1150, %v3247
        %v3249 = vpop.f32.mrf.mxu0
        %3250 = vmatprep.mubr.bf16.mxu0 0
        %3251 = vmatmul.mubr.bf16.gmra.mxu0 %v3101
        %v3252 = vpop.f32.mrf.mxu0
        %v3253 = vadd.f32 %v1150, %v3252
        %v3254 = vpop.f32.mrf.mxu0
        %v3255 = vpop.f32.mrf.mxu0
        %v3256 = vadd.f32 %v1150, %v3255
        %v3257 = vpop.f32.mrf.mxu0
        %3258 = vmatprep.mubr.bf16.mxu0 0
        %3259 = vmatmul.mubr.bf16.gmra.mxu0 %v3104
        %v3260 = vpop.f32.mrf.mxu0
        %v3261 = vadd.f32 %v1150, %v3260
        %v3262 = vpop.f32.mrf.mxu0
        %v3263 = vpop.f32.mrf.mxu0
        %v3264 = vadd.f32 %v1150, %v3263
        %v3265 = vpop.f32.mrf.mxu0
        %3266 = vdwg.mxu0
        %v3267 = vmax.f32 %v3141, 0.0
        %v3268 = vmax.f32 %v3144, 0.0
        %v3269 = vmax.f32 %v3149, 0.0
        %v3270 = vmax.f32 %v3152, 0.0
        %v3271 = vmax.f32 %v3157, 0.0
        %v3272 = vmax.f32 %v3160, 0.0
        %v3273 = vmax.f32 %v3165, 0.0
        %v3274 = vmax.f32 %v3168, 0.0
        %v3275 = vmax.f32 %v3173, 0.0
        %v3276 = vmax.f32 %v3176, 0.0
        %v3277 = vmax.f32 %v3181, 0.0
        %v3278 = vmax.f32 %v3184, 0.0
        %v3279 = vmax.f32 %v3189, 0.0
        %v3280 = vmax.f32 %v3192, 0.0
        %v3281 = vmax.f32 %v3197, 0.0
        %v3282 = vmax.f32 %v3200, 0.0
        %v3283 = vmax.f32 %v3205, 0.0
        %v3284 = vmax.f32 %v3208, 0.0
        %v3285 = vmax.f32 %v3213, 0.0
        %v3286 = vmax.f32 %v3216, 0.0
        %v3287 = vmax.f32 %v3221, 0.0
        %v3288 = vmax.f32 %v3224, 0.0
        %v3289 = vmax.f32 %v3229, 0.0
        %v3290 = vmax.f32 %v3232, 0.0
        %v3291 = vmax.f32 %v3237, 0.0
        %v3292 = vmax.f32 %v3240, 0.0
        %v3293 = vmax.f32 %v3245, 0.0
        %v3294 = vmax.f32 %v3248, 0.0
        %v3295 = vmax.f32 %v3253, 0.0
        %v3296 = vmax.f32 %v3256, 0.0
        %v3297 = vmax.f32 %v3261, 0.0
        %v3298 = vmax.f32 %v3264, 0.0
        %v3299 = vpack.c.bf16 %v3268, %v3267
        %v3300 = vpack.c.bf16 %v3270, %v3269
        %v3301 = vpack.c.bf16 %v3272, %v3271
        %v3302 = vpack.c.bf16 %v3274, %v3273
        %v3303 = vpack.c.bf16 %v3276, %v3275
        %v3304 = vpack.c.bf16 %v3278, %v3277
        %v3305 = vpack.c.bf16 %v3280, %v3279
        %v3306 = vpack.c.bf16 %v3282, %v3281
        %v3307 = vpack.c.bf16 %v3284, %v3283
        %v3308 = vpack.c.bf16 %v3286, %v3285
        %v3309 = vpack.c.bf16 %v3288, %v3287
        %v3310 = vpack.c.bf16 %v3290, %v3289
        %v3311 = vpack.c.bf16 %v3292, %v3291
        %v3312 = vpack.c.bf16 %v3294, %v3293
        %v3313 = vpack.c.bf16 %v3296, %v3295
        %v3314 = vpack.c.bf16 %v3298, %v3297
        %v3315 = vlaneseq
        %v3316 = vshrl.u32 %v3315, 7
        %v3317 = vsub.s32 0, %v3316
        %v3318 = vrot.slane %v472, %v3317
        %v3321 = vunpack.c.l.b16 %v458
        %v3322 = vunpack.c.l.b16 %v459
        %v3323 = vpack.c.b16 %v3322, %v3321
        %v3326 = vsel %vm1157, %v3299, 0
        %v3329 = vsel %vm1157, %v3300, 0
        %v3332 = vsel %vm1157, %v3301, 0
        %v3335 = vsel %vm1157, %v3302, 0
        %v3338 = vsel %vm1157, %v3303, 0
        %v3341 = vsel %vm1157, %v3304, 0
        %v3344 = vsel %vm1157, %v3305, 0
        %v3347 = vsel %vm1157, %v3306, 0
        %v3350 = vsel %vm1157, %v3307, 0
        %v3353 = vsel %vm1157, %v3308, 0
        %v3356 = vsel %vm1157, %v3309, 0
        %v3359 = vsel %vm1157, %v3310, 0
        %v3362 = vsel %vm1157, %v3311, 0
        %v3365 = vsel %vm1157, %v3312, 0
        %v3368 = vsel %vm1157, %v3313, 0
        %v3371 = vsel %vm1157, %v3314, 0
        %3373 = vmatprep.subr.bf16.mxu0 0
        %3374 = vmatpush1.bf16.msra.mxu0 0
        %3375 = vmatprep.subr.bf16.mxu0 0
        %3376 = vmatpush1.bf16.msra.mxu0 0
        %3377 = vmatprep.subr.bf16.mxu0 0
        %3378 = vmatpush1.bf16.msra.mxu0 0
        %3379 = vmatprep.subr.bf16.mxu0 0
        %3380 = vmatpush1.bf16.msra.mxu0 0
        %3381 = vmatprep.subr.bf16.mxu0 0
        %3382 = vmatpush1.bf16.msra.mxu0 0
        %3383 = vmatprep.subr.bf16.mxu0 0
        %3384 = vmatpush1.bf16.msra.mxu0 0
        %3385 = vmatprep.subr.bf16.mxu0 0
        %3386 = vmatpush1.bf16.msra.mxu0 0
        %3387 = vmatprep.subr.bf16.mxu0 0
        %3388 = vmatpush1.bf16.msra.mxu0 %v3323
        %3389 = vmatprep.subr.bf16.mxu0 0
        %3390 = vmatpush2.bf16.msra.mxu0 0
        %3391 = vmatprep.subr.bf16.mxu0 0
        %3392 = vmatpush2.bf16.msra.mxu0 0
        %3393 = vmatprep.subr.bf16.mxu0 0
        %3394 = vmatpush2.bf16.msra.mxu0 0
        %3395 = vmatprep.subr.bf16.mxu0 0
        %3396 = vmatpush2.bf16.msra.mxu0 0
        %3397 = vmatprep.subr.bf16.mxu0 0
        %3398 = vmatpush2.bf16.msra.mxu0 0
        %3399 = vmatprep.subr.bf16.mxu0 0
        %3400 = vmatpush2.bf16.msra.mxu0 0
        %3401 = vmatprep.subr.bf16.mxu0 0
        %3402 = vmatpush2.bf16.msra.mxu0 0
        %3403 = vmatprep.subr.bf16.mxu0 0
        %3404 = vmatpush2.bf16.msra.mxu0 0
        %3405 = vmatprep.mubr.bf16.mxu0 0
        %3406 = vmatmul.mubr.bf16.gmra.mxu0 %v3326
        %v3407 = vpop.f32.mrf.mxu0
        %v3408 = vadd.f32 %v3318, %v3407
        %v3409 = vpop.f32.mrf.mxu0
        %v3410 = vpop.f32.mrf.mxu0
        %v3411 = vadd.f32 %v3318, %v3410
        %v3412 = vpop.f32.mrf.mxu0
        %3413 = vmatprep.mubr.bf16.mxu0 0
        %3414 = vmatmul.mubr.bf16.gmra.mxu0 %v3329
        %v3415 = vpop.f32.mrf.mxu0
        %v3416 = vadd.f32 %v3318, %v3415
        %v3417 = vpop.f32.mrf.mxu0
        %v3418 = vpop.f32.mrf.mxu0
        %v3419 = vadd.f32 %v3318, %v3418
        %v3420 = vpop.f32.mrf.mxu0
        %3421 = vmatprep.mubr.bf16.mxu0 0
        %3422 = vmatmul.mubr.bf16.gmra.mxu0 %v3332
        %v3423 = vpop.f32.mrf.mxu0
        %v3424 = vadd.f32 %v3318, %v3423
        %v3425 = vpop.f32.mrf.mxu0
        %v3426 = vpop.f32.mrf.mxu0
        %v3427 = vadd.f32 %v3318, %v3426
        %v3428 = vpop.f32.mrf.mxu0
        %3429 = vmatprep.mubr.bf16.mxu0 0
        %3430 = vmatmul.mubr.bf16.gmra.mxu0 %v3335
        %v3431 = vpop.f32.mrf.mxu0
        %v3432 = vadd.f32 %v3318, %v3431
        %v3433 = vpop.f32.mrf.mxu0
        %v3434 = vpop.f32.mrf.mxu0
        %v3435 = vadd.f32 %v3318, %v3434
        %v3436 = vpop.f32.mrf.mxu0
        %3437 = vmatprep.mubr.bf16.mxu0 0
        %3438 = vmatmul.mubr.bf16.gmra.mxu0 %v3338
        %v3439 = vpop.f32.mrf.mxu0
        %v3440 = vadd.f32 %v3318, %v3439
        %v3441 = vpop.f32.mrf.mxu0
        %v3442 = vpop.f32.mrf.mxu0
        %v3443 = vadd.f32 %v3318, %v3442
        %v3444 = vpop.f32.mrf.mxu0
        %3445 = vmatprep.mubr.bf16.mxu0 0
        %3446 = vmatmul.mubr.bf16.gmra.mxu0 %v3341
        %v3447 = vpop.f32.mrf.mxu0
        %v3448 = vadd.f32 %v3318, %v3447
        %v3449 = vpop.f32.mrf.mxu0
        %v3450 = vpop.f32.mrf.mxu0
        %v3451 = vadd.f32 %v3318, %v3450
        %v3452 = vpop.f32.mrf.mxu0
        %3453 = vmatprep.mubr.bf16.mxu0 0
        %3454 = vmatmul.mubr.bf16.gmra.mxu0 %v3344
        %v3455 = vpop.f32.mrf.mxu0
        %v3456 = vadd.f32 %v3318, %v3455
        %v3457 = vpop.f32.mrf.mxu0
        %v3458 = vpop.f32.mrf.mxu0
        %v3459 = vadd.f32 %v3318, %v3458
        %v3460 = vpop.f32.mrf.mxu0
        %3461 = vmatprep.mubr.bf16.mxu0 0
        %3462 = vmatmul.mubr.bf16.gmra.mxu0 %v3347
        %v3463 = vpop.f32.mrf.mxu0
        %v3464 = vadd.f32 %v3318, %v3463
        %v3465 = vpop.f32.mrf.mxu0
        %v3466 = vpop.f32.mrf.mxu0
        %v3467 = vadd.f32 %v3318, %v3466
        %v3468 = vpop.f32.mrf.mxu0
        %3469 = vmatprep.mubr.bf16.mxu0 0
        %3470 = vmatmul.mubr.bf16.gmra.mxu0 %v3350
        %v3471 = vpop.f32.mrf.mxu0
        %v3472 = vadd.f32 %v3318, %v3471
        %v3473 = vpop.f32.mrf.mxu0
        %v3474 = vpop.f32.mrf.mxu0
        %v3475 = vadd.f32 %v3318, %v3474
        %v3476 = vpop.f32.mrf.mxu0
        %3477 = vmatprep.mubr.bf16.mxu0 0
        %3478 = vmatmul.mubr.bf16.gmra.mxu0 %v3353
        %v3479 = vpop.f32.mrf.mxu0
        %v3480 = vadd.f32 %v3318, %v3479
        %v3481 = vpop.f32.mrf.mxu0
        %v3482 = vpop.f32.mrf.mxu0
        %v3483 = vadd.f32 %v3318, %v3482
        %v3484 = vpop.f32.mrf.mxu0
        %3485 = vmatprep.mubr.bf16.mxu0 0
        %3486 = vmatmul.mubr.bf16.gmra.mxu0 %v3356
        %v3487 = vpop.f32.mrf.mxu0
        %v3488 = vadd.f32 %v3318, %v3487
        %v3489 = vpop.f32.mrf.mxu0
        %v3490 = vpop.f32.mrf.mxu0
        %v3491 = vadd.f32 %v3318, %v3490
        %v3492 = vpop.f32.mrf.mxu0
        %3493 = vmatprep.mubr.bf16.mxu0 0
        %3494 = vmatmul.mubr.bf16.gmra.mxu0 %v3359
        %v3495 = vpop.f32.mrf.mxu0
        %v3496 = vadd.f32 %v3318, %v3495
        %v3497 = vpop.f32.mrf.mxu0
        %v3498 = vpop.f32.mrf.mxu0
        %v3499 = vadd.f32 %v3318, %v3498
        %v3500 = vpop.f32.mrf.mxu0
        %3501 = vmatprep.mubr.bf16.mxu0 0
        %3502 = vmatmul.mubr.bf16.gmra.mxu0 %v3362
        %v3503 = vpop.f32.mrf.mxu0
        %v3504 = vadd.f32 %v3318, %v3503
        %v3505 = vpop.f32.mrf.mxu0
        %v3506 = vpop.f32.mrf.mxu0
        %v3507 = vadd.f32 %v3318, %v3506
        %v3508 = vpop.f32.mrf.mxu0
        %3509 = vmatprep.mubr.bf16.mxu0 0
        %3510 = vmatmul.mubr.bf16.gmra.mxu0 %v3365
        %v3511 = vpop.f32.mrf.mxu0
        %v3512 = vadd.f32 %v3318, %v3511
        %v3513 = vpop.f32.mrf.mxu0
        %v3514 = vpop.f32.mrf.mxu0
        %v3515 = vadd.f32 %v3318, %v3514
        %v3516 = vpop.f32.mrf.mxu0
        %3517 = vmatprep.mubr.bf16.mxu0 0
        %3518 = vmatmul.mubr.bf16.gmra.mxu0 %v3368
        %v3519 = vpop.f32.mrf.mxu0
        %v3520 = vadd.f32 %v3318, %v3519
        %v3521 = vpop.f32.mrf.mxu0
        %v3522 = vpop.f32.mrf.mxu0
        %v3523 = vadd.f32 %v3318, %v3522
        %v3524 = vpop.f32.mrf.mxu0
        %3525 = vmatprep.mubr.bf16.mxu0 0
        %3526 = vmatmul.mubr.bf16.gmra.mxu0 %v3371
        %v3527 = vpop.f32.mrf.mxu0
        %v3528 = vadd.f32 %v3318, %v3527
        %v3529 = vpop.f32.mrf.mxu0
        %v3530 = vpop.f32.mrf.mxu0
        %v3531 = vadd.f32 %v3318, %v3530
        %v3532 = vpop.f32.mrf.mxu0
        %3533 = vdwg.mxu0
        %v3534 = vmax.f32 %v3408, 0.0
        %v3535 = vmax.f32 %v3411, 0.0
        %v3536 = vmax.f32 %v3416, 0.0
        %v3537 = vmax.f32 %v3419, 0.0
        %v3538 = vmax.f32 %v3424, 0.0
        %v3539 = vmax.f32 %v3427, 0.0
        %v3540 = vmax.f32 %v3432, 0.0
        %v3541 = vmax.f32 %v3435, 0.0
        %v3542 = vmax.f32 %v3440, 0.0
        %v3543 = vmax.f32 %v3443, 0.0
        %v3544 = vmax.f32 %v3448, 0.0
        %v3545 = vmax.f32 %v3451, 0.0
        %v3546 = vmax.f32 %v3456, 0.0
        %v3547 = vmax.f32 %v3459, 0.0
        %v3548 = vmax.f32 %v3464, 0.0
        %v3549 = vmax.f32 %v3467, 0.0
        %v3550 = vmax.f32 %v3472, 0.0
        %v3551 = vmax.f32 %v3475, 0.0
        %v3552 = vmax.f32 %v3480, 0.0
        %v3553 = vmax.f32 %v3483, 0.0
        %v3554 = vmax.f32 %v3488, 0.0
        %v3555 = vmax.f32 %v3491, 0.0
        %v3556 = vmax.f32 %v3496, 0.0
        %v3557 = vmax.f32 %v3499, 0.0
        %v3558 = vmax.f32 %v3504, 0.0
        %v3559 = vmax.f32 %v3507, 0.0
        %v3560 = vmax.f32 %v3512, 0.0
        %v3561 = vmax.f32 %v3515, 0.0
        %v3562 = vmax.f32 %v3520, 0.0
        %v3563 = vmax.f32 %v3523, 0.0
        %v3564 = vmax.f32 %v3528, 0.0
        %v3565 = vmax.f32 %v3531, 0.0
        %v3566 = vpack.c.bf16 %v3535, %v3534
        %v3567 = vpack.c.bf16 %v3537, %v3536
        %v3568 = vpack.c.bf16 %v3539, %v3538
        %v3569 = vpack.c.bf16 %v3541, %v3540
        %v3570 = vpack.c.bf16 %v3543, %v3542
        %v3571 = vpack.c.bf16 %v3545, %v3544
        %v3572 = vpack.c.bf16 %v3547, %v3546
        %v3573 = vpack.c.bf16 %v3549, %v3548
        %v3574 = vpack.c.bf16 %v3551, %v3550
        %v3575 = vpack.c.bf16 %v3553, %v3552
        %v3576 = vpack.c.bf16 %v3555, %v3554
        %v3577 = vpack.c.bf16 %v3557, %v3556
        %v3578 = vpack.c.bf16 %v3559, %v3558
        %v3579 = vpack.c.bf16 %v3561, %v3560
        %v3580 = vpack.c.bf16 %v3563, %v3562
        %v3581 = vpack.c.bf16 %v3565, %v3564
        %v3582 = vlaneseq
        %v3583 = vshrl.u32 %v3582, 7
        %v3584 = vsub.s32 0, %v3583
        %v3585 = vrot.slane %v473, %v3584
        %v3588 = vunpack.c.l.b16 %v460
        %v3589 = vunpack.c.l.b16 %v461
        %v3590 = vpack.c.b16 %v3589, %v3588
        %v3593 = vsel %vm1157, %v3566, 0
        %v3596 = vsel %vm1157, %v3567, 0
        %v3599 = vsel %vm1157, %v3568, 0
        %v3602 = vsel %vm1157, %v3569, 0
        %v3605 = vsel %vm1157, %v3570, 0
        %v3608 = vsel %vm1157, %v3571, 0
        %v3611 = vsel %vm1157, %v3572, 0
        %v3614 = vsel %vm1157, %v3573, 0
        %v3617 = vsel %vm1157, %v3574, 0
        %v3620 = vsel %vm1157, %v3575, 0
        %v3623 = vsel %vm1157, %v3576, 0
        %v3626 = vsel %vm1157, %v3577, 0
        %v3629 = vsel %vm1157, %v3578, 0
        %v3632 = vsel %vm1157, %v3579, 0
        %v3635 = vsel %vm1157, %v3580, 0
        %v3638 = vsel %vm1157, %v3581, 0
        %3640 = vmatprep.subr.bf16.mxu0 0
        %3641 = vmatpush1.bf16.msra.mxu0 0
        %3642 = vmatprep.subr.bf16.mxu0 0
        %3643 = vmatpush1.bf16.msra.mxu0 0
        %3644 = vmatprep.subr.bf16.mxu0 0
        %3645 = vmatpush1.bf16.msra.mxu0 0
        %3646 = vmatprep.subr.bf16.mxu0 0
        %3647 = vmatpush1.bf16.msra.mxu0 0
        %3648 = vmatprep.subr.bf16.mxu0 0
        %3649 = vmatpush1.bf16.msra.mxu0 0
        %3650 = vmatprep.subr.bf16.mxu0 0
        %3651 = vmatpush1.bf16.msra.mxu0 0
        %3652 = vmatprep.subr.bf16.mxu0 0
        %3653 = vmatpush1.bf16.msra.mxu0 0
        %3654 = vmatprep.subr.bf16.mxu0 0
        %3655 = vmatpush1.bf16.msra.mxu0 %v3590
        %3656 = vmatprep.subr.bf16.mxu0 0
        %3657 = vmatpush2.bf16.msra.mxu0 0
        %3658 = vmatprep.subr.bf16.mxu0 0
        %3659 = vmatpush2.bf16.msra.mxu0 0
        %3660 = vmatprep.subr.bf16.mxu0 0
        %3661 = vmatpush2.bf16.msra.mxu0 0
        %3662 = vmatprep.subr.bf16.mxu0 0
        %3663 = vmatpush2.bf16.msra.mxu0 0
        %3664 = vmatprep.subr.bf16.mxu0 0
        %3665 = vmatpush2.bf16.msra.mxu0 0
        %3666 = vmatprep.subr.bf16.mxu0 0
        %3667 = vmatpush2.bf16.msra.mxu0 0
        %3668 = vmatprep.subr.bf16.mxu0 0
        %3669 = vmatpush2.bf16.msra.mxu0 0
        %3670 = vmatprep.subr.bf16.mxu0 0
        %3671 = vmatpush2.bf16.msra.mxu0 0
        %3672 = vmatprep.mubr.bf16.mxu0 0
        %3673 = vmatmul.mubr.bf16.gmra.mxu0 %v3593
        %v3674 = vpop.f32.mrf.mxu0
        %v3675 = vadd.f32 %v3585, %v3674
        %v3676 = vpop.f32.mrf.mxu0
        %v3677 = vpop.f32.mrf.mxu0
        %v3678 = vadd.f32 %v3585, %v3677
        %v3679 = vpop.f32.mrf.mxu0
        %3680 = vmatprep.mubr.bf16.mxu0 0
        %3681 = vmatmul.mubr.bf16.gmra.mxu0 %v3596
        %v3682 = vpop.f32.mrf.mxu0
        %v3683 = vadd.f32 %v3585, %v3682
        %v3684 = vpop.f32.mrf.mxu0
        %v3685 = vpop.f32.mrf.mxu0
        %v3686 = vadd.f32 %v3585, %v3685
        %v3687 = vpop.f32.mrf.mxu0
        %3688 = vmatprep.mubr.bf16.mxu0 0
        %3689 = vmatmul.mubr.bf16.gmra.mxu0 %v3599
        %v3690 = vpop.f32.mrf.mxu0
        %v3691 = vadd.f32 %v3585, %v3690
        %v3692 = vpop.f32.mrf.mxu0
        %v3693 = vpop.f32.mrf.mxu0
        %v3694 = vadd.f32 %v3585, %v3693
        %v3695 = vpop.f32.mrf.mxu0
        %3696 = vmatprep.mubr.bf16.mxu0 0
        %3697 = vmatmul.mubr.bf16.gmra.mxu0 %v3602
        %v3698 = vpop.f32.mrf.mxu0
        %v3699 = vadd.f32 %v3585, %v3698
        %v3700 = vpop.f32.mrf.mxu0
        %v3701 = vpop.f32.mrf.mxu0
        %v3702 = vadd.f32 %v3585, %v3701
        %v3703 = vpop.f32.mrf.mxu0
        %3704 = vmatprep.mubr.bf16.mxu0 0
        %3705 = vmatmul.mubr.bf16.gmra.mxu0 %v3605
        %v3706 = vpop.f32.mrf.mxu0
        %v3707 = vadd.f32 %v3585, %v3706
        %v3708 = vpop.f32.mrf.mxu0
        %v3709 = vpop.f32.mrf.mxu0
        %v3710 = vadd.f32 %v3585, %v3709
        %v3711 = vpop.f32.mrf.mxu0
        %3712 = vmatprep.mubr.bf16.mxu0 0
        %3713 = vmatmul.mubr.bf16.gmra.mxu0 %v3608
        %v3714 = vpop.f32.mrf.mxu0
        %v3715 = vadd.f32 %v3585, %v3714
        %v3716 = vpop.f32.mrf.mxu0
        %v3717 = vpop.f32.mrf.mxu0
        %v3718 = vadd.f32 %v3585, %v3717
        %v3719 = vpop.f32.mrf.mxu0
        %3720 = vmatprep.mubr.bf16.mxu0 0
        %3721 = vmatmul.mubr.bf16.gmra.mxu0 %v3611
        %v3722 = vpop.f32.mrf.mxu0
        %v3723 = vadd.f32 %v3585, %v3722
        %v3724 = vpop.f32.mrf.mxu0
        %v3725 = vpop.f32.mrf.mxu0
        %v3726 = vadd.f32 %v3585, %v3725
        %v3727 = vpop.f32.mrf.mxu0
        %3728 = vmatprep.mubr.bf16.mxu0 0
        %3729 = vmatmul.mubr.bf16.gmra.mxu0 %v3614
        %v3730 = vpop.f32.mrf.mxu0
        %v3731 = vadd.f32 %v3585, %v3730
        %v3732 = vpop.f32.mrf.mxu0
        %v3733 = vpop.f32.mrf.mxu0
        %v3734 = vadd.f32 %v3585, %v3733
        %v3735 = vpop.f32.mrf.mxu0
        %3736 = vmatprep.mubr.bf16.mxu0 0
        %3737 = vmatmul.mubr.bf16.gmra.mxu0 %v3617
        %v3738 = vpop.f32.mrf.mxu0
        %v3739 = vadd.f32 %v3585, %v3738
        %v3740 = vpop.f32.mrf.mxu0
        %v3741 = vpop.f32.mrf.mxu0
        %v3742 = vadd.f32 %v3585, %v3741
        %v3743 = vpop.f32.mrf.mxu0
        %3744 = vmatprep.mubr.bf16.mxu0 0
        %3745 = vmatmul.mubr.bf16.gmra.mxu0 %v3620
        %v3746 = vpop.f32.mrf.mxu0
        %v3747 = vadd.f32 %v3585, %v3746
        %v3748 = vpop.f32.mrf.mxu0
        %v3749 = vpop.f32.mrf.mxu0
        %v3750 = vadd.f32 %v3585, %v3749
        %v3751 = vpop.f32.mrf.mxu0
        %3752 = vmatprep.mubr.bf16.mxu0 0
        %3753 = vmatmul.mubr.bf16.gmra.mxu0 %v3623
        %v3754 = vpop.f32.mrf.mxu0
        %v3755 = vadd.f32 %v3585, %v3754
        %v3756 = vpop.f32.mrf.mxu0
        %v3757 = vpop.f32.mrf.mxu0
        %v3758 = vadd.f32 %v3585, %v3757
        %v3759 = vpop.f32.mrf.mxu0
        %3760 = vmatprep.mubr.bf16.mxu0 0
        %3761 = vmatmul.mubr.bf16.gmra.mxu0 %v3626
        %v3762 = vpop.f32.mrf.mxu0
        %v3763 = vadd.f32 %v3585, %v3762
        %v3764 = vpop.f32.mrf.mxu0
        %v3765 = vpop.f32.mrf.mxu0
        %v3766 = vadd.f32 %v3585, %v3765
        %v3767 = vpop.f32.mrf.mxu0
        %3768 = vmatprep.mubr.bf16.mxu0 0
        %3769 = vmatmul.mubr.bf16.gmra.mxu0 %v3629
        %v3770 = vpop.f32.mrf.mxu0
        %v3771 = vadd.f32 %v3585, %v3770
        %v3772 = vpop.f32.mrf.mxu0
        %v3773 = vpop.f32.mrf.mxu0
        %v3774 = vadd.f32 %v3585, %v3773
        %v3775 = vpop.f32.mrf.mxu0
        %3776 = vmatprep.mubr.bf16.mxu0 0
        %3777 = vmatmul.mubr.bf16.gmra.mxu0 %v3632
        %v3778 = vpop.f32.mrf.mxu0
        %v3779 = vadd.f32 %v3585, %v3778
        %v3780 = vpop.f32.mrf.mxu0
        %v3781 = vpop.f32.mrf.mxu0
        %v3782 = vadd.f32 %v3585, %v3781
        %v3783 = vpop.f32.mrf.mxu0
        %3784 = vmatprep.mubr.bf16.mxu0 0
        %3785 = vmatmul.mubr.bf16.gmra.mxu0 %v3635
        %v3786 = vpop.f32.mrf.mxu0
        %v3787 = vadd.f32 %v3585, %v3786
        %v3788 = vpop.f32.mrf.mxu0
        %v3789 = vpop.f32.mrf.mxu0
        %v3790 = vadd.f32 %v3585, %v3789
        %v3791 = vpop.f32.mrf.mxu0
        %3792 = vmatprep.mubr.bf16.mxu0 0
        %3793 = vmatmul.mubr.bf16.gmra.mxu0 %v3638
        %v3794 = vpop.f32.mrf.mxu0
        %v3795 = vadd.f32 %v3585, %v3794
        %v3796 = vpop.f32.mrf.mxu0
        %v3797 = vpop.f32.mrf.mxu0
        %v3798 = vadd.f32 %v3585, %v3797
        %v3799 = vpop.f32.mrf.mxu0
        %3800 = vdwg.mxu0
        %v3801 = vmax.f32 %v3675, 0.0
        %v3802 = vmax.f32 %v3678, 0.0
        %v3803 = vmax.f32 %v3683, 0.0
        %v3804 = vmax.f32 %v3686, 0.0
        %v3805 = vmax.f32 %v3691, 0.0
        %v3806 = vmax.f32 %v3694, 0.0
        %v3807 = vmax.f32 %v3699, 0.0
        %v3808 = vmax.f32 %v3702, 0.0
        %v3809 = vmax.f32 %v3707, 0.0
        %v3810 = vmax.f32 %v3710, 0.0
        %v3811 = vmax.f32 %v3715, 0.0
        %v3812 = vmax.f32 %v3718, 0.0
        %v3813 = vmax.f32 %v3723, 0.0
        %v3814 = vmax.f32 %v3726, 0.0
        %v3815 = vmax.f32 %v3731, 0.0
        %v3816 = vmax.f32 %v3734, 0.0
        %v3817 = vmax.f32 %v3739, 0.0
        %v3818 = vmax.f32 %v3742, 0.0
        %v3819 = vmax.f32 %v3747, 0.0
        %v3820 = vmax.f32 %v3750, 0.0
        %v3821 = vmax.f32 %v3755, 0.0
        %v3822 = vmax.f32 %v3758, 0.0
        %v3823 = vmax.f32 %v3763, 0.0
        %v3824 = vmax.f32 %v3766, 0.0
        %v3825 = vmax.f32 %v3771, 0.0
        %v3826 = vmax.f32 %v3774, 0.0
        %v3827 = vmax.f32 %v3779, 0.0
        %v3828 = vmax.f32 %v3782, 0.0
        %v3829 = vmax.f32 %v3787, 0.0
        %v3830 = vmax.f32 %v3790, 0.0
        %v3831 = vmax.f32 %v3795, 0.0
        %v3832 = vmax.f32 %v3798, 0.0
        %v3833 = vpack.c.bf16 %v3802, %v3801
        %v3834 = vpack.c.bf16 %v3804, %v3803
        %v3835 = vpack.c.bf16 %v3806, %v3805
        %v3836 = vpack.c.bf16 %v3808, %v3807
        %v3837 = vpack.c.bf16 %v3810, %v3809
        %v3838 = vpack.c.bf16 %v3812, %v3811
        %v3839 = vpack.c.bf16 %v3814, %v3813
        %v3840 = vpack.c.bf16 %v3816, %v3815
        %v3841 = vpack.c.bf16 %v3818, %v3817
        %v3842 = vpack.c.bf16 %v3820, %v3819
        %v3843 = vpack.c.bf16 %v3822, %v3821
        %v3844 = vpack.c.bf16 %v3824, %v3823
        %v3845 = vpack.c.bf16 %v3826, %v3825
        %v3846 = vpack.c.bf16 %v3828, %v3827
        %v3847 = vpack.c.bf16 %v3830, %v3829
        %v3848 = vpack.c.bf16 %v3832, %v3831
        %v3849 = vlaneseq
        %v3850 = vshrl.u32 %v3849, 7
        %v3851 = vsub.s32 0, %v3850
        %v3852 = vrot.slane %v474, %v3851
        %v3857 = vunpack.c.l.b16 %v462
        %v3858 = vunpack.c.l.b16 %v463
        %v3859 = vunpack.c.l.b16 %v464
        %v3860 = vunpack.c.l.b16 %v465
        %v3861 = vpack.c.b16 %v3858, %v3857
        %v3862 = vpack.c.b16 %v3860, %v3859
        %v3866 = vsel %vm889, %v3833, 0
        %v3869 = vsel %vm889, %v3834, 0
        %v3872 = vsel %vm889, %v3835, 0
        %v3875 = vsel %vm889, %v3836, 0
        %v3878 = vsel %vm889, %v3837, 0
        %v3881 = vsel %vm889, %v3838, 0
        %v3884 = vsel %vm889, %v3839, 0
        %v3887 = vsel %vm889, %v3840, 0
        %v3890 = vsel %vm889, %v3841, 0
        %v3893 = vsel %vm889, %v3842, 0
        %v3896 = vsel %vm889, %v3843, 0
        %v3899 = vsel %vm889, %v3844, 0
        %v3902 = vsel %vm889, %v3845, 0
        %v3905 = vsel %vm889, %v3846, 0
        %v3908 = vsel %vm889, %v3847, 0
        %v3911 = vsel %vm889, %v3848, 0
        %3913 = vmatprep.subr.bf16.mxu0 0
        %3914 = vmatpush1.bf16.msra.mxu0 0
        %3915 = vmatprep.subr.bf16.mxu0 0
        %3916 = vmatpush1.bf16.msra.mxu0 0
        %3917 = vmatprep.subr.bf16.mxu0 0
        %3918 = vmatpush1.bf16.msra.mxu0 0
        %3919 = vmatprep.subr.bf16.mxu0 0
        %3920 = vmatpush1.bf16.msra.mxu0 0
        %3921 = vmatprep.subr.bf16.mxu0 0
        %3922 = vmatpush1.bf16.msra.mxu0 0
        %3923 = vmatprep.subr.bf16.mxu0 0
        %3924 = vmatpush1.bf16.msra.mxu0 0
        %3925 = vmatprep.subr.bf16.mxu0 0
        %3926 = vmatpush1.bf16.msra.mxu0 %v3862
        %3927 = vmatprep.subr.bf16.mxu0 0
        %3928 = vmatpush1.bf16.msra.mxu0 %v3861
        %3929 = vmatprep.subr.bf16.mxu0 0
        %3930 = vmatpush2.bf16.msra.mxu0 0
        %3931 = vmatprep.subr.bf16.mxu0 0
        %3932 = vmatpush2.bf16.msra.mxu0 0
        %3933 = vmatprep.subr.bf16.mxu0 0
        %3934 = vmatpush2.bf16.msra.mxu0 0
        %3935 = vmatprep.subr.bf16.mxu0 0
        %3936 = vmatpush2.bf16.msra.mxu0 0
        %3937 = vmatprep.subr.bf16.mxu0 0
        %3938 = vmatpush2.bf16.msra.mxu0 0
        %3939 = vmatprep.subr.bf16.mxu0 0
        %3940 = vmatpush2.bf16.msra.mxu0 0
        %3941 = vmatprep.subr.bf16.mxu0 0
        %3942 = vmatpush2.bf16.msra.mxu0 0
        %3943 = vmatprep.subr.bf16.mxu0 0
        %3944 = vmatpush2.bf16.msra.mxu0 0
        %3945 = vmatprep.mubr.bf16.mxu0 0
        %3946 = vmatmul.mubr.bf16.gmra.mxu0 %v3866
        %v3947 = vpop.f32.mrf.mxu0
        %v3948 = vadd.f32 %v3852, %v3947
        %v3949 = vpop.f32.mrf.mxu0
        %v3950 = vpop.f32.mrf.mxu0
        %v3951 = vadd.f32 %v3852, %v3950
        %v3952 = vpop.f32.mrf.mxu0
        %3953 = vmatprep.mubr.bf16.mxu0 0
        %3954 = vmatmul.mubr.bf16.gmra.mxu0 %v3869
        %v3955 = vpop.f32.mrf.mxu0
        %v3956 = vadd.f32 %v3852, %v3955
        %v3957 = vpop.f32.mrf.mxu0
        %v3958 = vpop.f32.mrf.mxu0
        %v3959 = vadd.f32 %v3852, %v3958
        %v3960 = vpop.f32.mrf.mxu0
        %3961 = vmatprep.mubr.bf16.mxu0 0
        %3962 = vmatmul.mubr.bf16.gmra.mxu0 %v3872
        %v3963 = vpop.f32.mrf.mxu0
        %v3964 = vadd.f32 %v3852, %v3963
        %v3965 = vpop.f32.mrf.mxu0
        %v3966 = vpop.f32.mrf.mxu0
        %v3967 = vadd.f32 %v3852, %v3966
        %v3968 = vpop.f32.mrf.mxu0
        %3969 = vmatprep.mubr.bf16.mxu0 0
        %3970 = vmatmul.mubr.bf16.gmra.mxu0 %v3875
        %v3971 = vpop.f32.mrf.mxu0
        %v3972 = vadd.f32 %v3852, %v3971
        %v3973 = vpop.f32.mrf.mxu0
        %v3974 = vpop.f32.mrf.mxu0
        %v3975 = vadd.f32 %v3852, %v3974
        %v3976 = vpop.f32.mrf.mxu0
        %3977 = vmatprep.mubr.bf16.mxu0 0
        %3978 = vmatmul.mubr.bf16.gmra.mxu0 %v3878
        %v3979 = vpop.f32.mrf.mxu0
        %v3980 = vadd.f32 %v3852, %v3979
        %v3981 = vpop.f32.mrf.mxu0
        %v3982 = vpop.f32.mrf.mxu0
        %v3983 = vadd.f32 %v3852, %v3982
        %v3984 = vpop.f32.mrf.mxu0
        %3985 = vmatprep.mubr.bf16.mxu0 0
        %3986 = vmatmul.mubr.bf16.gmra.mxu0 %v3881
        %v3987 = vpop.f32.mrf.mxu0
        %v3988 = vadd.f32 %v3852, %v3987
        %v3989 = vpop.f32.mrf.mxu0
        %v3990 = vpop.f32.mrf.mxu0
        %v3991 = vadd.f32 %v3852, %v3990
        %v3992 = vpop.f32.mrf.mxu0
        %3993 = vmatprep.mubr.bf16.mxu0 0
        %3994 = vmatmul.mubr.bf16.gmra.mxu0 %v3884
        %v3995 = vpop.f32.mrf.mxu0
        %v3996 = vadd.f32 %v3852, %v3995
        %v3997 = vpop.f32.mrf.mxu0
        %v3998 = vpop.f32.mrf.mxu0
        %v3999 = vadd.f32 %v3852, %v3998
        %v4000 = vpop.f32.mrf.mxu0
        %4001 = vmatprep.mubr.bf16.mxu0 0
        %4002 = vmatmul.mubr.bf16.gmra.mxu0 %v3887
        %v4003 = vpop.f32.mrf.mxu0
        %v4004 = vadd.f32 %v3852, %v4003
        %v4005 = vpop.f32.mrf.mxu0
        %v4006 = vpop.f32.mrf.mxu0
        %v4007 = vadd.f32 %v3852, %v4006
        %v4008 = vpop.f32.mrf.mxu0
        %4009 = vmatprep.mubr.bf16.mxu0 0
        %4010 = vmatmul.mubr.bf16.gmra.mxu0 %v3890
        %v4011 = vpop.f32.mrf.mxu0
        %v4012 = vadd.f32 %v3852, %v4011
        %v4013 = vpop.f32.mrf.mxu0
        %v4014 = vpop.f32.mrf.mxu0
        %v4015 = vadd.f32 %v3852, %v4014
        %v4016 = vpop.f32.mrf.mxu0
        %4017 = vmatprep.mubr.bf16.mxu0 0
        %4018 = vmatmul.mubr.bf16.gmra.mxu0 %v3893
        %v4019 = vpop.f32.mrf.mxu0
        %v4020 = vadd.f32 %v3852, %v4019
        %v4021 = vpop.f32.mrf.mxu0
        %v4022 = vpop.f32.mrf.mxu0
        %v4023 = vadd.f32 %v3852, %v4022
        %v4024 = vpop.f32.mrf.mxu0
        %4025 = vmatprep.mubr.bf16.mxu0 0
        %4026 = vmatmul.mubr.bf16.gmra.mxu0 %v3896
        %v4027 = vpop.f32.mrf.mxu0
        %v4028 = vadd.f32 %v3852, %v4027
        %v4029 = vpop.f32.mrf.mxu0
        %v4030 = vpop.f32.mrf.mxu0
        %v4031 = vadd.f32 %v3852, %v4030
        %v4032 = vpop.f32.mrf.mxu0
        %4033 = vmatprep.mubr.bf16.mxu0 0
        %4034 = vmatmul.mubr.bf16.gmra.mxu0 %v3899
        %v4035 = vpop.f32.mrf.mxu0
        %v4036 = vadd.f32 %v3852, %v4035
        %v4037 = vpop.f32.mrf.mxu0
        %v4038 = vpop.f32.mrf.mxu0
        %v4039 = vadd.f32 %v3852, %v4038
        %v4040 = vpop.f32.mrf.mxu0
        %4041 = vmatprep.mubr.bf16.mxu0 0
        %4042 = vmatmul.mubr.bf16.gmra.mxu0 %v3902
        %v4043 = vpop.f32.mrf.mxu0
        %v4044 = vadd.f32 %v3852, %v4043
        %v4045 = vpop.f32.mrf.mxu0
        %v4046 = vpop.f32.mrf.mxu0
        %v4047 = vadd.f32 %v3852, %v4046
        %v4048 = vpop.f32.mrf.mxu0
        %4049 = vmatprep.mubr.bf16.mxu0 0
        %4050 = vmatmul.mubr.bf16.gmra.mxu0 %v3905
        %v4051 = vpop.f32.mrf.mxu0
        %v4052 = vadd.f32 %v3852, %v4051
        %v4053 = vpop.f32.mrf.mxu0
        %v4054 = vpop.f32.mrf.mxu0
        %v4055 = vadd.f32 %v3852, %v4054
        %v4056 = vpop.f32.mrf.mxu0
        %4057 = vmatprep.mubr.bf16.mxu0 0
        %4058 = vmatmul.mubr.bf16.gmra.mxu0 %v3908
        %v4059 = vpop.f32.mrf.mxu0
        %v4060 = vadd.f32 %v3852, %v4059
        %v4061 = vpop.f32.mrf.mxu0
        %v4062 = vpop.f32.mrf.mxu0
        %v4063 = vadd.f32 %v3852, %v4062
        %v4064 = vpop.f32.mrf.mxu0
        %4065 = vmatprep.mubr.bf16.mxu0 0
        %4066 = vmatmul.mubr.bf16.gmra.mxu0 %v3911
        %v4067 = vpop.f32.mrf.mxu0
        %v4068 = vadd.f32 %v3852, %v4067
        %v4069 = vpop.f32.mrf.mxu0
        %v4070 = vpop.f32.mrf.mxu0
        %v4071 = vadd.f32 %v3852, %v4070
        %v4072 = vpop.f32.mrf.mxu0
        %4073 = vdwg.mxu0
        %v4074 = vxor.u32 %v3948, 2147483648
        %v4075 = vxor.u32 %v3951, 2147483648
        %v4076 = vxor.u32 %v3956, 2147483648
        %v4077 = vxor.u32 %v3959, 2147483648
        %v4078 = vxor.u32 %v3964, 2147483648
        %v4079 = vxor.u32 %v3967, 2147483648
        %v4080 = vxor.u32 %v3972, 2147483648
        %v4081 = vxor.u32 %v3975, 2147483648
        %v4082 = vxor.u32 %v3980, 2147483648
        %v4083 = vxor.u32 %v3983, 2147483648
        %v4084 = vxor.u32 %v3988, 2147483648
        %v4085 = vxor.u32 %v3991, 2147483648
        %v4086 = vxor.u32 %v3996, 2147483648
        %v4087 = vxor.u32 %v3999, 2147483648
        %v4088 = vxor.u32 %v4004, 2147483648
        %v4089 = vxor.u32 %v4007, 2147483648
        %v4090 = vxor.u32 %v4012, 2147483648
        %v4091 = vxor.u32 %v4015, 2147483648
        %v4092 = vxor.u32 %v4020, 2147483648
        %v4093 = vxor.u32 %v4023, 2147483648
        %v4094 = vxor.u32 %v4028, 2147483648
        %v4095 = vxor.u32 %v4031, 2147483648
        %v4096 = vxor.u32 %v4036, 2147483648
        %v4097 = vxor.u32 %v4039, 2147483648
        %v4098 = vxor.u32 %v4044, 2147483648
        %v4099 = vxor.u32 %v4047, 2147483648
        %v4100 = vxor.u32 %v4052, 2147483648
        %v4101 = vxor.u32 %v4055, 2147483648
        %v4102 = vxor.u32 %v4060, 2147483648
        %v4103 = vxor.u32 %v4063, 2147483648
        %v4104 = vxor.u32 %v4068, 2147483648
        %v4105 = vxor.u32 %v4071, 2147483648
        %v4106 = vmul.f32 %v4074, 1.442695
        %v4107 = vpow.pop %v4106
        %v4108 = vmul.f32 %v4075, 1.442695
        %v4109 = vpow.pop %v4108
        %v4110 = vmul.f32 %v4076, 1.442695
        %v4111 = vpow.pop %v4110
        %v4112 = vmul.f32 %v4077, 1.442695
        %v4113 = vpow.pop %v4112
        %v4114 = vmul.f32 %v4078, 1.442695
        %v4115 = vpow.pop %v4114
        %v4116 = vmul.f32 %v4079, 1.442695
        %v4117 = vpow.pop %v4116
        %v4118 = vmul.f32 %v4080, 1.442695
        %v4119 = vpow.pop %v4118
        %v4120 = vmul.f32 %v4081, 1.442695
        %v4121 = vpow.pop %v4120
        %v4122 = vmul.f32 %v4082, 1.442695
        %v4123 = vpow.pop %v4122
        %v4124 = vmul.f32 %v4083, 1.442695
        %v4125 = vpow.pop %v4124
        %v4126 = vmul.f32 %v4084, 1.442695
        %v4127 = vpow.pop %v4126
        %v4128 = vmul.f32 %v4085, 1.442695
        %v4129 = vpow.pop %v4128
        %v4130 = vmul.f32 %v4086, 1.442695
        %v4131 = vpow.pop %v4130
        %v4132 = vmul.f32 %v4087, 1.442695
        %v4133 = vpow.pop %v4132
        %v4134 = vmul.f32 %v4088, 1.442695
        %v4135 = vpow.pop %v4134
        %v4136 = vmul.f32 %v4089, 1.442695
        %v4137 = vpow.pop %v4136
        %v4138 = vmul.f32 %v4090, 1.442695
        %v4139 = vpow.pop %v4138
        %v4140 = vmul.f32 %v4091, 1.442695
        %v4141 = vpow.pop %v4140
        %v4142 = vmul.f32 %v4092, 1.442695
        %v4143 = vpow.pop %v4142
        %v4144 = vmul.f32 %v4093, 1.442695
        %v4145 = vpow.pop %v4144
        %v4146 = vmul.f32 %v4094, 1.442695
        %v4147 = vpow.pop %v4146
        %v4148 = vmul.f32 %v4095, 1.442695
        %v4149 = vpow.pop %v4148
        %v4150 = vmul.f32 %v4096, 1.442695
        %v4151 = vpow.pop %v4150
        %v4152 = vmul.f32 %v4097, 1.442695
        %v4153 = vpow.pop %v4152
        %v4154 = vmul.f32 %v4098, 1.442695
        %v4155 = vpow.pop %v4154
        %v4156 = vmul.f32 %v4099, 1.442695
        %v4157 = vpow.pop %v4156
        %v4158 = vmul.f32 %v4100, 1.442695
        %v4159 = vpow.pop %v4158
        %v4160 = vmul.f32 %v4101, 1.442695
        %v4161 = vpow.pop %v4160
        %v4162 = vmul.f32 %v4102, 1.442695
        %v4163 = vpow.pop %v4162
        %v4164 = vmul.f32 %v4103, 1.442695
        %v4165 = vpow.pop %v4164
        %v4166 = vmul.f32 %v4104, 1.442695
        %v4167 = vpow.pop %v4166
        %v4168 = vmul.f32 %v4105, 1.442695
        %v4169 = vpow.pop %v4168
        %v4170 = vadd.f32 %v4107, 1.0
        %v4171 = vadd.f32 %v4109, 1.0
        %v4172 = vadd.f32 %v4111, 1.0
        %v4173 = vadd.f32 %v4113, 1.0
        %v4174 = vadd.f32 %v4115, 1.0
        %v4175 = vadd.f32 %v4117, 1.0
        %v4176 = vadd.f32 %v4119, 1.0
        %v4177 = vadd.f32 %v4121, 1.0
        %v4178 = vadd.f32 %v4123, 1.0
        %v4179 = vadd.f32 %v4125, 1.0
        %v4180 = vadd.f32 %v4127, 1.0
        %v4181 = vadd.f32 %v4129, 1.0
        %v4182 = vadd.f32 %v4131, 1.0
        %v4183 = vadd.f32 %v4133, 1.0
        %v4184 = vadd.f32 %v4135, 1.0
        %v4185 = vadd.f32 %v4137, 1.0
        %v4186 = vadd.f32 %v4139, 1.0
        %v4187 = vadd.f32 %v4141, 1.0
        %v4188 = vadd.f32 %v4143, 1.0
        %v4189 = vadd.f32 %v4145, 1.0
        %v4190 = vadd.f32 %v4147, 1.0
        %v4191 = vadd.f32 %v4149, 1.0
        %v4192 = vadd.f32 %v4151, 1.0
        %v4193 = vadd.f32 %v4153, 1.0
        %v4194 = vadd.f32 %v4155, 1.0
        %v4195 = vadd.f32 %v4157, 1.0
        %v4196 = vadd.f32 %v4159, 1.0
        %v4197 = vadd.f32 %v4161, 1.0
        %v4198 = vadd.f32 %v4163, 1.0
        %v4199 = vadd.f32 %v4165, 1.0
        %v4200 = vadd.f32 %v4167, 1.0
        %v4201 = vadd.f32 %v4169, 1.0
        %v4202 = vrcp.pop %v4170
        %v4203 = vmul.f32 1.0, %v4202
        %v4204 = vrcp.pop %v4171
        %v4205 = vmul.f32 1.0, %v4204
        %v4206 = vrcp.pop %v4172
        %v4207 = vmul.f32 1.0, %v4206
        %v4208 = vrcp.pop %v4173
        %v4209 = vmul.f32 1.0, %v4208
        %v4210 = vrcp.pop %v4174
        %v4211 = vmul.f32 1.0, %v4210
        %v4212 = vrcp.pop %v4175
        %v4213 = vmul.f32 1.0, %v4212
        %v4214 = vrcp.pop %v4176
        %v4215 = vmul.f32 1.0, %v4214
        %v4216 = vrcp.pop %v4177
        %v4217 = vmul.f32 1.0, %v4216
        %v4218 = vrcp.pop %v4178
        %v4219 = vmul.f32 1.0, %v4218
        %v4220 = vrcp.pop %v4179
        %v4221 = vmul.f32 1.0, %v4220
        %v4222 = vrcp.pop %v4180
        %v4223 = vmul.f32 1.0, %v4222
        %v4224 = vrcp.pop %v4181
        %v4225 = vmul.f32 1.0, %v4224
        %v4226 = vrcp.pop %v4182
        %v4227 = vmul.f32 1.0, %v4226
        %v4228 = vrcp.pop %v4183
        %v4229 = vmul.f32 1.0, %v4228
        %v4230 = vrcp.pop %v4184
        %v4231 = vmul.f32 1.0, %v4230
        %v4232 = vrcp.pop %v4185
        %v4233 = vmul.f32 1.0, %v4232
        %v4234 = vrcp.pop %v4186
        %v4235 = vmul.f32 1.0, %v4234
        %v4236 = vrcp.pop %v4187
        %v4237 = vmul.f32 1.0, %v4236
        %v4238 = vrcp.pop %v4188
        %v4239 = vmul.f32 1.0, %v4238
        %v4240 = vrcp.pop %v4189
        %v4241 = vmul.f32 1.0, %v4240
        %v4242 = vrcp.pop %v4190
        %v4243 = vmul.f32 1.0, %v4242
        %v4244 = vrcp.pop %v4191
        %v4245 = vmul.f32 1.0, %v4244
        %v4246 = vrcp.pop %v4192
        %v4247 = vmul.f32 1.0, %v4246
        %v4248 = vrcp.pop %v4193
        %v4249 = vmul.f32 1.0, %v4248
        %v4250 = vrcp.pop %v4194
        %v4251 = vmul.f32 1.0, %v4250
        %v4252 = vrcp.pop %v4195
        %v4253 = vmul.f32 1.0, %v4252
        %v4254 = vrcp.pop %v4196
        %v4255 = vmul.f32 1.0, %v4254
        %v4256 = vrcp.pop %v4197
        %v4257 = vmul.f32 1.0, %v4256
        %v4258 = vrcp.pop %v4198
        %v4259 = vmul.f32 1.0, %v4258
        %v4260 = vrcp.pop %v4199
        %v4261 = vmul.f32 1.0, %v4260
        %v4262 = vrcp.pop %v4200
        %v4263 = vmul.f32 1.0, %v4262
        %v4264 = vrcp.pop %v4201
        %v4265 = vmul.f32 1.0, %v4264
        %v4266 = vpack.c.bf16 %v4205, %v4203
        %v4267 = vpack.c.bf16 %v4209, %v4207
        %v4268 = vpack.c.bf16 %v4213, %v4211
        %v4269 = vpack.c.bf16 %v4217, %v4215
        %v4270 = vpack.c.bf16 %v4221, %v4219
        %v4271 = vpack.c.bf16 %v4225, %v4223
        %v4272 = vpack.c.bf16 %v4229, %v4227
        %v4273 = vpack.c.bf16 %v4233, %v4231
        %v4274 = vpack.c.bf16 %v4237, %v4235
        %v4275 = vpack.c.bf16 %v4241, %v4239
        %v4276 = vpack.c.bf16 %v4245, %v4243
        %v4277 = vpack.c.bf16 %v4249, %v4247
        %v4278 = vpack.c.bf16 %v4253, %v4251
        %v4279 = vpack.c.bf16 %v4257, %v4255
        %v4280 = vpack.c.bf16 %v4261, %v4259
        %v4281 = vpack.c.bf16 %v4265, %v4263
        %v4298 = vunpack.c.l.b16 %v4266
        %v4299 = vunpack.c.h.b16 %v4266
        %v4300 = vunpack.c.l.b16 %v4267
        %v4301 = vunpack.c.h.b16 %v4267
        %v4302 = vunpack.c.l.b16 %v4268
        %v4303 = vunpack.c.h.b16 %v4268
        %v4304 = vunpack.c.l.b16 %v4269
        %v4305 = vunpack.c.h.b16 %v4269
        %v4306 = vunpack.c.l.b16 %v4270
        %v4307 = vunpack.c.h.b16 %v4270
        %v4308 = vunpack.c.l.b16 %v4271
        %v4309 = vunpack.c.h.b16 %v4271
        %v4310 = vunpack.c.l.b16 %v4272
        %v4311 = vunpack.c.h.b16 %v4272
        %v4312 = vunpack.c.l.b16 %v4273
        %v4313 = vunpack.c.h.b16 %v4273
        %v4314 = vunpack.c.l.b16 %v4274
        %v4315 = vunpack.c.h.b16 %v4274
        %v4316 = vunpack.c.l.b16 %v4275
        %v4317 = vunpack.c.h.b16 %v4275
        %v4318 = vunpack.c.l.b16 %v4276
        %v4319 = vunpack.c.h.b16 %v4276
        %v4320 = vunpack.c.l.b16 %v4277
        %v4321 = vunpack.c.h.b16 %v4277
        %v4322 = vunpack.c.l.b16 %v4278
        %v4323 = vunpack.c.h.b16 %v4278
        %v4324 = vunpack.c.l.b16 %v4279
        %v4325 = vunpack.c.h.b16 %v4279
        %v4326 = vunpack.c.l.b16 %v4280
        %v4327 = vunpack.c.h.b16 %v4280
        %v4328 = vunpack.c.l.b16 %v4281
        %v4329 = vunpack.c.h.b16 %v4281
        %v4330 = vpack.c.b16 %v4298, %v4298
        %v4331 = vpack.c.b16 %v4299, %v4299
        %v4332 = vpack.c.b16 %v4300, %v4300
        %v4333 = vpack.c.b16 %v4301, %v4301
        %v4334 = vpack.c.b16 %v4302, %v4302
        %v4335 = vpack.c.b16 %v4303, %v4303
        %v4336 = vpack.c.b16 %v4304, %v4304
        %v4337 = vpack.c.b16 %v4305, %v4305
        %v4338 = vpack.c.b16 %v4306, %v4306
        %v4339 = vpack.c.b16 %v4307, %v4307
        %v4340 = vpack.c.b16 %v4308, %v4308
        %v4341 = vpack.c.b16 %v4309, %v4309
        %v4342 = vpack.c.b16 %v4310, %v4310
        %v4343 = vpack.c.b16 %v4311, %v4311
        %v4344 = vpack.c.b16 %v4312, %v4312
        %v4345 = vpack.c.b16 %v4313, %v4313
        %v4346 = vpack.c.b16 %v4314, %v4314
        %v4347 = vpack.c.b16 %v4315, %v4315
        %v4348 = vpack.c.b16 %v4316, %v4316
        %v4349 = vpack.c.b16 %v4317, %v4317
        %v4350 = vpack.c.b16 %v4318, %v4318
        %v4351 = vpack.c.b16 %v4319, %v4319
        %v4352 = vpack.c.b16 %v4320, %v4320
        %v4353 = vpack.c.b16 %v4321, %v4321
        %v4354 = vpack.c.b16 %v4322, %v4322
        %v4355 = vpack.c.b16 %v4323, %v4323
        %v4356 = vpack.c.b16 %v4324, %v4324
        %v4357 = vpack.c.b16 %v4325, %v4325
        %v4358 = vpack.c.b16 %v4326, %v4326
        %v4359 = vpack.c.b16 %v4327, %v4327
        %v4360 = vpack.c.b16 %v4328, %v4328
        %v4361 = vpack.c.b16 %v4329, %v4329
        %vm4394 = vcmask 519168
        %4395 = vst.msk [vmem:[%s427] sm:$0xf] %vm4394, %v4330
        %4396 = vst.msk [vmem:[%s427 + $0x4] sm:$0xf] %vm4394, %v4331
        %4397 = vst.msk [vmem:[%s427 + $0x8] sm:$0xf] %vm4394, %v4332
        %4398 = vst.msk [vmem:[%s427 + $0xc] sm:$0xf] %vm4394, %v4333
        %4399 = vst.msk [vmem:[%s427 + $0x10] sm:$0xf] %vm4394, %v4334
        %4400 = vst.msk [vmem:[%s427 + $0x14] sm:$0xf] %vm4394, %v4335
        %4401 = vst.msk [vmem:[%s427 + $0x18] sm:$0xf] %vm4394, %v4336
        %4402 = vst.msk [vmem:[%s427 + $0x1c] sm:$0xf] %vm4394, %v4337
        %4403 = vst.msk [vmem:[%s427 + $0x20] sm:$0xf] %vm4394, %v4338
        %4404 = vst.msk [vmem:[%s427 + $0x24] sm:$0xf] %vm4394, %v4339
        %4405 = vst.msk [vmem:[%s427 + $0x28] sm:$0xf] %vm4394, %v4340
        %4406 = vst.msk [vmem:[%s427 + $0x2c] sm:$0xf] %vm4394, %v4341
        %4407 = vst.msk [vmem:[%s427 + $0x30] sm:$0xf] %vm4394, %v4342
        %4408 = vst.msk [vmem:[%s427 + $0x34] sm:$0xf] %vm4394, %v4343
        %4409 = vst.msk [vmem:[%s427 + $0x38] sm:$0xf] %vm4394, %v4344
        %4410 = vst.msk [vmem:[%s427 + $0x3c] sm:$0xf] %vm4394, %v4345
        %4411 = vst.msk [vmem:[%s427 + $0x40] sm:$0xf] %vm4394, %v4346
        %4412 = vst.msk [vmem:[%s427 + $0x44] sm:$0xf] %vm4394, %v4347
        %4413 = vst.msk [vmem:[%s427 + $0x48] sm:$0xf] %vm4394, %v4348
        %4414 = vst.msk [vmem:[%s427 + $0x4c] sm:$0xf] %vm4394, %v4349
        %4415 = vst.msk [vmem:[%s427 + $0x50] sm:$0xf] %vm4394, %v4350
        %4416 = vst.msk [vmem:[%s427 + $0x54] sm:$0xf] %vm4394, %v4351
        %4417 = vst.msk [vmem:[%s427 + $0x58] sm:$0xf] %vm4394, %v4352
        %4418 = vst.msk [vmem:[%s427 + $0x5c] sm:$0xf] %vm4394, %v4353
        %4419 = vst.msk [vmem:[%s427 + $0x60] sm:$0xf] %vm4394, %v4354
        %4420 = vst.msk [vmem:[%s427 + $0x64] sm:$0xf] %vm4394, %v4355
        %4421 = vst.msk [vmem:[%s427 + $0x68] sm:$0xf] %vm4394, %v4356
        %4422 = vst.msk [vmem:[%s427 + $0x6c] sm:$0xf] %vm4394, %v4357
        %4423 = vst.msk [vmem:[%s427 + $0x70] sm:$0xf] %vm4394, %v4358
        %4424 = vst.msk [vmem:[%s427 + $0x74] sm:$0xf] %vm4394, %v4359
        %4425 = vst.msk [vmem:[%s427 + $0x78] sm:$0xf] %vm4394, %v4360
        %4426 = vst.msk [vmem:[%s427 + $0x7c] sm:$0xf] %vm4394, %v4361
        %s4427 = sand.u32 %s271, 1
        %s4428 = scalar_lea.sflag [#allocation3], %s4427
        %s4429 = sand.u32 %s271, 1
        %s4430 = smul.addr %s4429, 128
        %s4431 = scalar_lea.vmem [#allocation2], %s4430
        %s4432 = smul.u32 32, %s27
        %p4433 = scmp.lt.s32.totalorder %s4432, 63
        %s4434 = scalar_select %p4433, %s4432, 63
        %s4435 = smul.addr %s4434, 4
        %s4436 = scalar_lea.vmem %s12, %s4435
        // Predicated region
        $region65: #{tpu_custom_call.1} parent=63 // pred_check
          %p4437 = pneg %p281
        $region66: #{tpu_custom_call.1} parent=63 // pred_check_branch
          %4439 = sbr.rel (%p4437) target = $region68
        $region67: #{tpu_custom_call.1} parent=63 // pred_region
          %s4440 = smul.u32 32, %s27
          %s4442 = ssub.s32 2048, 2048
          %4443 = vsyncadd %s4428, %s4442
          %s4444 = smul.addr %s4440, 64
          %s4445 = scalar_lea.hbm %s11, %s4444
          %s4446 = sshll.u32 %s4431, 4
          %s4447 = int_to_ptr.vmem [resolvable:$true] %s4446
          %4452 = dma.vmem_to_hbm [thread:$0]  %s4447, 2048, %s4445, %s4428, 64, 64, 4
        $region68: #{tpu_custom_call.1} parent=63 // pred_fallthru
          _
        // Predicated region
        $region69: #{tpu_custom_call.1} parent=63 // pred_check
          %p4453 = pneg %p307
        $region70: #{tpu_custom_call.1} parent=63 // pred_check_branch
          %4455 = sbr.rel (%p4453) target = $region72
        $region71: #{tpu_custom_call.1} parent=63 // pred_region
          %s4456 = smul.u32 32, %s27
        $region72: #{tpu_custom_call.1} parent=63 // pred_fallthru
          _
      $region64: #{tpu_custom_call.1} parent=5 // pred_fallthru
        _
      %p4457 = scmp.le.s32.totalorder 2, %s22
      // Predicated region
      $region73: #{tpu_custom_call.1} parent=5 // pred_check
        %p4458 = pneg %p4457
      $region74: #{tpu_custom_call.1} parent=5 // pred_check_branch
        %4460 = sbr.rel (%p4458) target = $region76
      $region75: #{tpu_custom_call.1} parent=5 // pred_region
        %s4461 = ssub.s32 %s22, 2
        // Predicated region
        $region77: #{tpu_custom_call.1} parent=75 // pred_check
          %p4462 = pneg %p287
        $region78: #{tpu_custom_call.1} parent=75 // pred_check_branch
          %4464 = sbr.rel (%p4462) target = $region80
        $region79: #{tpu_custom_call.1} parent=75 // pred_region
          %s4465 = sand.u32 %s272, 1
          %s4466 = scalar_lea.sflag [#allocation3], %s4465
          %s4467 = sand.u32 %s272, 1
          %s4468 = smul.addr %s4467, 128
          %s4469 = scalar_lea.vmem [#allocation2], %s4468
          %4470 = dma.done %s4466, 2048
        $region80: #{tpu_custom_call.1} parent=75 // pred_fallthru
          _
        // Predicated region
        $region81: #{tpu_custom_call.1} parent=75 // pred_check
          %p4471 = pneg %p313
        $region82: #{tpu_custom_call.1} parent=75 // pred_check_branch
          %4473 = sbr.rel (%p4471) target = $region84
        $region83: #{tpu_custom_call.1} parent=75 // pred_region
          %s4474 = smul.u32 32, %s28
          %p4475 = scmp.lt.s32.totalorder %s4474, 63
          %s4476 = scalar_select %p4475, %s4474, 63
          %s4477 = smul.addr %s4476, 4
          %s4478 = scalar_lea.vmem %s12, %s4477
        $region84: #{tpu_custom_call.1} parent=75 // pred_fallthru
          _
      $region76: #{tpu_custom_call.1} parent=5 // pred_fallthru
        _
    $region6: #{tpu_custom_call.1} parent=1 // loop_footer
      %s26 = sadd.s32 1, %s22
    $region7: #{tpu_custom_call.1} parent=1 // loop_footer_branch
      %21 = sbr.rel target = $region3
    $region8: #{tpu_custom_call.1} parent=1 // loop_exit
      _
    %4479 = vsyncpa [#allocation3], 1
    %s4480 = scalar_lea.sflag [#allocation3], 1
    %4481 = vsyncpa %s4480, 1

</llo_original>
